<compile_context>
chip_gen: v6e
topology: v6e:2x2x1
jax: 0.10.0
libtpu: 0.0.40
codegen_flags: <defaults>
</compile_context>

<pallas_src>
import functools

import jax
import jax.numpy as jnp
from jax.experimental import pallas as pl
from jax.experimental.pallas import tpu as pltpu


_LN_EPS = 1e-5            # nn.LayerNorm default
_SQRT_HALF = 0.7071067811865476


# ---------------------------------------------------------------------------
# small in-kernel helpers
# ---------------------------------------------------------------------------
def _layernorm(x, gamma, beta, eps):
    mu = jnp.mean(x, axis=-1, keepdims=True)
    xc = x - mu
    var = jnp.mean(xc * xc, axis=-1, keepdims=True)
    return xc * jax.lax.rsqrt(var + eps) * gamma + beta


def _erf(x):
    # Abramowitz & Stegun 7.1.26 (max abs err ~1.5e-7) -- exact-GELU without an
    # erf primitive; only exp / mul / add / where, all of which lower on Mosaic.
    p = 0.3275911
    a1, a2, a3, a4, a5 = 0.254829592, -0.284496736, 1.421413741, -1.453152027, 1.061405429
    ax = jnp.abs(x)
    t = 1.0 / (1.0 + p * ax)
    poly = ((((a5 * t + a4) * t + a3) * t + a2) * t + a1) * t
    e = 1.0 - poly * jnp.exp(-ax * ax)
    return jnp.where(x < 0, -e, e)


def _gelu_exact(x):
    # matches nn.GELU() (erf form) to ~1e-7
    return 0.5 * x * (1.0 + _erf(x * _SQRT_HALF))


# ---------------------------------------------------------------------------
# Fully fused Block kernel: one batch element (N, C) per grid step.
#   LN1 -> qkv -> cross-head attention -> scramble -> proj -> +x
#       -> LN2 -> fc1 -> GELU -> fc2 -> +x
# ---------------------------------------------------------------------------
def _block_kernel(x_ref, g1_ref, b1_ref, wqkv_ref, bqkv_ref, wproj_ref, bproj_ref,
                  g2_ref, b2_ref, w1_ref, bfc1_ref, w2_ref, bfc2_ref,
                  o_ref, ot_ref, *, num_heads, head_dim, eps):
    H, hd = num_heads, head_dim
    N = x_ref.shape[1]
    C = H * hd
    scale = float(hd) ** -0.5

    xb = x_ref[0].astype(jnp.float32)                                 # (N, C) residual input

    # ---- LN1 + qkv Linear (single lane-dense matmul, f32 accumulation) ----
    ln1 = _layernorm(xb, g1_ref[...], b1_ref[...], eps)
    qkv = jnp.dot(ln1, wqkv_ref[...], preferred_element_type=jnp.float32) + bqkv_ref[...]
    q = qkv[:, 0 * C:1 * C]                                           # (N, C)
    k = qkv[:, 1 * C:2 * C]
    v = qkv[:, 2 * C:3 * C]

    # ---- per-token attention over the *head* axis (H x H), vectorized over
    # all N tokens at once (VPU broadcast-FMAs, no transposes, no per-token grid).
    for i in range(H):                                                # query head i
        qi = q[:, i * hd:(i + 1) * hd]                                # (N, hd)
        cols = []
        for j in range(H):                                            # key head j
            kj = k[:, j * hd:(j + 1) * hd]
            cols.append(jnp.sum(qi * kj, axis=-1, keepdims=True))     # (N, 1)
        s = jnp.concatenate(cols, axis=-1) * scale                    # (N, H)
        s = s - jnp.max(s, axis=-1, keepdims=True)
        p = jnp.exp(s)
        p = p * pl.reciprocal(jnp.sum(p, axis=-1, keepdims=True), approx=True)
        oi = p[:, 0:1] * v[:, 0:hd]
        for j in range(1, H):
            oi = oi + p[:, j:j + 1] * v[:, j * hd:(j + 1) * hd]       # (N, hd)
        # Head-major staging: row (i*N + n) holds (head i, token n) -- exactly
        # the flat order PyTorch's .transpose(1, 2) produces before .reshape.
        ot_ref[pl.ds(i * N, N), :] = oi

    # ---- re-group the (head, token)-major rows into (N, C) rows == the PyTorch
    # `.transpose(1, 2).reshape(B, N, C)` scramble, entirely in VMEM:
    #   o_scr[t, a*hd:(a+1)*hd] = ot[t*H + a, :]
    parts = [ot_ref[pl.ds(a, N, stride=H), :] for a in range(H)]      # each (N, hd)
    o_scr = jnp.concatenate(parts, axis=-1)                           # (N, C)

    # ---- proj Linear + first residual ----
    x1 = xb + jnp.dot(o_scr, wproj_ref[...], preferred_element_type=jnp.float32) + bproj_ref[...]

    # ---- LN2 -> fc1 -> exact GELU -> fc2 -> second residual ----
    ln2 = _layernorm(x1, g2_ref[...], b2_ref[...], eps)
    h1 = jnp.dot(ln2, w1_ref[...], preferred_element_type=jnp.float32) + bfc1_ref[...]
    h1 = _gelu_exact(h1)
    y2 = jnp.dot(h1, w2_ref[...], preferred_element_type=jnp.float32) + bfc2_ref[...]

    o_ref[0] = (x1 + y2).astype(o_ref.dtype)


# ---------------------------------------------------------------------------
# Host wrapper
# ---------------------------------------------------------------------------
def vit_block_forward(x, params, *, num_heads,
                      vmem_limit_bytes=64 * 1024 * 1024):
    B, N, C = x.shape
    H = num_heads
    assert C % H == 0
    hd = C // H
    hidden = params["w_fc1"].shape[1]

    as_row = lambda v: v.reshape(1, -1)
    # weights / biases are grid-invariant -> resident in VMEM across all steps
    const = lambda shape: pl.BlockSpec(shape, lambda b: (0,) * len(shape))

    call = pl.pallas_call(
        functools.partial(_block_kernel, num_heads=H, head_dim=hd, eps=_LN_EPS),
        out_shape=jax.ShapeDtypeStruct((B, N, C), x.dtype),
        grid=(B,),
        in_specs=[
            pl.BlockSpec((1, N, C), lambda b: (b, 0, 0)),   # x
            const((1, C)),                                  # ln1 gamma
            const((1, C)),                                  # ln1 beta
            const((C, 3 * C)),                              # w_qkv
            const((1, 3 * C)),                              # b_qkv
            const((C, C)),                                  # w_proj
            const((1, C)),                                  # b_proj
            const((1, C)),                                  # ln2 gamma
            const((1, C)),                                  # ln2 beta
            const((C, hidden)),                             # w_fc1
            const((1, hidden)),                             # b_fc1
            const((hidden, C)),                             # w_fc2
            const((1, C)),                                  # b_fc2
        ],
        out_specs=pl.BlockSpec((1, N, C), lambda b: (b, 0, 0)),
        scratch_shapes=[pltpu.VMEM((H * N, hd), jnp.float32)],  # head-major attn output
        compiler_params=pltpu.CompilerParams(
            dimension_semantics=("parallel",),
            vmem_limit_bytes=vmem_limit_bytes,
        ),
    )
    return call(x, as_row(params["g1"]), as_row(params["b1"]),
                params["w_qkv"], as_row(params["b_qkv"]),
                params["w_proj"], as_row(params["b_proj"]),
                as_row(params["g2"]), as_row(params["b2"]),
                params["w_fc1"], as_row(params["b_fc1"]),
                params["w_fc2"], as_row(params["b_fc2"]))


# ---------------------------------------------------------------------------
# Pure-JAX reference (mirrors the PyTorch Block.forward exactly)
# ---------------------------------------------------------------------------
def vit_block_reference(x, params, *, num_heads, eps=_LN_EPS):
    B, N, C = x.shape
    H = num_heads
    hd = C // H
    scale = hd ** (-0.5)

    def ln(z, g, b):
        mu = z.mean(-1, keepdims=True)
        var = ((z - mu) ** 2).mean(-1, keepdims=True)
        return (z - mu) / jnp.sqrt(var + eps) * g + b

    with jax.default_matmul_precision("float32"):
        h = ln(x, params["g1"], params["b1"])
        qkv = h @ params["w_qkv"] + params["b_qkv"]
        qkv = qkv.reshape(B, N, 3, H, hd)
        q, k, v = qkv[:, :, 0], qkv[:, :, 1], qkv[:, :, 2]
        attn = jnp.einsum("bnid,bnjd->bnij", q, k) * scale
        attn = jax.nn.softmax(attn, axis=-1)
        o = jnp.einsum("bnij,bnjd->bnid", attn, v)
        o = o.transpose(0, 2, 1, 3).reshape(B, N, C)          # the quirky scramble
        x = x + (o @ params["w_proj"] + params["b_proj"])
        h2 = ln(x, params["g2"], params["b2"])
        m = h2 @ params["w_fc1"] + params["b_fc1"]
        m = jax.nn.gelu(m, approximate=False)                 # exact (erf) GELU
        m = m @ params["w_fc2"] + params["b_fc2"]
        return x + m


if __name__ == "__main__":
    # Small shapes consistent with the module: dim=64, num_heads=8 (head_dim=8),
    # mlp_ratio=4 -> hidden=256, batch=2, seq=16.
    B, N, C, H = 2, 16, 64, 8
    hidden = 4 * C

    key = jax.random.PRNGKey(0)
    ks = jax.random.split(key, 12)
    x = jax.random.normal(ks[0], (B, N, C), jnp.float32)

    # Linear weights are stored (in, out), i.e. the transpose of PyTorch's (out, in).
    params = {
        "g1": 1.0 + 0.1 * jax.random.normal(ks[1], (C,), jnp.float32),
        "b1": 0.1 * jax.random.normal(ks[2], (C,), jnp.float32),
        "w_qkv": 0.05 * jax.random.normal(ks[3], (C, 3 * C), jnp.float32),
        "b_qkv": jnp.zeros((3 * C,), jnp.float32),            # qkv_bias=False
        "w_proj": 0.05 * jax.random.normal(ks[4], (C, C), jnp.float32),
        "b_proj": 0.05 * jax.random.normal(ks[5], (C,), jnp.float32),
        "g2": 1.0 + 0.1 * jax.random.normal(ks[6], (C,), jnp.float32),
        "b2": 0.1 * jax.random.normal(ks[7], (C,), jnp.float32),
        "w_fc1": 0.05 * jax.random.normal(ks[8], (C, hidden), jnp.float32),
        "b_fc1": 0.05 * jax.random.normal(ks[9], (hidden,), jnp.float32),
        "w_fc2": 0.05 * jax.random.normal(ks[10], (hidden, C), jnp.float32),
        "b_fc2": 0.05 * jax.random.normal(ks[11], (C,), jnp.float32),
    }

    out = vit_block_forward(x, params, num_heads=H)
    out = jax.block_until_ready(out)

    ref = vit_block_reference(x, params, num_heads=H)
    assert out.shape == (B, N, C)
    err = float(jnp.max(jnp.abs(out - ref)))
    assert err < 1e-3, f"mismatch vs reference: max abs err = {err}"

    print("KERNEL_OK")
</pallas_src>

<mosaic_0001>
module attributes {stable_mosaic.version = 11 : i64} {
  func.func @_block_kernel(%arg0: i32, %arg1: memref<1x16x64xf32, #tpu.memory_space<vmem>>, %arg2: memref<1x64xf32, #tpu.memory_space<vmem>>, %arg3: memref<1x64xf32, #tpu.memory_space<vmem>>, %arg4: memref<64x192xf32, #tpu.memory_space<vmem>>, %arg5: memref<1x192xf32, #tpu.memory_space<vmem>>, %arg6: memref<64x64xf32, #tpu.memory_space<vmem>>, %arg7: memref<1x64xf32, #tpu.memory_space<vmem>>, %arg8: memref<1x64xf32, #tpu.memory_space<vmem>>, %arg9: memref<1x64xf32, #tpu.memory_space<vmem>>, %arg10: memref<64x256xf32, #tpu.memory_space<vmem>>, %arg11: memref<1x256xf32, #tpu.memory_space<vmem>>, %arg12: memref<256x64xf32, #tpu.memory_space<vmem>>, %arg13: memref<1x64xf32, #tpu.memory_space<vmem>>, %arg14: memref<1x16x64xf32, #tpu.memory_space<vmem>>, %arg15: memref<128x8xf32, #tpu.memory_space<vmem>>) attributes {dimension_semantics = [#tpu.dimension_semantics<parallel>], iteration_bounds = array<i64: 2>, scalar_prefetch = 0 : i64, scratch_operands = 1 : i64, tpu.core_type = #tpu.core_type<tc>, window_params = [{transform_indices = @transform_0, window_bounds = array<i64: 1, 16, 64>}, {pipeline_mode = #tpu.pipeline_mode<synchronous>, transform_indices = @transform_1, window_bounds = array<i64: 1, 64>}, {pipeline_mode = #tpu.pipeline_mode<synchronous>, transform_indices = @transform_2, window_bounds = array<i64: 1, 64>}, {pipeline_mode = #tpu.pipeline_mode<synchronous>, transform_indices = @transform_3, window_bounds = array<i64: 64, 192>}, {pipeline_mode = #tpu.pipeline_mode<synchronous>, transform_indices = @transform_4, window_bounds = array<i64: 1, 192>}, {pipeline_mode = #tpu.pipeline_mode<synchronous>, transform_indices = @transform_5, window_bounds = array<i64: 64, 64>}, {pipeline_mode = #tpu.pipeline_mode<synchronous>, transform_indices = @transform_6, window_bounds = array<i64: 1, 64>}, {pipeline_mode = #tpu.pipeline_mode<synchronous>, transform_indices = @transform_7, window_bounds = array<i64: 1, 64>}, {pipeline_mode = #tpu.pipeline_mode<synchronous>, transform_indices = @transform_8, window_bounds = array<i64: 1, 64>}, {pipeline_mode = #tpu.pipeline_mode<synchronous>, transform_indices = @transform_9, window_bounds = array<i64: 64, 256>}, {pipeline_mode = #tpu.pipeline_mode<synchronous>, transform_indices = @transform_10, window_bounds = array<i64: 1, 256>}, {pipeline_mode = #tpu.pipeline_mode<synchronous>, transform_indices = @transform_11, window_bounds = array<i64: 256, 64>}, {pipeline_mode = #tpu.pipeline_mode<synchronous>, transform_indices = @transform_12, window_bounds = array<i64: 1, 64>}, {transform_indices = @transform_13, window_bounds = array<i64: 1, 16, 64>}]} {
    %c0 = arith.constant 0 : index
    %c0_0 = arith.constant 0 : index
    %c0_1 = arith.constant 0 : index
    %0 = vector.load %arg1[%c0, %c0_0, %c0_1] : memref<1x16x64xf32, #tpu.memory_space<vmem>>, vector<1x16x64xf32>
    %1 = vector.shape_cast %0 : vector<1x16x64xf32> to vector<16x64xf32>
    %c0_2 = arith.constant 0 : index
    %c0_3 = arith.constant 0 : index
    %2 = vector.load %arg2[%c0_2, %c0_3] : memref<1x64xf32, #tpu.memory_space<vmem>>, vector<1x64xf32>
    %c0_4 = arith.constant 0 : index
    %c0_5 = arith.constant 0 : index
    %3 = vector.load %arg3[%c0_4, %c0_5] : memref<1x64xf32, #tpu.memory_space<vmem>>, vector<1x64xf32>
    %cst = arith.constant dense<0.000000e+00> : vector<16xf32>
    %4 = vector.multi_reduction <add>, %1, %cst [1] : vector<16x64xf32> to vector<16xf32>
    %5 = vector.shape_cast %4 : vector<16xf32> to vector<16x1xf32>
    %cst_6 = arith.constant 6.400000e+01 : f32
    %6 = vector.broadcast %cst_6 : f32 to vector<16x1xf32>
    %7 = arith.divf %5, %6 : vector<16x1xf32>
    %8 = vector.broadcast %7 : vector<16x1xf32> to vector<16x64xf32>
    %9 = arith.subf %1, %8 : vector<16x64xf32>
    %10 = arith.mulf %9, %9 : vector<16x64xf32>
    %cst_7 = arith.constant dense<0.000000e+00> : vector<16xf32>
    %11 = vector.multi_reduction <add>, %10, %cst_7 [1] : vector<16x64xf32> to vector<16xf32>
    %12 = vector.shape_cast %11 : vector<16xf32> to vector<16x1xf32>
    %cst_8 = arith.constant 6.400000e+01 : f32
    %13 = vector.broadcast %cst_8 : f32 to vector<16x1xf32>
    %14 = arith.divf %12, %13 : vector<16x1xf32>
    %cst_9 = arith.constant 9.99999974E-6 : f32
    %15 = vector.broadcast %cst_9 : f32 to vector<16x1xf32>
    %16 = arith.addf %14, %15 : vector<16x1xf32>
    %17 = math.rsqrt %16 : vector<16x1xf32>
    %18 = vector.broadcast %17 : vector<16x1xf32> to vector<16x64xf32>
    %19 = arith.mulf %9, %18 : vector<16x64xf32>
    %20 = vector.broadcast %2 : vector<1x64xf32> to vector<16x64xf32>
    %21 = arith.mulf %19, %20 : vector<16x64xf32>
    %22 = vector.broadcast %3 : vector<1x64xf32> to vector<16x64xf32>
    %23 = arith.addf %21, %22 : vector<16x64xf32>
    %c0_10 = arith.constant 0 : index
    %c0_11 = arith.constant 0 : index
    %24 = vector.load %arg4[%c0_10, %c0_11] : memref<64x192xf32, #tpu.memory_space<vmem>>, vector<64x192xf32>
    %cst_12 = arith.constant dense<0.000000e+00> : vector<16x192xf32>
    %25 = tpu.matmul %23, %24, %cst_12 {dimension_numbers = #tpu.dot_dimension_numbers<[1], [0], [0], [1], [0, 0, 1, 1], [], []>} : vector<16x64xf32>, vector<64x192xf32>, vector<16x192xf32> -> vector<16x192xf32>
    %c0_13 = arith.constant 0 : index
    %c0_14 = arith.constant 0 : index
    %26 = vector.load %arg5[%c0_13, %c0_14] : memref<1x192xf32, #tpu.memory_space<vmem>>, vector<1x192xf32>
    %27 = vector.broadcast %26 : vector<1x192xf32> to vector<16x192xf32>
    %28 = arith.addf %25, %27 : vector<16x192xf32>
    %29 = vector.extract_strided_slice %28 {offsets = [0, 0], sizes = [16, 64], strides = [1, 1]} : vector<16x192xf32> to vector<16x64xf32>
    %30 = vector.extract_strided_slice %28 {offsets = [0, 64], sizes = [16, 64], strides = [1, 1]} : vector<16x192xf32> to vector<16x64xf32>
    %31 = vector.extract_strided_slice %28 {offsets = [0, 128], sizes = [16, 64], strides = [1, 1]} : vector<16x192xf32> to vector<16x64xf32>
    %32 = vector.extract_strided_slice %29 {offsets = [0, 0], sizes = [16, 8], strides = [1, 1]} : vector<16x64xf32> to vector<16x8xf32>
    %33 = vector.extract_strided_slice %30 {offsets = [0, 0], sizes = [16, 8], strides = [1, 1]} : vector<16x64xf32> to vector<16x8xf32>
    %34 = arith.mulf %32, %33 : vector<16x8xf32>
    %cst_15 = arith.constant dense<0.000000e+00> : vector<16xf32>
    %35 = vector.multi_reduction <add>, %34, %cst_15 [1] : vector<16x8xf32> to vector<16xf32>
    %36 = vector.shape_cast %35 : vector<16xf32> to vector<16x1xf32>
    %37 = vector.extract_strided_slice %30 {offsets = [0, 8], sizes = [16, 8], strides = [1, 1]} : vector<16x64xf32> to vector<16x8xf32>
    %38 = arith.mulf %32, %37 : vector<16x8xf32>
    %cst_16 = arith.constant dense<0.000000e+00> : vector<16xf32>
    %39 = vector.multi_reduction <add>, %38, %cst_16 [1] : vector<16x8xf32> to vector<16xf32>
    %40 = vector.shape_cast %39 : vector<16xf32> to vector<16x1xf32>
    %41 = vector.extract_strided_slice %30 {offsets = [0, 16], sizes = [16, 8], strides = [1, 1]} : vector<16x64xf32> to vector<16x8xf32>
    %42 = arith.mulf %32, %41 : vector<16x8xf32>
    %cst_17 = arith.constant dense<0.000000e+00> : vector<16xf32>
    %43 = vector.multi_reduction <add>, %42, %cst_17 [1] : vector<16x8xf32> to vector<16xf32>
    %44 = vector.shape_cast %43 : vector<16xf32> to vector<16x1xf32>
    %45 = vector.extract_strided_slice %30 {offsets = [0, 24], sizes = [16, 8], strides = [1, 1]} : vector<16x64xf32> to vector<16x8xf32>
    %46 = arith.mulf %32, %45 : vector<16x8xf32>
    %cst_18 = arith.constant dense<0.000000e+00> : vector<16xf32>
    %47 = vector.multi_reduction <add>, %46, %cst_18 [1] : vector<16x8xf32> to vector<16xf32>
    %48 = vector.shape_cast %47 : vector<16xf32> to vector<16x1xf32>
    %49 = vector.extract_strided_slice %30 {offsets = [0, 32], sizes = [16, 8], strides = [1, 1]} : vector<16x64xf32> to vector<16x8xf32>
    %50 = arith.mulf %32, %49 : vector<16x8xf32>
    %cst_19 = arith.constant dense<0.000000e+00> : vector<16xf32>
    %51 = vector.multi_reduction <add>, %50, %cst_19 [1] : vector<16x8xf32> to vector<16xf32>
    %52 = vector.shape_cast %51 : vector<16xf32> to vector<16x1xf32>
    %53 = vector.extract_strided_slice %30 {offsets = [0, 40], sizes = [16, 8], strides = [1, 1]} : vector<16x64xf32> to vector<16x8xf32>
    %54 = arith.mulf %32, %53 : vector<16x8xf32>
    %cst_20 = arith.constant dense<0.000000e+00> : vector<16xf32>
    %55 = vector.multi_reduction <add>, %54, %cst_20 [1] : vector<16x8xf32> to vector<16xf32>
    %56 = vector.shape_cast %55 : vector<16xf32> to vector<16x1xf32>
    %57 = vector.extract_strided_slice %30 {offsets = [0, 48], sizes = [16, 8], strides = [1, 1]} : vector<16x64xf32> to vector<16x8xf32>
    %58 = arith.mulf %32, %57 : vector<16x8xf32>
    %cst_21 = arith.constant dense<0.000000e+00> : vector<16xf32>
    %59 = vector.multi_reduction <add>, %58, %cst_21 [1] : vector<16x8xf32> to vector<16xf32>
    %60 = vector.shape_cast %59 : vector<16xf32> to vector<16x1xf32>
    %61 = vector.extract_strided_slice %30 {offsets = [0, 56], sizes = [16, 8], strides = [1, 1]} : vector<16x64xf32> to vector<16x8xf32>
    %62 = arith.mulf %32, %61 : vector<16x8xf32>
    %cst_22 = arith.constant dense<0.000000e+00> : vector<16xf32>
    %63 = vector.multi_reduction <add>, %62, %cst_22 [1] : vector<16x8xf32> to vector<16xf32>
    %64 = vector.shape_cast %63 : vector<16xf32> to vector<16x1xf32>
    %65 = tpu.concatenate %36, %40, %44, %48, %52, %56, %60, %64 in 1 : vector<16x1xf32>, vector<16x1xf32>, vector<16x1xf32>, vector<16x1xf32>, vector<16x1xf32>, vector<16x1xf32>, vector<16x1xf32>, vector<16x1xf32> -> vector<16x8xf32>
    %cst_23 = arith.constant 0.353553385 : f32
    %66 = vector.broadcast %cst_23 : f32 to vector<16x8xf32>
    %67 = arith.mulf %65, %66 : vector<16x8xf32>
    %cst_24 = arith.constant dense<0xFF800000> : vector<16xf32>
    %68 = vector.multi_reduction <maximumf>, %67, %cst_24 [1] : vector<16x8xf32> to vector<16xf32>
    %69 = vector.shape_cast %68 : vector<16xf32> to vector<16x1xf32>
    %70 = vector.broadcast %69 : vector<16x1xf32> to vector<16x8xf32>
    %71 = arith.subf %67, %70 : vector<16x8xf32>
    %72 = math.exp %71 : vector<16x8xf32>
    %cst_25 = arith.constant dense<0.000000e+00> : vector<16xf32>
    %73 = vector.multi_reduction <add>, %72, %cst_25 [1] : vector<16x8xf32> to vector<16xf32>
    %74 = vector.shape_cast %73 : vector<16xf32> to vector<16x1xf32>
    %75 = tpu.reciprocal %74 {approx = true} : vector<16x1xf32> -> vector<16x1xf32>
    %76 = vector.broadcast %75 : vector<16x1xf32> to vector<16x8xf32>
    %77 = arith.mulf %72, %76 : vector<16x8xf32>
    %78 = vector.extract_strided_slice %77 {offsets = [0, 0], sizes = [16, 1], strides = [1, 1]} : vector<16x8xf32> to vector<16x1xf32>
    %79 = vector.extract_strided_slice %31 {offsets = [0, 0], sizes = [16, 8], strides = [1, 1]} : vector<16x64xf32> to vector<16x8xf32>
    %80 = vector.broadcast %78 : vector<16x1xf32> to vector<16x8xf32>
    %81 = arith.mulf %80, %79 : vector<16x8xf32>
    %82 = vector.extract_strided_slice %77 {offsets = [0, 1], sizes = [16, 1], strides = [1, 1]} : vector<16x8xf32> to vector<16x1xf32>
    %83 = vector.extract_strided_slice %31 {offsets = [0, 8], sizes = [16, 8], strides = [1, 1]} : vector<16x64xf32> to vector<16x8xf32>
    %84 = vector.broadcast %82 : vector<16x1xf32> to vector<16x8xf32>
    %85 = arith.mulf %84, %83 : vector<16x8xf32>
    %86 = arith.addf %81, %85 : vector<16x8xf32>
    %87 = vector.extract_strided_slice %77 {offsets = [0, 2], sizes = [16, 1], strides = [1, 1]} : vector<16x8xf32> to vector<16x1xf32>
    %88 = vector.extract_strided_slice %31 {offsets = [0, 16], sizes = [16, 8], strides = [1, 1]} : vector<16x64xf32> to vector<16x8xf32>
    %89 = vector.broadcast %87 : vector<16x1xf32> to vector<16x8xf32>
    %90 = arith.mulf %89, %88 : vector<16x8xf32>
    %91 = arith.addf %86, %90 : vector<16x8xf32>
    %92 = vector.extract_strided_slice %77 {offsets = [0, 3], sizes = [16, 1], strides = [1, 1]} : vector<16x8xf32> to vector<16x1xf32>
    %93 = vector.extract_strided_slice %31 {offsets = [0, 24], sizes = [16, 8], strides = [1, 1]} : vector<16x64xf32> to vector<16x8xf32>
    %94 = vector.broadcast %92 : vector<16x1xf32> to vector<16x8xf32>
    %95 = arith.mulf %94, %93 : vector<16x8xf32>
    %96 = arith.addf %91, %95 : vector<16x8xf32>
    %97 = vector.extract_strided_slice %77 {offsets = [0, 4], sizes = [16, 1], strides = [1, 1]} : vector<16x8xf32> to vector<16x1xf32>
    %98 = vector.extract_strided_slice %31 {offsets = [0, 32], sizes = [16, 8], strides = [1, 1]} : vector<16x64xf32> to vector<16x8xf32>
    %99 = vector.broadcast %97 : vector<16x1xf32> to vector<16x8xf32>
    %100 = arith.mulf %99, %98 : vector<16x8xf32>
    %101 = arith.addf %96, %100 : vector<16x8xf32>
    %102 = vector.extract_strided_slice %77 {offsets = [0, 5], sizes = [16, 1], strides = [1, 1]} : vector<16x8xf32> to vector<16x1xf32>
    %103 = vector.extract_strided_slice %31 {offsets = [0, 40], sizes = [16, 8], strides = [1, 1]} : vector<16x64xf32> to vector<16x8xf32>
    %104 = vector.broadcast %102 : vector<16x1xf32> to vector<16x8xf32>
    %105 = arith.mulf %104, %103 : vector<16x8xf32>
    %106 = arith.addf %101, %105 : vector<16x8xf32>
    %107 = vector.extract_strided_slice %77 {offsets = [0, 6], sizes = [16, 1], strides = [1, 1]} : vector<16x8xf32> to vector<16x1xf32>
    %108 = vector.extract_strided_slice %31 {offsets = [0, 48], sizes = [16, 8], strides = [1, 1]} : vector<16x64xf32> to vector<16x8xf32>
    %109 = vector.broadcast %107 : vector<16x1xf32> to vector<16x8xf32>
    %110 = arith.mulf %109, %108 : vector<16x8xf32>
    %111 = arith.addf %106, %110 : vector<16x8xf32>
    %112 = vector.extract_strided_slice %77 {offsets = [0, 7], sizes = [16, 1], strides = [1, 1]} : vector<16x8xf32> to vector<16x1xf32>
    %113 = vector.extract_strided_slice %31 {offsets = [0, 56], sizes = [16, 8], strides = [1, 1]} : vector<16x64xf32> to vector<16x8xf32>
    %114 = vector.broadcast %112 : vector<16x1xf32> to vector<16x8xf32>
    %115 = arith.mulf %114, %113 : vector<16x8xf32>
    %116 = arith.addf %111, %115 : vector<16x8xf32>
    %c0_26 = arith.constant 0 : index
    %c0_27 = arith.constant 0 : index
    %117 = vector.load %arg15[%c0_26, %c0_27] : memref<128x8xf32, #tpu.memory_space<vmem>>, vector<16x8xf32>
    tpu.vector_store %arg15[%c0_26, %c0_27], %116 {strides = array<i32>} : memref<128x8xf32, #tpu.memory_space<vmem>>, vector<16x8xf32>,
    %118 = vector.extract_strided_slice %29 {offsets = [0, 8], sizes = [16, 8], strides = [1, 1]} : vector<16x64xf32> to vector<16x8xf32>
    %119 = vector.extract_strided_slice %30 {offsets = [0, 0], sizes = [16, 8], strides = [1, 1]} : vector<16x64xf32> to vector<16x8xf32>
    %120 = arith.mulf %118, %119 : vector<16x8xf32>
    %cst_28 = arith.constant dense<0.000000e+00> : vector<16xf32>
    %121 = vector.multi_reduction <add>, %120, %cst_28 [1] : vector<16x8xf32> to vector<16xf32>
    %122 = vector.shape_cast %121 : vector<16xf32> to vector<16x1xf32>
    %123 = vector.extract_strided_slice %30 {offsets = [0, 8], sizes = [16, 8], strides = [1, 1]} : vector<16x64xf32> to vector<16x8xf32>
    %124 = arith.mulf %118, %123 : vector<16x8xf32>
    %cst_29 = arith.constant dense<0.000000e+00> : vector<16xf32>
    %125 = vector.multi_reduction <add>, %124, %cst_29 [1] : vector<16x8xf32> to vector<16xf32>
    %126 = vector.shape_cast %125 : vector<16xf32> to vector<16x1xf32>
    %127 = vector.extract_strided_slice %30 {offsets = [0, 16], sizes = [16, 8], strides = [1, 1]} : vector<16x64xf32> to vector<16x8xf32>
    %128 = arith.mulf %118, %127 : vector<16x8xf32>
    %cst_30 = arith.constant dense<0.000000e+00> : vector<16xf32>
    %129 = vector.multi_reduction <add>, %128, %cst_30 [1] : vector<16x8xf32> to vector<16xf32>
    %130 = vector.shape_cast %129 : vector<16xf32> to vector<16x1xf32>
    %131 = vector.extract_strided_slice %30 {offsets = [0, 24], sizes = [16, 8], strides = [1, 1]} : vector<16x64xf32> to vector<16x8xf32>
    %132 = arith.mulf %118, %131 : vector<16x8xf32>
    %cst_31 = arith.constant dense<0.000000e+00> : vector<16xf32>
    %133 = vector.multi_reduction <add>, %132, %cst_31 [1] : vector<16x8xf32> to vector<16xf32>
    %134 = vector.shape_cast %133 : vector<16xf32> to vector<16x1xf32>
    %135 = vector.extract_strided_slice %30 {offsets = [0, 32], sizes = [16, 8], strides = [1, 1]} : vector<16x64xf32> to vector<16x8xf32>
    %136 = arith.mulf %118, %135 : vector<16x8xf32>
    %cst_32 = arith.constant dense<0.000000e+00> : vector<16xf32>
    %137 = vector.multi_reduction <add>, %136, %cst_32 [1] : vector<16x8xf32> to vector<16xf32>
    %138 = vector.shape_cast %137 : vector<16xf32> to vector<16x1xf32>
    %139 = vector.extract_strided_slice %30 {offsets = [0, 40], sizes = [16, 8], strides = [1, 1]} : vector<16x64xf32> to vector<16x8xf32>
    %140 = arith.mulf %118, %139 : vector<16x8xf32>
    %cst_33 = arith.constant dense<0.000000e+00> : vector<16xf32>
    %141 = vector.multi_reduction <add>, %140, %cst_33 [1] : vector<16x8xf32> to vector<16xf32>
    %142 = vector.shape_cast %141 : vector<16xf32> to vector<16x1xf32>
    %143 = vector.extract_strided_slice %30 {offsets = [0, 48], sizes = [16, 8], strides = [1, 1]} : vector<16x64xf32> to vector<16x8xf32>
    %144 = arith.mulf %118, %143 : vector<16x8xf32>
    %cst_34 = arith.constant dense<0.000000e+00> : vector<16xf32>
    %145 = vector.multi_reduction <add>, %144, %cst_34 [1] : vector<16x8xf32> to vector<16xf32>
    %146 = vector.shape_cast %145 : vector<16xf32> to vector<16x1xf32>
    %147 = vector.extract_strided_slice %30 {offsets = [0, 56], sizes = [16, 8], strides = [1, 1]} : vector<16x64xf32> to vector<16x8xf32>
    %148 = arith.mulf %118, %147 : vector<16x8xf32>
    %cst_35 = arith.constant dense<0.000000e+00> : vector<16xf32>
    %149 = vector.multi_reduction <add>, %148, %cst_35 [1] : vector<16x8xf32> to vector<16xf32>
    %150 = vector.shape_cast %149 : vector<16xf32> to vector<16x1xf32>
    %151 = tpu.concatenate %122, %126, %130, %134, %138, %142, %146, %150 in 1 : vector<16x1xf32>, vector<16x1xf32>, vector<16x1xf32>, vector<16x1xf32>, vector<16x1xf32>, vector<16x1xf32>, vector<16x1xf32>, vector<16x1xf32> -> vector<16x8xf32>
    %cst_36 = arith.constant 0.353553385 : f32
    %152 = vector.broadcast %cst_36 : f32 to vector<16x8xf32>
    %153 = arith.mulf %151, %152 : vector<16x8xf32>
    %cst_37 = arith.constant dense<0xFF800000> : vector<16xf32>
    %154 = vector.multi_reduction <maximumf>, %153, %cst_37 [1] : vector<16x8xf32> to vector<16xf32>
    %155 = vector.shape_cast %154 : vector<16xf32> to vector<16x1xf32>
    %156 = vector.broadcast %155 : vector<16x1xf32> to vector<16x8xf32>
    %157 = arith.subf %153, %156 : vector<16x8xf32>
    %158 = math.exp %157 : vector<16x8xf32>
    %cst_38 = arith.constant dense<0.000000e+00> : vector<16xf32>
    %159 = vector.multi_reduction <add>, %158, %cst_38 [1] : vector<16x8xf32> to vector<16xf32>
    %160 = vector.shape_cast %159 : vector<16xf32> to vector<16x1xf32>
    %161 = tpu.reciprocal %160 {approx = true} : vector<16x1xf32> -> vector<16x1xf32>
    %162 = vector.broadcast %161 : vector<16x1xf32> to vector<16x8xf32>
    %163 = arith.mulf %158, %162 : vector<16x8xf32>
    %164 = vector.extract_strided_slice %163 {offsets = [0, 0], sizes = [16, 1], strides = [1, 1]} : vector<16x8xf32> to vector<16x1xf32>
    %165 = vector.extract_strided_slice %31 {offsets = [0, 0], sizes = [16, 8], strides = [1, 1]} : vector<16x64xf32> to vector<16x8xf32>
    %166 = vector.broadcast %164 : vector<16x1xf32> to vector<16x8xf32>
    %167 = arith.mulf %166, %165 : vector<16x8xf32>
    %168 = vector.extract_strided_slice %163 {offsets = [0, 1], sizes = [16, 1], strides = [1, 1]} : vector<16x8xf32> to vector<16x1xf32>
    %169 = vector.extract_strided_slice %31 {offsets = [0, 8], sizes = [16, 8], strides = [1, 1]} : vector<16x64xf32> to vector<16x8xf32>
    %170 = vector.broadcast %168 : vector<16x1xf32> to vector<16x8xf32>
    %171 = arith.mulf %170, %169 : vector<16x8xf32>
    %172 = arith.addf %167, %171 : vector<16x8xf32>
    %173 = vector.extract_strided_slice %163 {offsets = [0, 2], sizes = [16, 1], strides = [1, 1]} : vector<16x8xf32> to vector<16x1xf32>
    %174 = vector.extract_strided_slice %31 {offsets = [0, 16], sizes = [16, 8], strides = [1, 1]} : vector<16x64xf32> to vector<16x8xf32>
    %175 = vector.broadcast %173 : vector<16x1xf32> to vector<16x8xf32>
    %176 = arith.mulf %175, %174 : vector<16x8xf32>
    %177 = arith.addf %172, %176 : vector<16x8xf32>
    %178 = vector.extract_strided_slice %163 {offsets = [0, 3], sizes = [16, 1], strides = [1, 1]} : vector<16x8xf32> to vector<16x1xf32>
    %179 = vector.extract_strided_slice %31 {offsets = [0, 24], sizes = [16, 8], strides = [1, 1]} : vector<16x64xf32> to vector<16x8xf32>
    %180 = vector.broadcast %178 : vector<16x1xf32> to vector<16x8xf32>
    %181 = arith.mulf %180, %179 : vector<16x8xf32>
    %182 = arith.addf %177, %181 : vector<16x8xf32>
    %183 = vector.extract_strided_slice %163 {offsets = [0, 4], sizes = [16, 1], strides = [1, 1]} : vector<16x8xf32> to vector<16x1xf32>
    %184 = vector.extract_strided_slice %31 {offsets = [0, 32], sizes = [16, 8], strides = [1, 1]} : vector<16x64xf32> to vector<16x8xf32>
    %185 = vector.broadcast %183 : vector<16x1xf32> to vector<16x8xf32>
    %186 = arith.mulf %185, %184 : vector<16x8xf32>
    %187 = arith.addf %182, %186 : vector<16x8xf32>
    %188 = vector.extract_strided_slice %163 {offsets = [0, 5], sizes = [16, 1], strides = [1, 1]} : vector<16x8xf32> to vector<16x1xf32>
    %189 = vector.extract_strided_slice %31 {offsets = [0, 40], sizes = [16, 8], strides = [1, 1]} : vector<16x64xf32> to vector<16x8xf32>
    %190 = vector.broadcast %188 : vector<16x1xf32> to vector<16x8xf32>
    %191 = arith.mulf %190, %189 : vector<16x8xf32>
    %192 = arith.addf %187, %191 : vector<16x8xf32>
    %193 = vector.extract_strided_slice %163 {offsets = [0, 6], sizes = [16, 1], strides = [1, 1]} : vector<16x8xf32> to vector<16x1xf32>
    %194 = vector.extract_strided_slice %31 {offsets = [0, 48], sizes = [16, 8], strides = [1, 1]} : vector<16x64xf32> to vector<16x8xf32>
    %195 = vector.broadcast %193 : vector<16x1xf32> to vector<16x8xf32>
    %196 = arith.mulf %195, %194 : vector<16x8xf32>
    %197 = arith.addf %192, %196 : vector<16x8xf32>
    %198 = vector.extract_strided_slice %163 {offsets = [0, 7], sizes = [16, 1], strides = [1, 1]} : vector<16x8xf32> to vector<16x1xf32>
    %199 = vector.extract_strided_slice %31 {offsets = [0, 56], sizes = [16, 8], strides = [1, 1]} : vector<16x64xf32> to vector<16x8xf32>
    %200 = vector.broadcast %198 : vector<16x1xf32> to vector<16x8xf32>
    %201 = arith.mulf %200, %199 : vector<16x8xf32>
    %202 = arith.addf %197, %201 : vector<16x8xf32>
    %c16 = arith.constant 16 : index
    %c0_39 = arith.constant 0 : index
    %203 = vector.load %arg15[%c16, %c0_39] : memref<128x8xf32, #tpu.memory_space<vmem>>, vector<16x8xf32>
    tpu.vector_store %arg15[%c16, %c0_39], %202 {strides = array<i32>} : memref<128x8xf32, #tpu.memory_space<vmem>>, vector<16x8xf32>,
    %204 = vector.extract_strided_slice %29 {offsets = [0, 16], sizes = [16, 8], strides = [1, 1]} : vector<16x64xf32> to vector<16x8xf32>
    %205 = vector.extract_strided_slice %30 {offsets = [0, 0], sizes = [16, 8], strides = [1, 1]} : vector<16x64xf32> to vector<16x8xf32>
    %206 = arith.mulf %204, %205 : vector<16x8xf32>
    %cst_40 = arith.constant dense<0.000000e+00> : vector<16xf32>
    %207 = vector.multi_reduction <add>, %206, %cst_40 [1] : vector<16x8xf32> to vector<16xf32>
    %208 = vector.shape_cast %207 : vector<16xf32> to vector<16x1xf32>
    %209 = vector.extract_strided_slice %30 {offsets = [0, 8], sizes = [16, 8], strides = [1, 1]} : vector<16x64xf32> to vector<16x8xf32>
    %210 = arith.mulf %204, %209 : vector<16x8xf32>
    %cst_41 = arith.constant dense<0.000000e+00> : vector<16xf32>
    %211 = vector.multi_reduction <add>, %210, %cst_41 [1] : vector<16x8xf32> to vector<16xf32>
    %212 = vector.shape_cast %211 : vector<16xf32> to vector<16x1xf32>
    %213 = vector.extract_strided_slice %30 {offsets = [0, 16], sizes = [16, 8], strides = [1, 1]} : vector<16x64xf32> to vector<16x8xf32>
    %214 = arith.mulf %204, %213 : vector<16x8xf32>
    %cst_42 = arith.constant dense<0.000000e+00> : vector<16xf32>
    %215 = vector.multi_reduction <add>, %214, %cst_42 [1] : vector<16x8xf32> to vector<16xf32>
    %216 = vector.shape_cast %215 : vector<16xf32> to vector<16x1xf32>
    %217 = vector.extract_strided_slice %30 {offsets = [0, 24], sizes = [16, 8], strides = [1, 1]} : vector<16x64xf32> to vector<16x8xf32>
    %218 = arith.mulf %204, %217 : vector<16x8xf32>
    %cst_43 = arith.constant dense<0.000000e+00> : vector<16xf32>
    %219 = vector.multi_reduction <add>, %218, %cst_43 [1] : vector<16x8xf32> to vector<16xf32>
    %220 = vector.shape_cast %219 : vector<16xf32> to vector<16x1xf32>
    %221 = vector.extract_strided_slice %30 {offsets = [0, 32], sizes = [16, 8], strides = [1, 1]} : vector<16x64xf32> to vector<16x8xf32>
    %222 = arith.mulf %204, %221 : vector<16x8xf32>
    %cst_44 = arith.constant dense<0.000000e+00> : vector<16xf32>
    %223 = vector.multi_reduction <add>, %222, %cst_44 [1] : vector<16x8xf32> to vector<16xf32>
    %224 = vector.shape_cast %223 : vector<16xf32> to vector<16x1xf32>
    %225 = vector.extract_strided_slice %30 {offsets = [0, 40], sizes = [16, 8], strides = [1, 1]} : vector<16x64xf32> to vector<16x8xf32>
    %226 = arith.mulf %204, %225 : vector<16x8xf32>
    %cst_45 = arith.constant dense<0.000000e+00> : vector<16xf32>
    %227 = vector.multi_reduction <add>, %226, %cst_45 [1] : vector<16x8xf32> to vector<16xf32>
    %228 = vector.shape_cast %227 : vector<16xf32> to vector<16x1xf32>
    %229 = vector.extract_strided_slice %30 {offsets = [0, 48], sizes = [16, 8], strides = [1, 1]} : vector<16x64xf32> to vector<16x8xf32>
    %230 = arith.mulf %204, %229 : vector<16x8xf32>
    %cst_46 = arith.constant dense<0.000000e+00> : vector<16xf32>
    %231 = vector.multi_reduction <add>, %230, %cst_46 [1] : vector<16x8xf32> to vector<16xf32>
    %232 = vector.shape_cast %231 : vector<16xf32> to vector<16x1xf32>
    %233 = vector.extract_strided_slice %30 {offsets = [0, 56], sizes = [16, 8], strides = [1, 1]} : vector<16x64xf32> to vector<16x8xf32>
    %234 = arith.mulf %204, %233 : vector<16x8xf32>
    %cst_47 = arith.constant dense<0.000000e+00> : vector<16xf32>
    %235 = vector.multi_reduction <add>, %234, %cst_47 [1] : vector<16x8xf32> to vector<16xf32>
    %236 = vector.shape_cast %235 : vector<16xf32> to vector<16x1xf32>
    %237 = tpu.concatenate %208, %212, %216, %220, %224, %228, %232, %236 in 1 : vector<16x1xf32>, vector<16x1xf32>, vector<16x1xf32>, vector<16x1xf32>, vector<16x1xf32>, vector<16x1xf32>, vector<16x1xf32>, vector<16x1xf32> -> vector<16x8xf32>
    %cst_48 = arith.constant 0.353553385 : f32
    %238 = vector.broadcast %cst_48 : f32 to vector<16x8xf32>
    %239 = arith.mulf %237, %238 : vector<16x8xf32>
    %cst_49 = arith.constant dense<0xFF800000> : vector<16xf32>
    %240 = vector.multi_reduction <maximumf>, %239, %cst_49 [1] : vector<16x8xf32> to vector<16xf32>
    %241 = vector.shape_cast %240 : vector<16xf32> to vector<16x1xf32>
    %242 = vector.broadcast %241 : vector<16x1xf32> to vector<16x8xf32>
    %243 = arith.subf %239, %242 : vector<16x8xf32>
    %244 = math.exp %243 : vector<16x8xf32>
    %cst_50 = arith.constant dense<0.000000e+00> : vector<16xf32>
    %245 = vector.multi_reduction <add>, %244, %cst_50 [1] : vector<16x8xf32> to vector<16xf32>
    %246 = vector.shape_cast %245 : vector<16xf32> to vector<16x1xf32>
    %247 = tpu.reciprocal %246 {approx = true} : vector<16x1xf32> -> vector<16x1xf32>
    %248 = vector.broadcast %247 : vector<16x1xf32> to vector<16x8xf32>
    %249 = arith.mulf %244, %248 : vector<16x8xf32>
    %250 = vector.extract_strided_slice %249 {offsets = [0, 0], sizes = [16, 1], strides = [1, 1]} : vector<16x8xf32> to vector<16x1xf32>
    %251 = vector.extract_strided_slice %31 {offsets = [0, 0], sizes = [16, 8], strides = [1, 1]} : vector<16x64xf32> to vector<16x8xf32>
    %252 = vector.broadcast %250 : vector<16x1xf32> to vector<16x8xf32>
    %253 = arith.mulf %252, %251 : vector<16x8xf32>
    %254 = vector.extract_strided_slice %249 {offsets = [0, 1], sizes = [16, 1], strides = [1, 1]} : vector<16x8xf32> to vector<16x1xf32>
    %255 = vector.extract_strided_slice %31 {offsets = [0, 8], sizes = [16, 8], strides = [1, 1]} : vector<16x64xf32> to vector<16x8xf32>
    %256 = vector.broadcast %254 : vector<16x1xf32> to vector<16x8xf32>
    %257 = arith.mulf %256, %255 : vector<16x8xf32>
    %258 = arith.addf %253, %257 : vector<16x8xf32>
    %259 = vector.extract_strided_slice %249 {offsets = [0, 2], sizes = [16, 1], strides = [1, 1]} : vector<16x8xf32> to vector<16x1xf32>
    %260 = vector.extract_strided_slice %31 {offsets = [0, 16], sizes = [16, 8], strides = [1, 1]} : vector<16x64xf32> to vector<16x8xf32>
    %261 = vector.broadcast %259 : vector<16x1xf32> to vector<16x8xf32>
    %262 = arith.mulf %261, %260 : vector<16x8xf32>
    %263 = arith.addf %258, %262 : vector<16x8xf32>
    %264 = vector.extract_strided_slice %249 {offsets = [0, 3], sizes = [16, 1], strides = [1, 1]} : vector<16x8xf32> to vector<16x1xf32>
    %265 = vector.extract_strided_slice %31 {offsets = [0, 24], sizes = [16, 8], strides = [1, 1]} : vector<16x64xf32> to vector<16x8xf32>
    %266 = vector.broadcast %264 : vector<16x1xf32> to vector<16x8xf32>
    %267 = arith.mulf %266, %265 : vector<16x8xf32>
    %268 = arith.addf %263, %267 : vector<16x8xf32>
    %269 = vector.extract_strided_slice %249 {offsets = [0, 4], sizes = [16, 1], strides = [1, 1]} : vector<16x8xf32> to vector<16x1xf32>
    %270 = vector.extract_strided_slice %31 {offsets = [0, 32], sizes = [16, 8], strides = [1, 1]} : vector<16x64xf32> to vector<16x8xf32>
    %271 = vector.broadcast %269 : vector<16x1xf32> to vector<16x8xf32>
    %272 = arith.mulf %271, %270 : vector<16x8xf32>
    %273 = arith.addf %268, %272 : vector<16x8xf32>
    %274 = vector.extract_strided_slice %249 {offsets = [0, 5], sizes = [16, 1], strides = [1, 1]} : vector<16x8xf32> to vector<16x1xf32>
    %275 = vector.extract_strided_slice %31 {offsets = [0, 40], sizes = [16, 8], strides = [1, 1]} : vector<16x64xf32> to vector<16x8xf32>
    %276 = vector.broadcast %274 : vector<16x1xf32> to vector<16x8xf32>
    %277 = arith.mulf %276, %275 : vector<16x8xf32>
    %278 = arith.addf %273, %277 : vector<16x8xf32>
    %279 = vector.extract_strided_slice %249 {offsets = [0, 6], sizes = [16, 1], strides = [1, 1]} : vector<16x8xf32> to vector<16x1xf32>
    %280 = vector.extract_strided_slice %31 {offsets = [0, 48], sizes = [16, 8], strides = [1, 1]} : vector<16x64xf32> to vector<16x8xf32>
    %281 = vector.broadcast %279 : vector<16x1xf32> to vector<16x8xf32>
    %282 = arith.mulf %281, %280 : vector<16x8xf32>
    %283 = arith.addf %278, %282 : vector<16x8xf32>
    %284 = vector.extract_strided_slice %249 {offsets = [0, 7], sizes = [16, 1], strides = [1, 1]} : vector<16x8xf32> to vector<16x1xf32>
    %285 = vector.extract_strided_slice %31 {offsets = [0, 56], sizes = [16, 8], strides = [1, 1]} : vector<16x64xf32> to vector<16x8xf32>
    %286 = vector.broadcast %284 : vector<16x1xf32> to vector<16x8xf32>
    %287 = arith.mulf %286, %285 : vector<16x8xf32>
    %288 = arith.addf %283, %287 : vector<16x8xf32>
    %c32 = arith.constant 32 : index
    %c0_51 = arith.constant 0 : index
    %289 = vector.load %arg15[%c32, %c0_51] : memref<128x8xf32, #tpu.memory_space<vmem>>, vector<16x8xf32>
    tpu.vector_store %arg15[%c32, %c0_51], %288 {strides = array<i32>} : memref<128x8xf32, #tpu.memory_space<vmem>>, vector<16x8xf32>,
    %290 = vector.extract_strided_slice %29 {offsets = [0, 24], sizes = [16, 8], strides = [1, 1]} : vector<16x64xf32> to vector<16x8xf32>
    %291 = vector.extract_strided_slice %30 {offsets = [0, 0], sizes = [16, 8], strides = [1, 1]} : vector<16x64xf32> to vector<16x8xf32>
    %292 = arith.mulf %290, %291 : vector<16x8xf32>
    %cst_52 = arith.constant dense<0.000000e+00> : vector<16xf32>
    %293 = vector.multi_reduction <add>, %292, %cst_52 [1] : vector<16x8xf32> to vector<16xf32>
    %294 = vector.shape_cast %293 : vector<16xf32> to vector<16x1xf32>
    %295 = vector.extract_strided_slice %30 {offsets = [0, 8], sizes = [16, 8], strides = [1, 1]} : vector<16x64xf32> to vector<16x8xf32>
    %296 = arith.mulf %290, %295 : vector<16x8xf32>
    %cst_53 = arith.constant dense<0.000000e+00> : vector<16xf32>
    %297 = vector.multi_reduction <add>, %296, %cst_53 [1] : vector<16x8xf32> to vector<16xf32>
    %298 = vector.shape_cast %297 : vector<16xf32> to vector<16x1xf32>
    %299 = vector.extract_strided_slice %30 {offsets = [0, 16], sizes = [16, 8], strides = [1, 1]} : vector<16x64xf32> to vector<16x8xf32>
    %300 = arith.mulf %290, %299 : vector<16x8xf32>
    %cst_54 = arith.constant dense<0.000000e+00> : vector<16xf32>
    %301 = vector.multi_reduction <add>, %300, %cst_54 [1] : vector<16x8xf32> to vector<16xf32>
    %302 = vector.shape_cast %301 : vector<16xf32> to vector<16x1xf32>
    %303 = vector.extract_strided_slice %30 {offsets = [0, 24], sizes = [16, 8], strides = [1, 1]} : vector<16x64xf32> to vector<16x8xf32>
    %304 = arith.mulf %290, %303 : vector<16x8xf32>
    %cst_55 = arith.constant dense<0.000000e+00> : vector<16xf32>
    %305 = vector.multi_reduction <add>, %304, %cst_55 [1] : vector<16x8xf32> to vector<16xf32>
    %306 = vector.shape_cast %305 : vector<16xf32> to vector<16x1xf32>
    %307 = vector.extract_strided_slice %30 {offsets = [0, 32], sizes = [16, 8], strides = [1, 1]} : vector<16x64xf32> to vector<16x8xf32>
    %308 = arith.mulf %290, %307 : vector<16x8xf32>
    %cst_56 = arith.constant dense<0.000000e+00> : vector<16xf32>
    %309 = vector.multi_reduction <add>, %308, %cst_56 [1] : vector<16x8xf32> to vector<16xf32>
    %310 = vector.shape_cast %309 : vector<16xf32> to vector<16x1xf32>
    %311 = vector.extract_strided_slice %30 {offsets = [0, 40], sizes = [16, 8], strides = [1, 1]} : vector<16x64xf32> to vector<16x8xf32>
    %312 = arith.mulf %290, %311 : vector<16x8xf32>
    %cst_57 = arith.constant dense<0.000000e+00> : vector<16xf32>
    %313 = vector.multi_reduction <add>, %312, %cst_57 [1] : vector<16x8xf32> to vector<16xf32>
    %314 = vector.shape_cast %313 : vector<16xf32> to vector<16x1xf32>
    %315 = vector.extract_strided_slice %30 {offsets = [0, 48], sizes = [16, 8], strides = [1, 1]} : vector<16x64xf32> to vector<16x8xf32>
    %316 = arith.mulf %290, %315 : vector<16x8xf32>
    %cst_58 = arith.constant dense<0.000000e+00> : vector<16xf32>
    %317 = vector.multi_reduction <add>, %316, %cst_58 [1] : vector<16x8xf32> to vector<16xf32>
    %318 = vector.shape_cast %317 : vector<16xf32> to vector<16x1xf32>
    %319 = vector.extract_strided_slice %30 {offsets = [0, 56], sizes = [16, 8], strides = [1, 1]} : vector<16x64xf32> to vector<16x8xf32>
    %320 = arith.mulf %290, %319 : vector<16x8xf32>
    %cst_59 = arith.constant dense<0.000000e+00> : vector<16xf32>
    %321 = vector.multi_reduction <add>, %320, %cst_59 [1] : vector<16x8xf32> to vector<16xf32>
    %322 = vector.shape_cast %321 : vector<16xf32> to vector<16x1xf32>
    %323 = tpu.concatenate %294, %298, %302, %306, %310, %314, %318, %322 in 1 : vector<16x1xf32>, vector<16x1xf32>, vector<16x1xf32>, vector<16x1xf32>, vector<16x1xf32>, vector<16x1xf32>, vector<16x1xf32>, vector<16x1xf32> -> vector<16x8xf32>
    %cst_60 = arith.constant 0.353553385 : f32
    %324 = vector.broadcast %cst_60 : f32 to vector<16x8xf32>
    %325 = arith.mulf %323, %324 : vector<16x8xf32>
    %cst_61 = arith.constant dense<0xFF800000> : vector<16xf32>
    %326 = vector.multi_reduction <maximumf>, %325, %cst_61 [1] : vector<16x8xf32> to vector<16xf32>
    %327 = vector.shape_cast %326 : vector<16xf32> to vector<16x1xf32>
    %328 = vector.broadcast %327 : vector<16x1xf32> to vector<16x8xf32>
    %329 = arith.subf %325, %328 : vector<16x8xf32>
    %330 = math.exp %329 : vector<16x8xf32>
    %cst_62 = arith.constant dense<0.000000e+00> : vector<16xf32>
    %331 = vector.multi_reduction <add>, %330, %cst_62 [1] : vector<16x8xf32> to vector<16xf32>
    %332 = vector.shape_cast %331 : vector<16xf32> to vector<16x1xf32>
    %333 = tpu.reciprocal %332 {approx = true} : vector<16x1xf32> -> vector<16x1xf32>
    %334 = vector.broadcast %333 : vector<16x1xf32> to vector<16x8xf32>
    %335 = arith.mulf %330, %334 : vector<16x8xf32>
    %336 = vector.extract_strided_slice %335 {offsets = [0, 0], sizes = [16, 1], strides = [1, 1]} : vector<16x8xf32> to vector<16x1xf32>
    %337 = vector.extract_strided_slice %31 {offsets = [0, 0], sizes = [16, 8], strides = [1, 1]} : vector<16x64xf32> to vector<16x8xf32>
    %338 = vector.broadcast %336 : vector<16x1xf32> to vector<16x8xf32>
    %339 = arith.mulf %338, %337 : vector<16x8xf32>
    %340 = vector.extract_strided_slice %335 {offsets = [0, 1], sizes = [16, 1], strides = [1, 1]} : vector<16x8xf32> to vector<16x1xf32>
    %341 = vector.extract_strided_slice %31 {offsets = [0, 8], sizes = [16, 8], strides = [1, 1]} : vector<16x64xf32> to vector<16x8xf32>
    %342 = vector.broadcast %340 : vector<16x1xf32> to vector<16x8xf32>
    %343 = arith.mulf %342, %341 : vector<16x8xf32>
    %344 = arith.addf %339, %343 : vector<16x8xf32>
    %345 = vector.extract_strided_slice %335 {offsets = [0, 2], sizes = [16, 1], strides = [1, 1]} : vector<16x8xf32> to vector<16x1xf32>
    %346 = vector.extract_strided_slice %31 {offsets = [0, 16], sizes = [16, 8], strides = [1, 1]} : vector<16x64xf32> to vector<16x8xf32>
    %347 = vector.broadcast %345 : vector<16x1xf32> to vector<16x8xf32>
    %348 = arith.mulf %347, %346 : vector<16x8xf32>
    %349 = arith.addf %344, %348 : vector<16x8xf32>
    %350 = vector.extract_strided_slice %335 {offsets = [0, 3], sizes = [16, 1], strides = [1, 1]} : vector<16x8xf32> to vector<16x1xf32>
    %351 = vector.extract_strided_slice %31 {offsets = [0, 24], sizes = [16, 8], strides = [1, 1]} : vector<16x64xf32> to vector<16x8xf32>
    %352 = vector.broadcast %350 : vector<16x1xf32> to vector<16x8xf32>
    %353 = arith.mulf %352, %351 : vector<16x8xf32>
    %354 = arith.addf %349, %353 : vector<16x8xf32>
    %355 = vector.extract_strided_slice %335 {offsets = [0, 4], sizes = [16, 1], strides = [1, 1]} : vector<16x8xf32> to vector<16x1xf32>
    %356 = vector.extract_strided_slice %31 {offsets = [0, 32], sizes = [16, 8], strides = [1, 1]} : vector<16x64xf32> to vector<16x8xf32>
    %357 = vector.broadcast %355 : vector<16x1xf32> to vector<16x8xf32>
    %358 = arith.mulf %357, %356 : vector<16x8xf32>
    %359 = arith.addf %354, %358 : vector<16x8xf32>
    %360 = vector.extract_strided_slice %335 {offsets = [0, 5], sizes = [16, 1], strides = [1, 1]} : vector<16x8xf32> to vector<16x1xf32>
    %361 = vector.extract_strided_slice %31 {offsets = [0, 40], sizes = [16, 8], strides = [1, 1]} : vector<16x64xf32> to vector<16x8xf32>
    %362 = vector.broadcast %360 : vector<16x1xf32> to vector<16x8xf32>
    %363 = arith.mulf %362, %361 : vector<16x8xf32>
    %364 = arith.addf %359, %363 : vector<16x8xf32>
    %365 = vector.extract_strided_slice %335 {offsets = [0, 6], sizes = [16, 1], strides = [1, 1]} : vector<16x8xf32> to vector<16x1xf32>
    %366 = vector.extract_strided_slice %31 {offsets = [0, 48], sizes = [16, 8], strides = [1, 1]} : vector<16x64xf32> to vector<16x8xf32>
    %367 = vector.broadcast %365 : vector<16x1xf32> to vector<16x8xf32>
    %368 = arith.mulf %367, %366 : vector<16x8xf32>
    %369 = arith.addf %364, %368 : vector<16x8xf32>
    %370 = vector.extract_strided_slice %335 {offsets = [0, 7], sizes = [16, 1], strides = [1, 1]} : vector<16x8xf32> to vector<16x1xf32>
    %371 = vector.extract_strided_slice %31 {offsets = [0, 56], sizes = [16, 8], strides = [1, 1]} : vector<16x64xf32> to vector<16x8xf32>
    %372 = vector.broadcast %370 : vector<16x1xf32> to vector<16x8xf32>
    %373 = arith.mulf %372, %371 : vector<16x8xf32>
    %374 = arith.addf %369, %373 : vector<16x8xf32>
    %c48 = arith.constant 48 : index
    %c0_63 = arith.constant 0 : index
    %375 = vector.load %arg15[%c48, %c0_63] : memref<128x8xf32, #tpu.memory_space<vmem>>, vector<16x8xf32>
    tpu.vector_store %arg15[%c48, %c0_63], %374 {strides = array<i32>} : memref<128x8xf32, #tpu.memory_space<vmem>>, vector<16x8xf32>,
    %376 = vector.extract_strided_slice %29 {offsets = [0, 32], sizes = [16, 8], strides = [1, 1]} : vector<16x64xf32> to vector<16x8xf32>
    %377 = vector.extract_strided_slice %30 {offsets = [0, 0], sizes = [16, 8], strides = [1, 1]} : vector<16x64xf32> to vector<16x8xf32>
    %378 = arith.mulf %376, %377 : vector<16x8xf32>
    %cst_64 = arith.constant dense<0.000000e+00> : vector<16xf32>
    %379 = vector.multi_reduction <add>, %378, %cst_64 [1] : vector<16x8xf32> to vector<16xf32>
    %380 = vector.shape_cast %379 : vector<16xf32> to vector<16x1xf32>
    %381 = vector.extract_strided_slice %30 {offsets = [0, 8], sizes = [16, 8], strides = [1, 1]} : vector<16x64xf32> to vector<16x8xf32>
    %382 = arith.mulf %376, %381 : vector<16x8xf32>
    %cst_65 = arith.constant dense<0.000000e+00> : vector<16xf32>
    %383 = vector.multi_reduction <add>, %382, %cst_65 [1] : vector<16x8xf32> to vector<16xf32>
    %384 = vector.shape_cast %383 : vector<16xf32> to vector<16x1xf32>
    %385 = vector.extract_strided_slice %30 {offsets = [0, 16], sizes = [16, 8], strides = [1, 1]} : vector<16x64xf32> to vector<16x8xf32>
    %386 = arith.mulf %376, %385 : vector<16x8xf32>
    %cst_66 = arith.constant dense<0.000000e+00> : vector<16xf32>
    %387 = vector.multi_reduction <add>, %386, %cst_66 [1] : vector<16x8xf32> to vector<16xf32>
    %388 = vector.shape_cast %387 : vector<16xf32> to vector<16x1xf32>
    %389 = vector.extract_strided_slice %30 {offsets = [0, 24], sizes = [16, 8], strides = [1, 1]} : vector<16x64xf32> to vector<16x8xf32>
    %390 = arith.mulf %376, %389 : vector<16x8xf32>
    %cst_67 = arith.constant dense<0.000000e+00> : vector<16xf32>
    %391 = vector.multi_reduction <add>, %390, %cst_67 [1] : vector<16x8xf32> to vector<16xf32>
    %392 = vector.shape_cast %391 : vector<16xf32> to vector<16x1xf32>
    %393 = vector.extract_strided_slice %30 {offsets = [0, 32], sizes = [16, 8], strides = [1, 1]} : vector<16x64xf32> to vector<16x8xf32>
    %394 = arith.mulf %376, %393 : vector<16x8xf32>
    %cst_68 = arith.constant dense<0.000000e+00> : vector<16xf32>
    %395 = vector.multi_reduction <add>, %394, %cst_68 [1] : vector<16x8xf32> to vector<16xf32>
    %396 = vector.shape_cast %395 : vector<16xf32> to vector<16x1xf32>
    %397 = vector.extract_strided_slice %30 {offsets = [0, 40], sizes = [16, 8], strides = [1, 1]} : vector<16x64xf32> to vector<16x8xf32>
    %398 = arith.mulf %376, %397 : vector<16x8xf32>
    %cst_69 = arith.constant dense<0.000000e+00> : vector<16xf32>
    %399 = vector.multi_reduction <add>, %398, %cst_69 [1] : vector<16x8xf32> to vector<16xf32>
    %400 = vector.shape_cast %399 : vector<16xf32> to vector<16x1xf32>
    %401 = vector.extract_strided_slice %30 {offsets = [0, 48], sizes = [16, 8], strides = [1, 1]} : vector<16x64xf32> to vector<16x8xf32>
    %402 = arith.mulf %376, %401 : vector<16x8xf32>
    %cst_70 = arith.constant dense<0.000000e+00> : vector<16xf32>
    %403 = vector.multi_reduction <add>, %402, %cst_70 [1] : vector<16x8xf32> to vector<16xf32>
    %404 = vector.shape_cast %403 : vector<16xf32> to vector<16x1xf32>
    %405 = vector.extract_strided_slice %30 {offsets = [0, 56], sizes = [16, 8], strides = [1, 1]} : vector<16x64xf32> to vector<16x8xf32>
    %406 = arith.mulf %376, %405 : vector<16x8xf32>
    %cst_71 = arith.constant dense<0.000000e+00> : vector<16xf32>
    %407 = vector.multi_reduction <add>, %406, %cst_71 [1] : vector<16x8xf32> to vector<16xf32>
    %408 = vector.shape_cast %407 : vector<16xf32> to vector<16x1xf32>
    %409 = tpu.concatenate %380, %384, %388, %392, %396, %400, %404, %408 in 1 : vector<16x1xf32>, vector<16x1xf32>, vector<16x1xf32>, vector<16x1xf32>, vector<16x1xf32>, vector<16x1xf32>, vector<16x1xf32>, vector<16x1xf32> -> vector<16x8xf32>
    %cst_72 = arith.constant 0.353553385 : f32
    %410 = vector.broadcast %cst_72 : f32 to vector<16x8xf32>
    %411 = arith.mulf %409, %410 : vector<16x8xf32>
    %cst_73 = arith.constant dense<0xFF800000> : vector<16xf32>
    %412 = vector.multi_reduction <maximumf>, %411, %cst_73 [1] : vector<16x8xf32> to vector<16xf32>
    %413 = vector.shape_cast %412 : vector<16xf32> to vector<16x1xf32>
    %414 = vector.broadcast %413 : vector<16x1xf32> to vector<16x8xf32>
    %415 = arith.subf %411, %414 : vector<16x8xf32>
    %416 = math.exp %415 : vector<16x8xf32>
    %cst_74 = arith.constant dense<0.000000e+00> : vector<16xf32>
    %417 = vector.multi_reduction <add>, %416, %cst_74 [1] : vector<16x8xf32> to vector<16xf32>
    %418 = vector.shape_cast %417 : vector<16xf32> to vector<16x1xf32>
    %419 = tpu.reciprocal %418 {approx = true} : vector<16x1xf32> -> vector<16x1xf32>
    %420 = vector.broadcast %419 : vector<16x1xf32> to vector<16x8xf32>
    %421 = arith.mulf %416, %420 : vector<16x8xf32>
    %422 = vector.extract_strided_slice %421 {offsets = [0, 0], sizes = [16, 1], strides = [1, 1]} : vector<16x8xf32> to vector<16x1xf32>
    %423 = vector.extract_strided_slice %31 {offsets = [0, 0], sizes = [16, 8], strides = [1, 1]} : vector<16x64xf32> to vector<16x8xf32>
    %424 = vector.broadcast %422 : vector<16x1xf32> to vector<16x8xf32>
    %425 = arith.mulf %424, %423 : vector<16x8xf32>
    %426 = vector.extract_strided_slice %421 {offsets = [0, 1], sizes = [16, 1], strides = [1, 1]} : vector<16x8xf32> to vector<16x1xf32>
    %427 = vector.extract_strided_slice %31 {offsets = [0, 8], sizes = [16, 8], strides = [1, 1]} : vector<16x64xf32> to vector<16x8xf32>
    %428 = vector.broadcast %426 : vector<16x1xf32> to vector<16x8xf32>
    %429 = arith.mulf %428, %427 : vector<16x8xf32>
    %430 = arith.addf %425, %429 : vector<16x8xf32>
    %431 = vector.extract_strided_slice %421 {offsets = [0, 2], sizes = [16, 1], strides = [1, 1]} : vector<16x8xf32> to vector<16x1xf32>
    %432 = vector.extract_strided_slice %31 {offsets = [0, 16], sizes = [16, 8], strides = [1, 1]} : vector<16x64xf32> to vector<16x8xf32>
    %433 = vector.broadcast %431 : vector<16x1xf32> to vector<16x8xf32>
    %434 = arith.mulf %433, %432 : vector<16x8xf32>
    %435 = arith.addf %430, %434 : vector<16x8xf32>
    %436 = vector.extract_strided_slice %421 {offsets = [0, 3], sizes = [16, 1], strides = [1, 1]} : vector<16x8xf32> to vector<16x1xf32>
    %437 = vector.extract_strided_slice %31 {offsets = [0, 24], sizes = [16, 8], strides = [1, 1]} : vector<16x64xf32> to vector<16x8xf32>
    %438 = vector.broadcast %436 : vector<16x1xf32> to vector<16x8xf32>
    %439 = arith.mulf %438, %437 : vector<16x8xf32>
    %440 = arith.addf %435, %439 : vector<16x8xf32>
    %441 = vector.extract_strided_slice %421 {offsets = [0, 4], sizes = [16, 1], strides = [1, 1]} : vector<16x8xf32> to vector<16x1xf32>
    %442 = vector.extract_strided_slice %31 {offsets = [0, 32], sizes = [16, 8], strides = [1, 1]} : vector<16x64xf32> to vector<16x8xf32>
    %443 = vector.broadcast %441 : vector<16x1xf32> to vector<16x8xf32>
    %444 = arith.mulf %443, %442 : vector<16x8xf32>
    %445 = arith.addf %440, %444 : vector<16x8xf32>
    %446 = vector.extract_strided_slice %421 {offsets = [0, 5], sizes = [16, 1], strides = [1, 1]} : vector<16x8xf32> to vector<16x1xf32>
    %447 = vector.extract_strided_slice %31 {offsets = [0, 40], sizes = [16, 8], strides = [1, 1]} : vector<16x64xf32> to vector<16x8xf32>
    %448 = vector.broadcast %446 : vector<16x1xf32> to vector<16x8xf32>
    %449 = arith.mulf %448, %447 : vector<16x8xf32>
    %450 = arith.addf %445, %449 : vector<16x8xf32>
    %451 = vector.extract_strided_slice %421 {offsets = [0, 6], sizes = [16, 1], strides = [1, 1]} : vector<16x8xf32> to vector<16x1xf32>
    %452 = vector.extract_strided_slice %31 {offsets = [0, 48], sizes = [16, 8], strides = [1, 1]} : vector<16x64xf32> to vector<16x8xf32>
    %453 = vector.broadcast %451 : vector<16x1xf32> to vector<16x8xf32>
    %454 = arith.mulf %453, %452 : vector<16x8xf32>
    %455 = arith.addf %450, %454 : vector<16x8xf32>
    %456 = vector.extract_strided_slice %421 {offsets = [0, 7], sizes = [16, 1], strides = [1, 1]} : vector<16x8xf32> to vector<16x1xf32>
    %457 = vector.extract_strided_slice %31 {offsets = [0, 56], sizes = [16, 8], strides = [1, 1]} : vector<16x64xf32> to vector<16x8xf32>
    %458 = vector.broadcast %456 : vector<16x1xf32> to vector<16x8xf32>
    %459 = arith.mulf %458, %457 : vector<16x8xf32>
    %460 = arith.addf %455, %459 : vector<16x8xf32>
    %c64 = arith.constant 64 : index
    %c0_75 = arith.constant 0 : index
    %461 = vector.load %arg15[%c64, %c0_75] : memref<128x8xf32, #tpu.memory_space<vmem>>, vector<16x8xf32>
    tpu.vector_store %arg15[%c64, %c0_75], %460 {strides = array<i32>} : memref<128x8xf32, #tpu.memory_space<vmem>>, vector<16x8xf32>,
    %462 = vector.extract_strided_slice %29 {offsets = [0, 40], sizes = [16, 8], strides = [1, 1]} : vector<16x64xf32> to vector<16x8xf32>
    %463 = vector.extract_strided_slice %30 {offsets = [0, 0], sizes = [16, 8], strides = [1, 1]} : vector<16x64xf32> to vector<16x8xf32>
    %464 = arith.mulf %462, %463 : vector<16x8xf32>
    %cst_76 = arith.constant dense<0.000000e+00> : vector<16xf32>
    %465 = vector.multi_reduction <add>, %464, %cst_76 [1] : vector<16x8xf32> to vector<16xf32>
    %466 = vector.shape_cast %465 : vector<16xf32> to vector<16x1xf32>
    %467 = vector.extract_strided_slice %30 {offsets = [0, 8], sizes = [16, 8], strides = [1, 1]} : vector<16x64xf32> to vector<16x8xf32>
    %468 = arith.mulf %462, %467 : vector<16x8xf32>
    %cst_77 = arith.constant dense<0.000000e+00> : vector<16xf32>
    %469 = vector.multi_reduction <add>, %468, %cst_77 [1] : vector<16x8xf32> to vector<16xf32>
    %470 = vector.shape_cast %469 : vector<16xf32> to vector<16x1xf32>
    %471 = vector.extract_strided_slice %30 {offsets = [0, 16], sizes = [16, 8], strides = [1, 1]} : vector<16x64xf32> to vector<16x8xf32>
    %472 = arith.mulf %462, %471 : vector<16x8xf32>
    %cst_78 = arith.constant dense<0.000000e+00> : vector<16xf32>
    %473 = vector.multi_reduction <add>, %472, %cst_78 [1] : vector<16x8xf32> to vector<16xf32>
    %474 = vector.shape_cast %473 : vector<16xf32> to vector<16x1xf32>
    %475 = vector.extract_strided_slice %30 {offsets = [0, 24], sizes = [16, 8], strides = [1, 1]} : vector<16x64xf32> to vector<16x8xf32>
    %476 = arith.mulf %462, %475 : vector<16x8xf32>
    %cst_79 = arith.constant dense<0.000000e+00> : vector<16xf32>
    %477 = vector.multi_reduction <add>, %476, %cst_79 [1] : vector<16x8xf32> to vector<16xf32>
    %478 = vector.shape_cast %477 : vector<16xf32> to vector<16x1xf32>
    %479 = vector.extract_strided_slice %30 {offsets = [0, 32], sizes = [16, 8], strides = [1, 1]} : vector<16x64xf32> to vector<16x8xf32>
    %480 = arith.mulf %462, %479 : vector<16x8xf32>
    %cst_80 = arith.constant dense<0.000000e+00> : vector<16xf32>
    %481 = vector.multi_reduction <add>, %480, %cst_80 [1] : vector<16x8xf32> to vector<16xf32>
    %482 = vector.shape_cast %481 : vector<16xf32> to vector<16x1xf32>
    %483 = vector.extract_strided_slice %30 {offsets = [0, 40], sizes = [16, 8], strides = [1, 1]} : vector<16x64xf32> to vector<16x8xf32>
    %484 = arith.mulf %462, %483 : vector<16x8xf32>
    %cst_81 = arith.constant dense<0.000000e+00> : vector<16xf32>
    %485 = vector.multi_reduction <add>, %484, %cst_81 [1] : vector<16x8xf32> to vector<16xf32>
    %486 = vector.shape_cast %485 : vector<16xf32> to vector<16x1xf32>
    %487 = vector.extract_strided_slice %30 {offsets = [0, 48], sizes = [16, 8], strides = [1, 1]} : vector<16x64xf32> to vector<16x8xf32>
    %488 = arith.mulf %462, %487 : vector<16x8xf32>
    %cst_82 = arith.constant dense<0.000000e+00> : vector<16xf32>
    %489 = vector.multi_reduction <add>, %488, %cst_82 [1] : vector<16x8xf32> to vector<16xf32>
    %490 = vector.shape_cast %489 : vector<16xf32> to vector<16x1xf32>
    %491 = vector.extract_strided_slice %30 {offsets = [0, 56], sizes = [16, 8], strides = [1, 1]} : vector<16x64xf32> to vector<16x8xf32>
    %492 = arith.mulf %462, %491 : vector<16x8xf32>
    %cst_83 = arith.constant dense<0.000000e+00> : vector<16xf32>
    %493 = vector.multi_reduction <add>, %492, %cst_83 [1] : vector<16x8xf32> to vector<16xf32>
    %494 = vector.shape_cast %493 : vector<16xf32> to vector<16x1xf32>
    %495 = tpu.concatenate %466, %470, %474, %478, %482, %486, %490, %494 in 1 : vector<16x1xf32>, vector<16x1xf32>, vector<16x1xf32>, vector<16x1xf32>, vector<16x1xf32>, vector<16x1xf32>, vector<16x1xf32>, vector<16x1xf32> -> vector<16x8xf32>
    %cst_84 = arith.constant 0.353553385 : f32
    %496 = vector.broadcast %cst_84 : f32 to vector<16x8xf32>
    %497 = arith.mulf %495, %496 : vector<16x8xf32>
    %cst_85 = arith.constant dense<0xFF800000> : vector<16xf32>
    %498 = vector.multi_reduction <maximumf>, %497, %cst_85 [1] : vector<16x8xf32> to vector<16xf32>
    %499 = vector.shape_cast %498 : vector<16xf32> to vector<16x1xf32>
    %500 = vector.broadcast %499 : vector<16x1xf32> to vector<16x8xf32>
    %501 = arith.subf %497, %500 : vector<16x8xf32>
    %502 = math.exp %501 : vector<16x8xf32>
    %cst_86 = arith.constant dense<0.000000e+00> : vector<16xf32>
    %503 = vector.multi_reduction <add>, %502, %cst_86 [1] : vector<16x8xf32> to vector<16xf32>
    %504 = vector.shape_cast %503 : vector<16xf32> to vector<16x1xf32>
    %505 = tpu.reciprocal %504 {approx = true} : vector<16x1xf32> -> vector<16x1xf32>
    %506 = vector.broadcast %505 : vector<16x1xf32> to vector<16x8xf32>
    %507 = arith.mulf %502, %506 : vector<16x8xf32>
    %508 = vector.extract_strided_slice %507 {offsets = [0, 0], sizes = [16, 1], strides = [1, 1]} : vector<16x8xf32> to vector<16x1xf32>
    %509 = vector.extract_strided_slice %31 {offsets = [0, 0], sizes = [16, 8], strides = [1, 1]} : vector<16x64xf32> to vector<16x8xf32>
    %510 = vector.broadcast %508 : vector<16x1xf32> to vector<16x8xf32>
    %511 = arith.mulf %510, %509 : vector<16x8xf32>
    %512 = vector.extract_strided_slice %507 {offsets = [0, 1], sizes = [16, 1], strides = [1, 1]} : vector<16x8xf32> to vector<16x1xf32>
    %513 = vector.extract_strided_slice %31 {offsets = [0, 8], sizes = [16, 8], strides = [1, 1]} : vector<16x64xf32> to vector<16x8xf32>
    %514 = vector.broadcast %512 : vector<16x1xf32> to vector<16x8xf32>
    %515 = arith.mulf %514, %513 : vector<16x8xf32>
    %516 = arith.addf %511, %515 : vector<16x8xf32>
    %517 = vector.extract_strided_slice %507 {offsets = [0, 2], sizes = [16, 1], strides = [1, 1]} : vector<16x8xf32> to vector<16x1xf32>
    %518 = vector.extract_strided_slice %31 {offsets = [0, 16], sizes = [16, 8], strides = [1, 1]} : vector<16x64xf32> to vector<16x8xf32>
    %519 = vector.broadcast %517 : vector<16x1xf32> to vector<16x8xf32>
    %520 = arith.mulf %519, %518 : vector<16x8xf32>
    %521 = arith.addf %516, %520 : vector<16x8xf32>
    %522 = vector.extract_strided_slice %507 {offsets = [0, 3], sizes = [16, 1], strides = [1, 1]} : vector<16x8xf32> to vector<16x1xf32>
    %523 = vector.extract_strided_slice %31 {offsets = [0, 24], sizes = [16, 8], strides = [1, 1]} : vector<16x64xf32> to vector<16x8xf32>
    %524 = vector.broadcast %522 : vector<16x1xf32> to vector<16x8xf32>
    %525 = arith.mulf %524, %523 : vector<16x8xf32>
    %526 = arith.addf %521, %525 : vector<16x8xf32>
    %527 = vector.extract_strided_slice %507 {offsets = [0, 4], sizes = [16, 1], strides = [1, 1]} : vector<16x8xf32> to vector<16x1xf32>
    %528 = vector.extract_strided_slice %31 {offsets = [0, 32], sizes = [16, 8], strides = [1, 1]} : vector<16x64xf32> to vector<16x8xf32>
    %529 = vector.broadcast %527 : vector<16x1xf32> to vector<16x8xf32>
    %530 = arith.mulf %529, %528 : vector<16x8xf32>
    %531 = arith.addf %526, %530 : vector<16x8xf32>
    %532 = vector.extract_strided_slice %507 {offsets = [0, 5], sizes = [16, 1], strides = [1, 1]} : vector<16x8xf32> to vector<16x1xf32>
    %533 = vector.extract_strided_slice %31 {offsets = [0, 40], sizes = [16, 8], strides = [1, 1]} : vector<16x64xf32> to vector<16x8xf32>
    %534 = vector.broadcast %532 : vector<16x1xf32> to vector<16x8xf32>
    %535 = arith.mulf %534, %533 : vector<16x8xf32>
    %536 = arith.addf %531, %535 : vector<16x8xf32>
    %537 = vector.extract_strided_slice %507 {offsets = [0, 6], sizes = [16, 1], strides = [1, 1]} : vector<16x8xf32> to vector<16x1xf32>
    %538 = vector.extract_strided_slice %31 {offsets = [0, 48], sizes = [16, 8], strides = [1, 1]} : vector<16x64xf32> to vector<16x8xf32>
    %539 = vector.broadcast %537 : vector<16x1xf32> to vector<16x8xf32>
    %540 = arith.mulf %539, %538 : vector<16x8xf32>
    %541 = arith.addf %536, %540 : vector<16x8xf32>
    %542 = vector.extract_strided_slice %507 {offsets = [0, 7], sizes = [16, 1], strides = [1, 1]} : vector<16x8xf32> to vector<16x1xf32>
    %543 = vector.extract_strided_slice %31 {offsets = [0, 56], sizes = [16, 8], strides = [1, 1]} : vector<16x64xf32> to vector<16x8xf32>
    %544 = vector.broadcast %542 : vector<16x1xf32> to vector<16x8xf32>
    %545 = arith.mulf %544, %543 : vector<16x8xf32>
    %546 = arith.addf %541, %545 : vector<16x8xf32>
    %c80 = arith.constant 80 : index
    %c0_87 = arith.constant 0 : index
    %547 = vector.load %arg15[%c80, %c0_87] : memref<128x8xf32, #tpu.memory_space<vmem>>, vector<16x8xf32>
    tpu.vector_store %arg15[%c80, %c0_87], %546 {strides = array<i32>} : memref<128x8xf32, #tpu.memory_space<vmem>>, vector<16x8xf32>,
    %548 = vector.extract_strided_slice %29 {offsets = [0, 48], sizes = [16, 8], strides = [1, 1]} : vector<16x64xf32> to vector<16x8xf32>
    %549 = vector.extract_strided_slice %30 {offsets = [0, 0], sizes = [16, 8], strides = [1, 1]} : vector<16x64xf32> to vector<16x8xf32>
    %550 = arith.mulf %548, %549 : vector<16x8xf32>
    %cst_88 = arith.constant dense<0.000000e+00> : vector<16xf32>
    %551 = vector.multi_reduction <add>, %550, %cst_88 [1] : vector<16x8xf32> to vector<16xf32>
    %552 = vector.shape_cast %551 : vector<16xf32> to vector<16x1xf32>
    %553 = vector.extract_strided_slice %30 {offsets = [0, 8], sizes = [16, 8], strides = [1, 1]} : vector<16x64xf32> to vector<16x8xf32>
    %554 = arith.mulf %548, %553 : vector<16x8xf32>
    %cst_89 = arith.constant dense<0.000000e+00> : vector<16xf32>
    %555 = vector.multi_reduction <add>, %554, %cst_89 [1] : vector<16x8xf32> to vector<16xf32>
    %556 = vector.shape_cast %555 : vector<16xf32> to vector<16x1xf32>
    %557 = vector.extract_strided_slice %30 {offsets = [0, 16], sizes = [16, 8], strides = [1, 1]} : vector<16x64xf32> to vector<16x8xf32>
    %558 = arith.mulf %548, %557 : vector<16x8xf32>
    %cst_90 = arith.constant dense<0.000000e+00> : vector<16xf32>
    %559 = vector.multi_reduction <add>, %558, %cst_90 [1] : vector<16x8xf32> to vector<16xf32>
    %560 = vector.shape_cast %559 : vector<16xf32> to vector<16x1xf32>
    %561 = vector.extract_strided_slice %30 {offsets = [0, 24], sizes = [16, 8], strides = [1, 1]} : vector<16x64xf32> to vector<16x8xf32>
    %562 = arith.mulf %548, %561 : vector<16x8xf32>
    %cst_91 = arith.constant dense<0.000000e+00> : vector<16xf32>
    %563 = vector.multi_reduction <add>, %562, %cst_91 [1] : vector<16x8xf32> to vector<16xf32>
    %564 = vector.shape_cast %563 : vector<16xf32> to vector<16x1xf32>
    %565 = vector.extract_strided_slice %30 {offsets = [0, 32], sizes = [16, 8], strides = [1, 1]} : vector<16x64xf32> to vector<16x8xf32>
    %566 = arith.mulf %548, %565 : vector<16x8xf32>
    %cst_92 = arith.constant dense<0.000000e+00> : vector<16xf32>
    %567 = vector.multi_reduction <add>, %566, %cst_92 [1] : vector<16x8xf32> to vector<16xf32>
    %568 = vector.shape_cast %567 : vector<16xf32> to vector<16x1xf32>
    %569 = vector.extract_strided_slice %30 {offsets = [0, 40], sizes = [16, 8], strides = [1, 1]} : vector<16x64xf32> to vector<16x8xf32>
    %570 = arith.mulf %548, %569 : vector<16x8xf32>
    %cst_93 = arith.constant dense<0.000000e+00> : vector<16xf32>
    %571 = vector.multi_reduction <add>, %570, %cst_93 [1] : vector<16x8xf32> to vector<16xf32>
    %572 = vector.shape_cast %571 : vector<16xf32> to vector<16x1xf32>
    %573 = vector.extract_strided_slice %30 {offsets = [0, 48], sizes = [16, 8], strides = [1, 1]} : vector<16x64xf32> to vector<16x8xf32>
    %574 = arith.mulf %548, %573 : vector<16x8xf32>
    %cst_94 = arith.constant dense<0.000000e+00> : vector<16xf32>
    %575 = vector.multi_reduction <add>, %574, %cst_94 [1] : vector<16x8xf32> to vector<16xf32>
    %576 = vector.shape_cast %575 : vector<16xf32> to vector<16x1xf32>
    %577 = vector.extract_strided_slice %30 {offsets = [0, 56], sizes = [16, 8], strides = [1, 1]} : vector<16x64xf32> to vector<16x8xf32>
    %578 = arith.mulf %548, %577 : vector<16x8xf32>
    %cst_95 = arith.constant dense<0.000000e+00> : vector<16xf32>
    %579 = vector.multi_reduction <add>, %578, %cst_95 [1] : vector<16x8xf32> to vector<16xf32>
    %580 = vector.shape_cast %579 : vector<16xf32> to vector<16x1xf32>
    %581 = tpu.concatenate %552, %556, %560, %564, %568, %572, %576, %580 in 1 : vector<16x1xf32>, vector<16x1xf32>, vector<16x1xf32>, vector<16x1xf32>, vector<16x1xf32>, vector<16x1xf32>, vector<16x1xf32>, vector<16x1xf32> -> vector<16x8xf32>
    %cst_96 = arith.constant 0.353553385 : f32
    %582 = vector.broadcast %cst_96 : f32 to vector<16x8xf32>
    %583 = arith.mulf %581, %582 : vector<16x8xf32>
    %cst_97 = arith.constant dense<0xFF800000> : vector<16xf32>
    %584 = vector.multi_reduction <maximumf>, %583, %cst_97 [1] : vector<16x8xf32> to vector<16xf32>
    %585 = vector.shape_cast %584 : vector<16xf32> to vector<16x1xf32>
    %586 = vector.broadcast %585 : vector<16x1xf32> to vector<16x8xf32>
    %587 = arith.subf %583, %586 : vector<16x8xf32>
    %588 = math.exp %587 : vector<16x8xf32>
    %cst_98 = arith.constant dense<0.000000e+00> : vector<16xf32>
    %589 = vector.multi_reduction <add>, %588, %cst_98 [1] : vector<16x8xf32> to vector<16xf32>
    %590 = vector.shape_cast %589 : vector<16xf32> to vector<16x1xf32>
    %591 = tpu.reciprocal %590 {approx = true} : vector<16x1xf32> -> vector<16x1xf32>
    %592 = vector.broadcast %591 : vector<16x1xf32> to vector<16x8xf32>
    %593 = arith.mulf %588, %592 : vector<16x8xf32>
    %594 = vector.extract_strided_slice %593 {offsets = [0, 0], sizes = [16, 1], strides = [1, 1]} : vector<16x8xf32> to vector<16x1xf32>
    %595 = vector.extract_strided_slice %31 {offsets = [0, 0], sizes = [16, 8], strides = [1, 1]} : vector<16x64xf32> to vector<16x8xf32>
    %596 = vector.broadcast %594 : vector<16x1xf32> to vector<16x8xf32>
    %597 = arith.mulf %596, %595 : vector<16x8xf32>
    %598 = vector.extract_strided_slice %593 {offsets = [0, 1], sizes = [16, 1], strides = [1, 1]} : vector<16x8xf32> to vector<16x1xf32>
    %599 = vector.extract_strided_slice %31 {offsets = [0, 8], sizes = [16, 8], strides = [1, 1]} : vector<16x64xf32> to vector<16x8xf32>
    %600 = vector.broadcast %598 : vector<16x1xf32> to vector<16x8xf32>
    %601 = arith.mulf %600, %599 : vector<16x8xf32>
    %602 = arith.addf %597, %601 : vector<16x8xf32>
    %603 = vector.extract_strided_slice %593 {offsets = [0, 2], sizes = [16, 1], strides = [1, 1]} : vector<16x8xf32> to vector<16x1xf32>
    %604 = vector.extract_strided_slice %31 {offsets = [0, 16], sizes = [16, 8], strides = [1, 1]} : vector<16x64xf32> to vector<16x8xf32>
    %605 = vector.broadcast %603 : vector<16x1xf32> to vector<16x8xf32>
    %606 = arith.mulf %605, %604 : vector<16x8xf32>
    %607 = arith.addf %602, %606 : vector<16x8xf32>
    %608 = vector.extract_strided_slice %593 {offsets = [0, 3], sizes = [16, 1], strides = [1, 1]} : vector<16x8xf32> to vector<16x1xf32>
    %609 = vector.extract_strided_slice %31 {offsets = [0, 24], sizes = [16, 8], strides = [1, 1]} : vector<16x64xf32> to vector<16x8xf32>
    %610 = vector.broadcast %608 : vector<16x1xf32> to vector<16x8xf32>
    %611 = arith.mulf %610, %609 : vector<16x8xf32>
    %612 = arith.addf %607, %611 : vector<16x8xf32>
    %613 = vector.extract_strided_slice %593 {offsets = [0, 4], sizes = [16, 1], strides = [1, 1]} : vector<16x8xf32> to vector<16x1xf32>
    %614 = vector.extract_strided_slice %31 {offsets = [0, 32], sizes = [16, 8], strides = [1, 1]} : vector<16x64xf32> to vector<16x8xf32>
    %615 = vector.broadcast %613 : vector<16x1xf32> to vector<16x8xf32>
    %616 = arith.mulf %615, %614 : vector<16x8xf32>
    %617 = arith.addf %612, %616 : vector<16x8xf32>
    %618 = vector.extract_strided_slice %593 {offsets = [0, 5], sizes = [16, 1], strides = [1, 1]} : vector<16x8xf32> to vector<16x1xf32>
    %619 = vector.extract_strided_slice %31 {offsets = [0, 40], sizes = [16, 8], strides = [1, 1]} : vector<16x64xf32> to vector<16x8xf32>
    %620 = vector.broadcast %618 : vector<16x1xf32> to vector<16x8xf32>
    %621 = arith.mulf %620, %619 : vector<16x8xf32>
    %622 = arith.addf %617, %621 : vector<16x8xf32>
    %623 = vector.extract_strided_slice %593 {offsets = [0, 6], sizes = [16, 1], strides = [1, 1]} : vector<16x8xf32> to vector<16x1xf32>
    %624 = vector.extract_strided_slice %31 {offsets = [0, 48], sizes = [16, 8], strides = [1, 1]} : vector<16x64xf32> to vector<16x8xf32>
    %625 = vector.broadcast %623 : vector<16x1xf32> to vector<16x8xf32>
    %626 = arith.mulf %625, %624 : vector<16x8xf32>
    %627 = arith.addf %622, %626 : vector<16x8xf32>
    %628 = vector.extract_strided_slice %593 {offsets = [0, 7], sizes = [16, 1], strides = [1, 1]} : vector<16x8xf32> to vector<16x1xf32>
    %629 = vector.extract_strided_slice %31 {offsets = [0, 56], sizes = [16, 8], strides = [1, 1]} : vector<16x64xf32> to vector<16x8xf32>
    %630 = vector.broadcast %628 : vector<16x1xf32> to vector<16x8xf32>
    %631 = arith.mulf %630, %629 : vector<16x8xf32>
    %632 = arith.addf %627, %631 : vector<16x8xf32>
    %c96 = arith.constant 96 : index
    %c0_99 = arith.constant 0 : index
    %633 = vector.load %arg15[%c96, %c0_99] : memref<128x8xf32, #tpu.memory_space<vmem>>, vector<16x8xf32>
    tpu.vector_store %arg15[%c96, %c0_99], %632 {strides = array<i32>} : memref<128x8xf32, #tpu.memory_space<vmem>>, vector<16x8xf32>,
    %634 = vector.extract_strided_slice %29 {offsets = [0, 56], sizes = [16, 8], strides = [1, 1]} : vector<16x64xf32> to vector<16x8xf32>
    %635 = vector.extract_strided_slice %30 {offsets = [0, 0], sizes = [16, 8], strides = [1, 1]} : vector<16x64xf32> to vector<16x8xf32>
    %636 = arith.mulf %634, %635 : vector<16x8xf32>
    %cst_100 = arith.constant dense<0.000000e+00> : vector<16xf32>
    %637 = vector.multi_reduction <add>, %636, %cst_100 [1] : vector<16x8xf32> to vector<16xf32>
    %638 = vector.shape_cast %637 : vector<16xf32> to vector<16x1xf32>
    %639 = vector.extract_strided_slice %30 {offsets = [0, 8], sizes = [16, 8], strides = [1, 1]} : vector<16x64xf32> to vector<16x8xf32>
    %640 = arith.mulf %634, %639 : vector<16x8xf32>
    %cst_101 = arith.constant dense<0.000000e+00> : vector<16xf32>
    %641 = vector.multi_reduction <add>, %640, %cst_101 [1] : vector<16x8xf32> to vector<16xf32>
    %642 = vector.shape_cast %641 : vector<16xf32> to vector<16x1xf32>
    %643 = vector.extract_strided_slice %30 {offsets = [0, 16], sizes = [16, 8], strides = [1, 1]} : vector<16x64xf32> to vector<16x8xf32>
    %644 = arith.mulf %634, %643 : vector<16x8xf32>
    %cst_102 = arith.constant dense<0.000000e+00> : vector<16xf32>
    %645 = vector.multi_reduction <add>, %644, %cst_102 [1] : vector<16x8xf32> to vector<16xf32>
    %646 = vector.shape_cast %645 : vector<16xf32> to vector<16x1xf32>
    %647 = vector.extract_strided_slice %30 {offsets = [0, 24], sizes = [16, 8], strides = [1, 1]} : vector<16x64xf32> to vector<16x8xf32>
    %648 = arith.mulf %634, %647 : vector<16x8xf32>
    %cst_103 = arith.constant dense<0.000000e+00> : vector<16xf32>
    %649 = vector.multi_reduction <add>, %648, %cst_103 [1] : vector<16x8xf32> to vector<16xf32>
    %650 = vector.shape_cast %649 : vector<16xf32> to vector<16x1xf32>
    %651 = vector.extract_strided_slice %30 {offsets = [0, 32], sizes = [16, 8], strides = [1, 1]} : vector<16x64xf32> to vector<16x8xf32>
    %652 = arith.mulf %634, %651 : vector<16x8xf32>
    %cst_104 = arith.constant dense<0.000000e+00> : vector<16xf32>
    %653 = vector.multi_reduction <add>, %652, %cst_104 [1] : vector<16x8xf32> to vector<16xf32>
    %654 = vector.shape_cast %653 : vector<16xf32> to vector<16x1xf32>
    %655 = vector.extract_strided_slice %30 {offsets = [0, 40], sizes = [16, 8], strides = [1, 1]} : vector<16x64xf32> to vector<16x8xf32>
    %656 = arith.mulf %634, %655 : vector<16x8xf32>
    %cst_105 = arith.constant dense<0.000000e+00> : vector<16xf32>
    %657 = vector.multi_reduction <add>, %656, %cst_105 [1] : vector<16x8xf32> to vector<16xf32>
    %658 = vector.shape_cast %657 : vector<16xf32> to vector<16x1xf32>
    %659 = vector.extract_strided_slice %30 {offsets = [0, 48], sizes = [16, 8], strides = [1, 1]} : vector<16x64xf32> to vector<16x8xf32>
    %660 = arith.mulf %634, %659 : vector<16x8xf32>
    %cst_106 = arith.constant dense<0.000000e+00> : vector<16xf32>
    %661 = vector.multi_reduction <add>, %660, %cst_106 [1] : vector<16x8xf32> to vector<16xf32>
    %662 = vector.shape_cast %661 : vector<16xf32> to vector<16x1xf32>
    %663 = vector.extract_strided_slice %30 {offsets = [0, 56], sizes = [16, 8], strides = [1, 1]} : vector<16x64xf32> to vector<16x8xf32>
    %664 = arith.mulf %634, %663 : vector<16x8xf32>
    %cst_107 = arith.constant dense<0.000000e+00> : vector<16xf32>
    %665 = vector.multi_reduction <add>, %664, %cst_107 [1] : vector<16x8xf32> to vector<16xf32>
    %666 = vector.shape_cast %665 : vector<16xf32> to vector<16x1xf32>
    %667 = tpu.concatenate %638, %642, %646, %650, %654, %658, %662, %666 in 1 : vector<16x1xf32>, vector<16x1xf32>, vector<16x1xf32>, vector<16x1xf32>, vector<16x1xf32>, vector<16x1xf32>, vector<16x1xf32>, vector<16x1xf32> -> vector<16x8xf32>
    %cst_108 = arith.constant 0.353553385 : f32
    %668 = vector.broadcast %cst_108 : f32 to vector<16x8xf32>
    %669 = arith.mulf %667, %668 : vector<16x8xf32>
    %cst_109 = arith.constant dense<0xFF800000> : vector<16xf32>
    %670 = vector.multi_reduction <maximumf>, %669, %cst_109 [1] : vector<16x8xf32> to vector<16xf32>
    %671 = vector.shape_cast %670 : vector<16xf32> to vector<16x1xf32>
    %672 = vector.broadcast %671 : vector<16x1xf32> to vector<16x8xf32>
    %673 = arith.subf %669, %672 : vector<16x8xf32>
    %674 = math.exp %673 : vector<16x8xf32>
    %cst_110 = arith.constant dense<0.000000e+00> : vector<16xf32>
    %675 = vector.multi_reduction <add>, %674, %cst_110 [1] : vector<16x8xf32> to vector<16xf32>
    %676 = vector.shape_cast %675 : vector<16xf32> to vector<16x1xf32>
    %677 = tpu.reciprocal %676 {approx = true} : vector<16x1xf32> -> vector<16x1xf32>
    %678 = vector.broadcast %677 : vector<16x1xf32> to vector<16x8xf32>
    %679 = arith.mulf %674, %678 : vector<16x8xf32>
    %680 = vector.extract_strided_slice %679 {offsets = [0, 0], sizes = [16, 1], strides = [1, 1]} : vector<16x8xf32> to vector<16x1xf32>
    %681 = vector.extract_strided_slice %31 {offsets = [0, 0], sizes = [16, 8], strides = [1, 1]} : vector<16x64xf32> to vector<16x8xf32>
    %682 = vector.broadcast %680 : vector<16x1xf32> to vector<16x8xf32>
    %683 = arith.mulf %682, %681 : vector<16x8xf32>
    %684 = vector.extract_strided_slice %679 {offsets = [0, 1], sizes = [16, 1], strides = [1, 1]} : vector<16x8xf32> to vector<16x1xf32>
    %685 = vector.extract_strided_slice %31 {offsets = [0, 8], sizes = [16, 8], strides = [1, 1]} : vector<16x64xf32> to vector<16x8xf32>
    %686 = vector.broadcast %684 : vector<16x1xf32> to vector<16x8xf32>
    %687 = arith.mulf %686, %685 : vector<16x8xf32>
    %688 = arith.addf %683, %687 : vector<16x8xf32>
    %689 = vector.extract_strided_slice %679 {offsets = [0, 2], sizes = [16, 1], strides = [1, 1]} : vector<16x8xf32> to vector<16x1xf32>
    %690 = vector.extract_strided_slice %31 {offsets = [0, 16], sizes = [16, 8], strides = [1, 1]} : vector<16x64xf32> to vector<16x8xf32>
    %691 = vector.broadcast %689 : vector<16x1xf32> to vector<16x8xf32>
    %692 = arith.mulf %691, %690 : vector<16x8xf32>
    %693 = arith.addf %688, %692 : vector<16x8xf32>
    %694 = vector.extract_strided_slice %679 {offsets = [0, 3], sizes = [16, 1], strides = [1, 1]} : vector<16x8xf32> to vector<16x1xf32>
    %695 = vector.extract_strided_slice %31 {offsets = [0, 24], sizes = [16, 8], strides = [1, 1]} : vector<16x64xf32> to vector<16x8xf32>
    %696 = vector.broadcast %694 : vector<16x1xf32> to vector<16x8xf32>
    %697 = arith.mulf %696, %695 : vector<16x8xf32>
    %698 = arith.addf %693, %697 : vector<16x8xf32>
    %699 = vector.extract_strided_slice %679 {offsets = [0, 4], sizes = [16, 1], strides = [1, 1]} : vector<16x8xf32> to vector<16x1xf32>
    %700 = vector.extract_strided_slice %31 {offsets = [0, 32], sizes = [16, 8], strides = [1, 1]} : vector<16x64xf32> to vector<16x8xf32>
    %701 = vector.broadcast %699 : vector<16x1xf32> to vector<16x8xf32>
    %702 = arith.mulf %701, %700 : vector<16x8xf32>
    %703 = arith.addf %698, %702 : vector<16x8xf32>
    %704 = vector.extract_strided_slice %679 {offsets = [0, 5], sizes = [16, 1], strides = [1, 1]} : vector<16x8xf32> to vector<16x1xf32>
    %705 = vector.extract_strided_slice %31 {offsets = [0, 40], sizes = [16, 8], strides = [1, 1]} : vector<16x64xf32> to vector<16x8xf32>
    %706 = vector.broadcast %704 : vector<16x1xf32> to vector<16x8xf32>
    %707 = arith.mulf %706, %705 : vector<16x8xf32>
    %708 = arith.addf %703, %707 : vector<16x8xf32>
    %709 = vector.extract_strided_slice %679 {offsets = [0, 6], sizes = [16, 1], strides = [1, 1]} : vector<16x8xf32> to vector<16x1xf32>
    %710 = vector.extract_strided_slice %31 {offsets = [0, 48], sizes = [16, 8], strides = [1, 1]} : vector<16x64xf32> to vector<16x8xf32>
    %711 = vector.broadcast %709 : vector<16x1xf32> to vector<16x8xf32>
    %712 = arith.mulf %711, %710 : vector<16x8xf32>
    %713 = arith.addf %708, %712 : vector<16x8xf32>
    %714 = vector.extract_strided_slice %679 {offsets = [0, 7], sizes = [16, 1], strides = [1, 1]} : vector<16x8xf32> to vector<16x1xf32>
    %715 = vector.extract_strided_slice %31 {offsets = [0, 56], sizes = [16, 8], strides = [1, 1]} : vector<16x64xf32> to vector<16x8xf32>
    %716 = vector.broadcast %714 : vector<16x1xf32> to vector<16x8xf32>
    %717 = arith.mulf %716, %715 : vector<16x8xf32>
    %718 = arith.addf %713, %717 : vector<16x8xf32>
    %c112 = arith.constant 112 : index
    %c0_111 = arith.constant 0 : index
    %719 = vector.load %arg15[%c112, %c0_111] : memref<128x8xf32, #tpu.memory_space<vmem>>, vector<16x8xf32>
    tpu.vector_store %arg15[%c112, %c0_111], %718 {strides = array<i32>} : memref<128x8xf32, #tpu.memory_space<vmem>>, vector<16x8xf32>,
    %c0_112 = arith.constant 0 : index
    %c0_113 = arith.constant 0 : index
    %720 = tpu.strided_load %arg15[%c0_112, %c0_113] {strides = array<i32: 8, 1>} : memref<128x8xf32, #tpu.memory_space<vmem>>, vector<16x8xf32>
    %c1 = arith.constant 1 : index
    %c0_114 = arith.constant 0 : index
    %721 = tpu.strided_load %arg15[%c1, %c0_114] {strides = array<i32: 8, 1>} : memref<128x8xf32, #tpu.memory_space<vmem>>, vector<16x8xf32>
    %c2 = arith.constant 2 : index
    %c0_115 = arith.constant 0 : index
    %722 = tpu.strided_load %arg15[%c2, %c0_115] {strides = array<i32: 8, 1>} : memref<128x8xf32, #tpu.memory_space<vmem>>, vector<16x8xf32>
    %c3 = arith.constant 3 : index
    %c0_116 = arith.constant 0 : index
    %723 = tpu.strided_load %arg15[%c3, %c0_116] {strides = array<i32: 8, 1>} : memref<128x8xf32, #tpu.memory_space<vmem>>, vector<16x8xf32>
    %c4 = arith.constant 4 : index
    %c0_117 = arith.constant 0 : index
    %724 = tpu.strided_load %arg15[%c4, %c0_117] {strides = array<i32: 8, 1>} : memref<128x8xf32, #tpu.memory_space<vmem>>, vector<16x8xf32>
    %c5 = arith.constant 5 : index
    %c0_118 = arith.constant 0 : index
    %725 = tpu.strided_load %arg15[%c5, %c0_118] {strides = array<i32: 8, 1>} : memref<128x8xf32, #tpu.memory_space<vmem>>, vector<16x8xf32>
    %c6 = arith.constant 6 : index
    %c0_119 = arith.constant 0 : index
    %726 = tpu.strided_load %arg15[%c6, %c0_119] {strides = array<i32: 8, 1>} : memref<128x8xf32, #tpu.memory_space<vmem>>, vector<16x8xf32>
    %c7 = arith.constant 7 : index
    %c0_120 = arith.constant 0 : index
    %727 = tpu.strided_load %arg15[%c7, %c0_120] {strides = array<i32: 8, 1>} : memref<128x8xf32, #tpu.memory_space<vmem>>, vector<16x8xf32>
    %728 = tpu.concatenate %720, %721, %722, %723, %724, %725, %726, %727 in 1 : vector<16x8xf32>, vector<16x8xf32>, vector<16x8xf32>, vector<16x8xf32>, vector<16x8xf32>, vector<16x8xf32>, vector<16x8xf32>, vector<16x8xf32> -> vector<16x64xf32>
    %c0_121 = arith.constant 0 : index
    %c0_122 = arith.constant 0 : index
    %729 = vector.load %arg6[%c0_121, %c0_122] : memref<64x64xf32, #tpu.memory_space<vmem>>, vector<64x64xf32>
    %cst_123 = arith.constant dense<0.000000e+00> : vector<16x64xf32>
    %730 = tpu.matmul %728, %729, %cst_123 {dimension_numbers = #tpu.dot_dimension_numbers<[1], [0], [0], [1], [0, 0, 1, 1], [], []>} : vector<16x64xf32>, vector<64x64xf32>, vector<16x64xf32> -> vector<16x64xf32>
    %731 = arith.addf %1, %730 : vector<16x64xf32>
    %c0_124 = arith.constant 0 : index
    %c0_125 = arith.constant 0 : index
    %732 = vector.load %arg7[%c0_124, %c0_125] : memref<1x64xf32, #tpu.memory_space<vmem>>, vector<1x64xf32>
    %733 = vector.broadcast %732 : vector<1x64xf32> to vector<16x64xf32>
    %734 = arith.addf %731, %733 : vector<16x64xf32>
    %c0_126 = arith.constant 0 : index
    %c0_127 = arith.constant 0 : index
    %735 = vector.load %arg8[%c0_126, %c0_127] : memref<1x64xf32, #tpu.memory_space<vmem>>, vector<1x64xf32>
    %c0_128 = arith.constant 0 : index
    %c0_129 = arith.constant 0 : index
    %736 = vector.load %arg9[%c0_128, %c0_129] : memref<1x64xf32, #tpu.memory_space<vmem>>, vector<1x64xf32>
    %cst_130 = arith.constant dense<0.000000e+00> : vector<16xf32>
    %737 = vector.multi_reduction <add>, %734, %cst_130 [1] : vector<16x64xf32> to vector<16xf32>
    %738 = vector.shape_cast %737 : vector<16xf32> to vector<16x1xf32>
    %cst_131 = arith.constant 6.400000e+01 : f32
    %739 = vector.broadcast %cst_131 : f32 to vector<16x1xf32>
    %740 = arith.divf %738, %739 : vector<16x1xf32>
    %741 = vector.broadcast %740 : vector<16x1xf32> to vector<16x64xf32>
    %742 = arith.subf %734, %741 : vector<16x64xf32>
    %743 = arith.mulf %742, %742 : vector<16x64xf32>
    %cst_132 = arith.constant dense<0.000000e+00> : vector<16xf32>
    %744 = vector.multi_reduction <add>, %743, %cst_132 [1] : vector<16x64xf32> to vector<16xf32>
    %745 = vector.shape_cast %744 : vector<16xf32> to vector<16x1xf32>
    %cst_133 = arith.constant 6.400000e+01 : f32
    %746 = vector.broadcast %cst_133 : f32 to vector<16x1xf32>
    %747 = arith.divf %745, %746 : vector<16x1xf32>
    %cst_134 = arith.constant 9.99999974E-6 : f32
    %748 = vector.broadcast %cst_134 : f32 to vector<16x1xf32>
    %749 = arith.addf %747, %748 : vector<16x1xf32>
    %750 = math.rsqrt %749 : vector<16x1xf32>
    %751 = vector.broadcast %750 : vector<16x1xf32> to vector<16x64xf32>
    %752 = arith.mulf %742, %751 : vector<16x64xf32>
    %753 = vector.broadcast %735 : vector<1x64xf32> to vector<16x64xf32>
    %754 = arith.mulf %752, %753 : vector<16x64xf32>
    %755 = vector.broadcast %736 : vector<1x64xf32> to vector<16x64xf32>
    %756 = arith.addf %754, %755 : vector<16x64xf32>
    %c0_135 = arith.constant 0 : index
    %c0_136 = arith.constant 0 : index
    %757 = vector.load %arg10[%c0_135, %c0_136] : memref<64x256xf32, #tpu.memory_space<vmem>>, vector<64x256xf32>
    %cst_137 = arith.constant dense<0.000000e+00> : vector<16x256xf32>
    %758 = tpu.matmul %756, %757, %cst_137 {dimension_numbers = #tpu.dot_dimension_numbers<[1], [0], [0], [1], [0, 0, 1, 1], [], []>} : vector<16x64xf32>, vector<64x256xf32>, vector<16x256xf32> -> vector<16x256xf32>
    %c0_138 = arith.constant 0 : index
    %c0_139 = arith.constant 0 : index
    %759 = vector.load %arg11[%c0_138, %c0_139] : memref<1x256xf32, #tpu.memory_space<vmem>>, vector<1x256xf32>
    %760 = vector.broadcast %759 : vector<1x256xf32> to vector<16x256xf32>
    %761 = arith.addf %758, %760 : vector<16x256xf32>
    %cst_140 = arith.constant 5.000000e-01 : f32
    %762 = vector.broadcast %cst_140 : f32 to vector<16x256xf32>
    %763 = arith.mulf %762, %761 : vector<16x256xf32>
    %cst_141 = arith.constant 0.707106769 : f32
    %764 = vector.broadcast %cst_141 : f32 to vector<16x256xf32>
    %765 = arith.mulf %761, %764 : vector<16x256xf32>
    %766 = math.absf %765 : vector<16x256xf32>
    %cst_142 = arith.constant 0.327591091 : f32
    %767 = vector.broadcast %cst_142 : f32 to vector<16x256xf32>
    %768 = arith.mulf %767, %766 : vector<16x256xf32>
    %cst_143 = arith.constant 1.000000e+00 : f32
    %769 = vector.broadcast %cst_143 : f32 to vector<16x256xf32>
    %770 = arith.addf %769, %768 : vector<16x256xf32>
    %cst_144 = arith.constant 1.000000e+00 : f32
    %771 = vector.broadcast %cst_144 : f32 to vector<16x256xf32>
    %772 = arith.divf %771, %770 : vector<16x256xf32>
    %cst_145 = arith.constant 1.06140542 : f32
    %773 = vector.broadcast %cst_145 : f32 to vector<16x256xf32>
    %774 = arith.mulf %773, %772 : vector<16x256xf32>
    %cst_146 = arith.constant -1.45315206 : f32
    %775 = vector.broadcast %cst_146 : f32 to vector<16x256xf32>
    %776 = arith.addf %774, %775 : vector<16x256xf32>
    %777 = arith.mulf %776, %772 : vector<16x256xf32>
    %cst_147 = arith.constant 1.42141378 : f32
    %778 = vector.broadcast %cst_147 : f32 to vector<16x256xf32>
    %779 = arith.addf %777, %778 : vector<16x256xf32>
    %780 = arith.mulf %779, %772 : vector<16x256xf32>
    %cst_148 = arith.constant -0.284496725 : f32
    %781 = vector.broadcast %cst_148 : f32 to vector<16x256xf32>
    %782 = arith.addf %780, %781 : vector<16x256xf32>
    %783 = arith.mulf %782, %772 : vector<16x256xf32>
    %cst_149 = arith.constant 0.254829586 : f32
    %784 = vector.broadcast %cst_149 : f32 to vector<16x256xf32>
    %785 = arith.addf %783, %784 : vector<16x256xf32>
    %786 = arith.mulf %785, %772 : vector<16x256xf32>
    %cst_150 = arith.constant 0.000000e+00 : f32
    %787 = vector.broadcast %cst_150 : f32 to vector<16x256xf32>
    %788 = arith.subf %787, %766 : vector<16x256xf32>
    %789 = arith.mulf %788, %766 : vector<16x256xf32>
    %790 = math.exp %789 : vector<16x256xf32>
    %791 = arith.mulf %786, %790 : vector<16x256xf32>
    %cst_151 = arith.constant 1.000000e+00 : f32
    %792 = vector.broadcast %cst_151 : f32 to vector<16x256xf32>
    %793 = arith.subf %792, %791 : vector<16x256xf32>
    %cst_152 = arith.constant 0.000000e+00 : f32
    %794 = vector.broadcast %cst_152 : f32 to vector<16x256xf32>
    %795 = arith.cmpf olt, %765, %794 : vector<16x256xf32>
    %cst_153 = arith.constant 0.000000e+00 : f32
    %796 = vector.broadcast %cst_153 : f32 to vector<16x256xf32>
    %797 = arith.subf %796, %793 : vector<16x256xf32>
    %798 = arith.select %795, %797, %793 : vector<16x256xi1>, vector<16x256xf32>
    %cst_154 = arith.constant 1.000000e+00 : f32
    %799 = vector.broadcast %cst_154 : f32 to vector<16x256xf32>
    %800 = arith.addf %799, %798 : vector<16x256xf32>
    %801 = arith.mulf %763, %800 : vector<16x256xf32>
    %c0_155 = arith.constant 0 : index
    %c0_156 = arith.constant 0 : index
    %802 = vector.load %arg12[%c0_155, %c0_156] : memref<256x64xf32, #tpu.memory_space<vmem>>, vector<256x64xf32>
    %cst_157 = arith.constant dense<0.000000e+00> : vector<16x64xf32>
    %803 = tpu.matmul %801, %802, %cst_157 {dimension_numbers = #tpu.dot_dimension_numbers<[1], [0], [0], [1], [0, 0, 1, 1], [], []>} : vector<16x256xf32>, vector<256x64xf32>, vector<16x64xf32> -> vector<16x64xf32>
    %c0_158 = arith.constant 0 : index
    %c0_159 = arith.constant 0 : index
    %804 = vector.load %arg13[%c0_158, %c0_159] : memref<1x64xf32, #tpu.memory_space<vmem>>, vector<1x64xf32>
    %805 = vector.broadcast %804 : vector<1x64xf32> to vector<16x64xf32>
    %806 = arith.addf %803, %805 : vector<16x64xf32>
    %807 = arith.addf %734, %806 : vector<16x64xf32>
    %c0_160 = arith.constant 0 : index
    %c0_161 = arith.constant 0 : index
    %c0_162 = arith.constant 0 : index
    %808 = vector.load %arg14[%c0_160, %c0_161, %c0_162] : memref<1x16x64xf32, #tpu.memory_space<vmem>>, vector<1x16x64xf32>
    %809 = vector.shape_cast %808 : vector<1x16x64xf32> to vector<16x64xf32>
    %810 = vector.shape_cast %807 : vector<16x64xf32> to vector<1x16x64xf32>
    tpu.vector_store %arg14[%c0_160, %c0_161, %c0_162], %810 {strides = array<i32>} : memref<1x16x64xf32, #tpu.memory_space<vmem>>, vector<1x16x64xf32>,
    return
  }
  func.func @transform_0(%arg0: i32) -> (i32, i32, i32) {
    %c0_i32 = arith.constant 0 : i32
    %c0_i32_0 = arith.constant 0 : i32
    %c0_i32_1 = arith.constant 0 : i32
    return %arg0, %c0_i32, %c0_i32_0 : i32, i32, i32
  }
  func.func @transform_1(%arg0: i32) -> (i32, i32) {
    %c0_i32 = arith.constant 0 : i32
    %c0_i32_0 = arith.constant 0 : i32
    %c0_i32_1 = arith.constant 0 : i32
    return %c0_i32, %c0_i32_0 : i32, i32
  }
  func.func @transform_2(%arg0: i32) -> (i32, i32) {
    %c0_i32 = arith.constant 0 : i32
    %c0_i32_0 = arith.constant 0 : i32
    %c0_i32_1 = arith.constant 0 : i32
    return %c0_i32, %c0_i32_0 : i32, i32
  }
  func.func @transform_3(%arg0: i32) -> (i32, i32) {
    %c0_i32 = arith.constant 0 : i32
    %c0_i32_0 = arith.constant 0 : i32
    %c0_i32_1 = arith.constant 0 : i32
    return %c0_i32, %c0_i32_0 : i32, i32
  }
  func.func @transform_4(%arg0: i32) -> (i32, i32) {
    %c0_i32 = arith.constant 0 : i32
    %c0_i32_0 = arith.constant 0 : i32
    %c0_i32_1 = arith.constant 0 : i32
    return %c0_i32, %c0_i32_0 : i32, i32
  }
  func.func @transform_5(%arg0: i32) -> (i32, i32) {
    %c0_i32 = arith.constant 0 : i32
    %c0_i32_0 = arith.constant 0 : i32
    %c0_i32_1 = arith.constant 0 : i32
    return %c0_i32, %c0_i32_0 : i32, i32
  }
  func.func @transform_6(%arg0: i32) -> (i32, i32) {
    %c0_i32 = arith.constant 0 : i32
    %c0_i32_0 = arith.constant 0 : i32
    %c0_i32_1 = arith.constant 0 : i32
    return %c0_i32, %c0_i32_0 : i32, i32
  }
  func.func @transform_7(%arg0: i32) -> (i32, i32) {
    %c0_i32 = arith.constant 0 : i32
    %c0_i32_0 = arith.constant 0 : i32
    %c0_i32_1 = arith.constant 0 : i32
    return %c0_i32, %c0_i32_0 : i32, i32
  }
  func.func @transform_8(%arg0: i32) -> (i32, i32) {
    %c0_i32 = arith.constant 0 : i32
    %c0_i32_0 = arith.constant 0 : i32
    %c0_i32_1 = arith.constant 0 : i32
    return %c0_i32, %c0_i32_0 : i32, i32
  }
  func.func @transform_9(%arg0: i32) -> (i32, i32) {
    %c0_i32 = arith.constant 0 : i32
    %c0_i32_0 = arith.constant 0 : i32
    %c0_i32_1 = arith.constant 0 : i32
    return %c0_i32, %c0_i32_0 : i32, i32
  }
  func.func @transform_10(%arg0: i32) -> (i32, i32) {
    %c0_i32 = arith.constant 0 : i32
    %c0_i32_0 = arith.constant 0 : i32
    %c0_i32_1 = arith.constant 0 : i32
    return %c0_i32, %c0_i32_0 : i32, i32
  }
  func.func @transform_11(%arg0: i32) -> (i32, i32) {
    %c0_i32 = arith.constant 0 : i32
    %c0_i32_0 = arith.constant 0 : i32
    %c0_i32_1 = arith.constant 0 : i32
    return %c0_i32, %c0_i32_0 : i32, i32
  }
  func.func @transform_12(%arg0: i32) -> (i32, i32) {
    %c0_i32 = arith.constant 0 : i32
    %c0_i32_0 = arith.constant 0 : i32
    %c0_i32_1 = arith.constant 0 : i32
    return %c0_i32, %c0_i32_0 : i32, i32
  }
  func.func @transform_13(%arg0: i32) -> (i32, i32, i32) {
    %c0_i32 = arith.constant 0 : i32
    %c0_i32_0 = arith.constant 0 : i32
    %c0_i32_1 = arith.constant 0 : i32
    return %arg0, %c0_i32, %c0_i32_0 : i32, i32, i32
  }
}

</mosaic_0001>

<llo_original>
// kernel: tpu_custom_call.1
$region0: #{tpu_custom_call.1}
  #allocation0 [shape = 'u32[]', space=smem, size = 0x4, offset = 0x4, fixed_abs, tag = 'smem constant byte address 0x4 - core index']
  #allocation1 [shape = 'u32[144,128]{1,0:T(1,128)}', space=vmem, size = 0x12000, scoped, tag = 'internal scratch']
  #allocation2 [shape = 'f32[128,8]{1,0:T(8,128)}', space=vmem, size = 0x10000, scoped, tag = 'scratch operand']
  %s0 = inlined_call_operand.vmem [shape: f32[2,16,64], index: 0, kind: input, shape index: {}]
  %s1 = inlined_call_operand.vmem [shape: f32[1,64], index: 1, kind: input, shape index: {}]
  %s2 = inlined_call_operand.vmem [shape: f32[1,64], index: 2, kind: input, shape index: {}]
  %s3 = inlined_call_operand.vmem [shape: f32[64,192], index: 3, kind: input, shape index: {}]
  %s4 = inlined_call_operand.vmem [shape: f32[1,192], index: 4, kind: input, shape index: {}]
  %s5 = inlined_call_operand.vmem [shape: f32[64,64], index: 5, kind: input, shape index: {}]
  %s6 = inlined_call_operand.vmem [shape: f32[1,64], index: 6, kind: input, shape index: {}]
  %s7 = inlined_call_operand.vmem [shape: f32[1,64], index: 7, kind: input, shape index: {}]
  %s8 = inlined_call_operand.vmem [shape: f32[1,64], index: 8, kind: input, shape index: {}]
  %s9 = inlined_call_operand.vmem [shape: f32[64,256], index: 9, kind: input, shape index: {}]
  %s10 = inlined_call_operand.vmem [shape: f32[1,256], index: 10, kind: input, shape index: {}]
  %s11 = inlined_call_operand.vmem [shape: f32[256,64], index: 11, kind: input, shape index: {}]
  %s12 = inlined_call_operand.vmem [shape: f32[1,64], index: 12, kind: input, shape index: {}]
  %s13 = inlined_call_operand.hbm [shape: f32[2,16,64], index: 13, kind: output, shape index: {}]
  %s14 = sld [smem:[#allocation0]]
  $region85: #{tpu_custom_call.1} parent=0
    _
  %s16 = ssub.s32 1, %s14
  %s17 = scalar_select 0, %s16, %s14
  $region1: #{tpu_custom_call.1} parent=0
    #allocation3 [shape = 'u8[16384]{0}', space=vmem, size = 0x4000, scoped, tag = 'output window, operand 0']
    #allocation4 [shape = 's32[2]{0}', space=sflag, size = 0x8, scoped, tag = 'scoped memory for tpu_custom_call.1']
    %18 = vsyncpa [#allocation4], 0
    %s19 = scalar_lea.sflag [#allocation4], 1
    %20 = vsyncpa %s19, 0
    loop: start=0, step=1, limit=4
    $region2: #{tpu_custom_call.1} parent=1 // loop_pre_header
      _
    $region3: #{tpu_custom_call.1} parent=1 // loop_header
      %s22 = sphi 0, %s26
      %p23 = scmp.ge.s32.totalorder %s22, 4
      %s32 = sphi 0, %s34
      %s35 = sphi 0, %s32
      %s36 = sphi 0, %s35
      %s52 = sphi 0, %s36
      %s56 = sphi 0, %s56
      %s58 = sphi 0, %s56
      %s59 = sphi 0, %s58
      %s73 = sphi 0, %s59
      %s77 = sphi 0, %s77
      %s79 = sphi 0, %s77
      %s80 = sphi 0, %s79
      %s94 = sphi 0, %s80
      %s98 = sphi 0, %s98
      %s100 = sphi 0, %s98
      %s101 = sphi 0, %s100
      %s115 = sphi 0, %s101
      %s119 = sphi 0, %s119
      %s121 = sphi 0, %s119
      %s122 = sphi 0, %s121
      %s136 = sphi 0, %s122
      %s140 = sphi 0, %s140
      %s142 = sphi 0, %s140
      %s143 = sphi 0, %s142
      %s157 = sphi 0, %s143
      %s161 = sphi 0, %s161
      %s163 = sphi 0, %s161
      %s164 = sphi 0, %s163
      %s178 = sphi 0, %s164
      %s182 = sphi 0, %s182
      %s184 = sphi 0, %s182
      %s185 = sphi 0, %s184
      %s199 = sphi 0, %s185
      %s203 = sphi 0, %s203
      %s205 = sphi 0, %s203
      %s206 = sphi 0, %s205
      %s220 = sphi 0, %s206
      %s224 = sphi 0, %s224
      %s226 = sphi 0, %s224
      %s227 = sphi 0, %s226
      %s241 = sphi 0, %s227
      %s245 = sphi 0, %s245
      %s247 = sphi 0, %s245
      %s248 = sphi 0, %s247
      %s262 = sphi 0, %s248
      %s266 = sphi 0, %s266
      %s268 = sphi 0, %s266
      %s269 = sphi 0, %s268
      %s283 = sphi 0, %s269
      %s287 = sphi 0, %s287
      %s289 = sphi 0, %s287
      %s290 = sphi 0, %s289
      %s304 = sphi 0, %s290
      %s310 = sphi 0, %s312
      %s313 = sphi 0, %s310
      %s314 = sphi 0, %s313
      %s330 = sphi 0, %s314
    $region4: #{tpu_custom_call.1} parent=1 // loop_header_branch
      %25 = sbr.rel (%p23) target = $region8
    $region5: #{tpu_custom_call.1} parent=1 // loop_body
      %s27 = ssub.s32 %s22, 1
      %s28 = ssub.s32 %s22, 2
      %s29 = sadd.s32 %s22, 1
      %s30 = ssub.s32 %s22, %s29
      %p31 = scmp.eq.s32.totalorder %s30, 0
      %s33 = sadd.s32 %s32, 1
      %s34 = scalar_select %p31, %s32, %s33
      %p37 = pneg %p31
      %p38 = scmp.eq.s32.totalorder %s22, 1
      %p39 = por %p37, %p38
      %p40 = scmp.ne.s32.totalorder %s32, %s35
      %p41 = scmp.eq.s32.totalorder %s22, 0
      %p42 = por %p40, %p41
      %p43 = scmp.ne.s32.totalorder %s32, %s35
      %p44 = scmp.eq.s32.totalorder %s27, 1
      %p45 = por %p43, %p44
      %p46 = scmp.ne.s32.totalorder %s35, %s36
      %p47 = scmp.eq.s32.totalorder %s27, 0
      %p48 = por %p46, %p47
      %p49 = scmp.ne.s32.totalorder %s35, %s36
      %p50 = scmp.eq.s32.totalorder %s28, 1
      %p51 = por %p49, %p50
      %p53 = scmp.ne.s32.totalorder %s36, %s52
      %p54 = scmp.eq.s32.totalorder %s28, 0
      %p55 = por %p53, %p54
      %s57 = sadd.s32 %s56, 1
      %p60 = scmp.eq.s32.totalorder %s22, 1
      %p61 = scmp.ne.s32.totalorder %s56, %s58
      %p62 = scmp.eq.s32.totalorder %s22, 0
      %p63 = por %p61, %p62
      %p64 = scmp.ne.s32.totalorder %s56, %s58
      %p65 = scmp.eq.s32.totalorder %s27, 1
      %p66 = por %p64, %p65
      %p67 = scmp.ne.s32.totalorder %s58, %s59
      %p68 = scmp.eq.s32.totalorder %s27, 0
      %p69 = por %p67, %p68
      %p70 = scmp.ne.s32.totalorder %s58, %s59
      %p71 = scmp.eq.s32.totalorder %s28, 1
      %p72 = por %p70, %p71
      %p74 = scmp.ne.s32.totalorder %s59, %s73
      %p75 = scmp.eq.s32.totalorder %s28, 0
      %p76 = por %p74, %p75
      %s78 = sadd.s32 %s77, 1
      %p81 = scmp.eq.s32.totalorder %s22, 1
      %p82 = scmp.ne.s32.totalorder %s77, %s79
      %p83 = scmp.eq.s32.totalorder %s22, 0
      %p84 = por %p82, %p83
      %p85 = scmp.ne.s32.totalorder %s77, %s79
      %p86 = scmp.eq.s32.totalorder %s27, 1
      %p87 = por %p85, %p86
      %p88 = scmp.ne.s32.totalorder %s79, %s80
      %p89 = scmp.eq.s32.totalorder %s27, 0
      %p90 = por %p88, %p89
      %p91 = scmp.ne.s32.totalorder %s79, %s80
      %p92 = scmp.eq.s32.totalorder %s28, 1
      %p93 = por %p91, %p92
      %p95 = scmp.ne.s32.totalorder %s80, %s94
      %p96 = scmp.eq.s32.totalorder %s28, 0
      %p97 = por %p95, %p96
      %s99 = sadd.s32 %s98, 1
      %p102 = scmp.eq.s32.totalorder %s22, 1
      %p103 = scmp.ne.s32.totalorder %s98, %s100
      %p104 = scmp.eq.s32.totalorder %s22, 0
      %p105 = por %p103, %p104
      %p106 = scmp.ne.s32.totalorder %s98, %s100
      %p107 = scmp.eq.s32.totalorder %s27, 1
      %p108 = por %p106, %p107
      %p109 = scmp.ne.s32.totalorder %s100, %s101
      %p110 = scmp.eq.s32.totalorder %s27, 0
      %p111 = por %p109, %p110
      %p112 = scmp.ne.s32.totalorder %s100, %s101
      %p113 = scmp.eq.s32.totalorder %s28, 1
      %p114 = por %p112, %p113
      %p116 = scmp.ne.s32.totalorder %s101, %s115
      %p117 = scmp.eq.s32.totalorder %s28, 0
      %p118 = por %p116, %p117
      %s120 = sadd.s32 %s119, 1
      %p123 = scmp.eq.s32.totalorder %s22, 1
      %p124 = scmp.ne.s32.totalorder %s119, %s121
      %p125 = scmp.eq.s32.totalorder %s22, 0
      %p126 = por %p124, %p125
      %p127 = scmp.ne.s32.totalorder %s119, %s121
      %p128 = scmp.eq.s32.totalorder %s27, 1
      %p129 = por %p127, %p128
      %p130 = scmp.ne.s32.totalorder %s121, %s122
      %p131 = scmp.eq.s32.totalorder %s27, 0
      %p132 = por %p130, %p131
      %p133 = scmp.ne.s32.totalorder %s121, %s122
      %p134 = scmp.eq.s32.totalorder %s28, 1
      %p135 = por %p133, %p134
      %p137 = scmp.ne.s32.totalorder %s122, %s136
      %p138 = scmp.eq.s32.totalorder %s28, 0
      %p139 = por %p137, %p138
      %s141 = sadd.s32 %s140, 1
      %p144 = scmp.eq.s32.totalorder %s22, 1
      %p145 = scmp.ne.s32.totalorder %s140, %s142
      %p146 = scmp.eq.s32.totalorder %s22, 0
      %p147 = por %p145, %p146
      %p148 = scmp.ne.s32.totalorder %s140, %s142
      %p149 = scmp.eq.s32.totalorder %s27, 1
      %p150 = por %p148, %p149
      %p151 = scmp.ne.s32.totalorder %s142, %s143
      %p152 = scmp.eq.s32.totalorder %s27, 0
      %p153 = por %p151, %p152
      %p154 = scmp.ne.s32.totalorder %s142, %s143
      %p155 = scmp.eq.s32.totalorder %s28, 1
      %p156 = por %p154, %p155
      %p158 = scmp.ne.s32.totalorder %s143, %s157
      %p159 = scmp.eq.s32.totalorder %s28, 0
      %p160 = por %p158, %p159
      %s162 = sadd.s32 %s161, 1
      %p165 = scmp.eq.s32.totalorder %s22, 1
      %p166 = scmp.ne.s32.totalorder %s161, %s163
      %p167 = scmp.eq.s32.totalorder %s22, 0
      %p168 = por %p166, %p167
      %p169 = scmp.ne.s32.totalorder %s161, %s163
      %p170 = scmp.eq.s32.totalorder %s27, 1
      %p171 = por %p169, %p170
      %p172 = scmp.ne.s32.totalorder %s163, %s164
      %p173 = scmp.eq.s32.totalorder %s27, 0
      %p174 = por %p172, %p173
      %p175 = scmp.ne.s32.totalorder %s163, %s164
      %p176 = scmp.eq.s32.totalorder %s28, 1
      %p177 = por %p175, %p176
      %p179 = scmp.ne.s32.totalorder %s164, %s178
      %p180 = scmp.eq.s32.totalorder %s28, 0
      %p181 = por %p179, %p180
      %s183 = sadd.s32 %s182, 1
      %p186 = scmp.eq.s32.totalorder %s22, 1
      %p187 = scmp.ne.s32.totalorder %s182, %s184
      %p188 = scmp.eq.s32.totalorder %s22, 0
      %p189 = por %p187, %p188
      %p190 = scmp.ne.s32.totalorder %s182, %s184
      %p191 = scmp.eq.s32.totalorder %s27, 1
      %p192 = por %p190, %p191
      %p193 = scmp.ne.s32.totalorder %s184, %s185
      %p194 = scmp.eq.s32.totalorder %s27, 0
      %p195 = por %p193, %p194
      %p196 = scmp.ne.s32.totalorder %s184, %s185
      %p197 = scmp.eq.s32.totalorder %s28, 1
      %p198 = por %p196, %p197
      %p200 = scmp.ne.s32.totalorder %s185, %s199
      %p201 = scmp.eq.s32.totalorder %s28, 0
      %p202 = por %p200, %p201
      %s204 = sadd.s32 %s203, 1
      %p207 = scmp.eq.s32.totalorder %s22, 1
      %p208 = scmp.ne.s32.totalorder %s203, %s205
      %p209 = scmp.eq.s32.totalorder %s22, 0
      %p210 = por %p208, %p209
      %p211 = scmp.ne.s32.totalorder %s203, %s205
      %p212 = scmp.eq.s32.totalorder %s27, 1
      %p213 = por %p211, %p212
      %p214 = scmp.ne.s32.totalorder %s205, %s206
      %p215 = scmp.eq.s32.totalorder %s27, 0
      %p216 = por %p214, %p215
      %p217 = scmp.ne.s32.totalorder %s205, %s206
      %p218 = scmp.eq.s32.totalorder %s28, 1
      %p219 = por %p217, %p218
      %p221 = scmp.ne.s32.totalorder %s206, %s220
      %p222 = scmp.eq.s32.totalorder %s28, 0
      %p223 = por %p221, %p222
      %s225 = sadd.s32 %s224, 1
      %p228 = scmp.eq.s32.totalorder %s22, 1
      %p229 = scmp.ne.s32.totalorder %s224, %s226
      %p230 = scmp.eq.s32.totalorder %s22, 0
      %p231 = por %p229, %p230
      %p232 = scmp.ne.s32.totalorder %s224, %s226
      %p233 = scmp.eq.s32.totalorder %s27, 1
      %p234 = por %p232, %p233
      %p235 = scmp.ne.s32.totalorder %s226, %s227
      %p236 = scmp.eq.s32.totalorder %s27, 0
      %p237 = por %p235, %p236
      %p238 = scmp.ne.s32.totalorder %s226, %s227
      %p239 = scmp.eq.s32.totalorder %s28, 1
      %p240 = por %p238, %p239
      %p242 = scmp.ne.s32.totalorder %s227, %s241
      %p243 = scmp.eq.s32.totalorder %s28, 0
      %p244 = por %p242, %p243
      %s246 = sadd.s32 %s245, 1
      %p249 = scmp.eq.s32.totalorder %s22, 1
      %p250 = scmp.ne.s32.totalorder %s245, %s247
      %p251 = scmp.eq.s32.totalorder %s22, 0
      %p252 = por %p250, %p251
      %p253 = scmp.ne.s32.totalorder %s245, %s247
      %p254 = scmp.eq.s32.totalorder %s27, 1
      %p255 = por %p253, %p254
      %p256 = scmp.ne.s32.totalorder %s247, %s248
      %p257 = scmp.eq.s32.totalorder %s27, 0
      %p258 = por %p256, %p257
      %p259 = scmp.ne.s32.totalorder %s247, %s248
      %p260 = scmp.eq.s32.totalorder %s28, 1
      %p261 = por %p259, %p260
      %p263 = scmp.ne.s32.totalorder %s248, %s262
      %p264 = scmp.eq.s32.totalorder %s28, 0
      %p265 = por %p263, %p264
      %s267 = sadd.s32 %s266, 1
      %p270 = scmp.eq.s32.totalorder %s22, 1
      %p271 = scmp.ne.s32.totalorder %s266, %s268
      %p272 = scmp.eq.s32.totalorder %s22, 0
      %p273 = por %p271, %p272
      %p274 = scmp.ne.s32.totalorder %s266, %s268
      %p275 = scmp.eq.s32.totalorder %s27, 1
      %p276 = por %p274, %p275
      %p277 = scmp.ne.s32.totalorder %s268, %s269
      %p278 = scmp.eq.s32.totalorder %s27, 0
      %p279 = por %p277, %p278
      %p280 = scmp.ne.s32.totalorder %s268, %s269
      %p281 = scmp.eq.s32.totalorder %s28, 1
      %p282 = por %p280, %p281
      %p284 = scmp.ne.s32.totalorder %s269, %s283
      %p285 = scmp.eq.s32.totalorder %s28, 0
      %p286 = por %p284, %p285
      %s288 = sadd.s32 %s287, 1
      %p291 = scmp.eq.s32.totalorder %s22, 1
      %p292 = scmp.ne.s32.totalorder %s287, %s289
      %p293 = scmp.eq.s32.totalorder %s22, 0
      %p294 = por %p292, %p293
      %p295 = scmp.ne.s32.totalorder %s287, %s289
      %p296 = scmp.eq.s32.totalorder %s27, 1
      %p297 = por %p295, %p296
      %p298 = scmp.ne.s32.totalorder %s289, %s290
      %p299 = scmp.eq.s32.totalorder %s27, 0
      %p300 = por %p298, %p299
      %p301 = scmp.ne.s32.totalorder %s289, %s290
      %p302 = scmp.eq.s32.totalorder %s28, 1
      %p303 = por %p301, %p302
      %p305 = scmp.ne.s32.totalorder %s290, %s304
      %p306 = scmp.eq.s32.totalorder %s28, 0
      %p307 = por %p305, %p306
      %s308 = ssub.s32 %s22, %s29
      %p309 = scmp.eq.s32.totalorder %s308, 0
      %s311 = sadd.s32 %s310, 1
      %s312 = scalar_select %p309, %s310, %s311
      %p315 = pneg %p309
      %p316 = scmp.eq.s32.totalorder %s22, 1
      %p317 = por %p315, %p316
      %p318 = scmp.ne.s32.totalorder %s310, %s313
      %p319 = scmp.eq.s32.totalorder %s22, 0
      %p320 = por %p318, %p319
      %p321 = scmp.ne.s32.totalorder %s310, %s313
      %p322 = scmp.eq.s32.totalorder %s27, 1
      %p323 = por %p321, %p322
      %p324 = scmp.ne.s32.totalorder %s313, %s314
      %p325 = scmp.eq.s32.totalorder %s27, 0
      %p326 = por %p324, %p325
      %p327 = scmp.ne.s32.totalorder %s313, %s314
      %p328 = scmp.eq.s32.totalorder %s28, 1
      %p329 = por %p327, %p328
      %p331 = scmp.ne.s32.totalorder %s314, %s330
      %p332 = scmp.eq.s32.totalorder %s28, 0
      %p333 = por %p331, %p332
      %p334 = scmp.le.s32.totalorder 1, %s22
      %p335 = scmp.lt.s32.totalorder %s22, 3
      %p336 = pnand %p334, %p335
      %p337 = pneg %p336
      // Predicated region
      $region9: #{tpu_custom_call.1} parent=5 // pred_check
        _
      $region10: #{tpu_custom_call.1} parent=5 // pred_check_branch
        %339 = sbr.rel (%p336) target = $region12
      $region11: #{tpu_custom_call.1} parent=5 // pred_region
        %s340 = ssub.s32 %s22, 1
        // Predicated region
        $region13: #{tpu_custom_call.1} parent=11 // pred_check
          %p341 = pneg %p69
        $region14: #{tpu_custom_call.1} parent=11 // pred_check_branch
          %343 = sbr.rel (%p341) target = $region16
        $region15: #{tpu_custom_call.1} parent=11 // pred_region
          _
        $region16: #{tpu_custom_call.1} parent=11 // pred_fallthru
          _
        // Predicated region
        $region17: #{tpu_custom_call.1} parent=11 // pred_check
          %p344 = pneg %p90
        $region18: #{tpu_custom_call.1} parent=11 // pred_check_branch
          %346 = sbr.rel (%p344) target = $region20
        $region19: #{tpu_custom_call.1} parent=11 // pred_region
          _
        $region20: #{tpu_custom_call.1} parent=11 // pred_fallthru
          _
        // Predicated region
        $region21: #{tpu_custom_call.1} parent=11 // pred_check
          %p347 = pneg %p111
        $region22: #{tpu_custom_call.1} parent=11 // pred_check_branch
          %349 = sbr.rel (%p347) target = $region24
        $region23: #{tpu_custom_call.1} parent=11 // pred_region
          _
        $region24: #{tpu_custom_call.1} parent=11 // pred_fallthru
          _
        // Predicated region
        $region25: #{tpu_custom_call.1} parent=11 // pred_check
          %p350 = pneg %p132
        $region26: #{tpu_custom_call.1} parent=11 // pred_check_branch
          %352 = sbr.rel (%p350) target = $region28
        $region27: #{tpu_custom_call.1} parent=11 // pred_region
          _
        $region28: #{tpu_custom_call.1} parent=11 // pred_fallthru
          _
        // Predicated region
        $region29: #{tpu_custom_call.1} parent=11 // pred_check
          %p353 = pneg %p153
        $region30: #{tpu_custom_call.1} parent=11 // pred_check_branch
          %355 = sbr.rel (%p353) target = $region32
        $region31: #{tpu_custom_call.1} parent=11 // pred_region
          _
        $region32: #{tpu_custom_call.1} parent=11 // pred_fallthru
          _
        // Predicated region
        $region33: #{tpu_custom_call.1} parent=11 // pred_check
          %p356 = pneg %p174
        $region34: #{tpu_custom_call.1} parent=11 // pred_check_branch
          %358 = sbr.rel (%p356) target = $region36
        $region35: #{tpu_custom_call.1} parent=11 // pred_region
          _
        $region36: #{tpu_custom_call.1} parent=11 // pred_fallthru
          _
        // Predicated region
        $region37: #{tpu_custom_call.1} parent=11 // pred_check
          %p359 = pneg %p195
        $region38: #{tpu_custom_call.1} parent=11 // pred_check_branch
          %361 = sbr.rel (%p359) target = $region40
        $region39: #{tpu_custom_call.1} parent=11 // pred_region
          _
        $region40: #{tpu_custom_call.1} parent=11 // pred_fallthru
          _
        // Predicated region
        $region41: #{tpu_custom_call.1} parent=11 // pred_check
          %p362 = pneg %p216
        $region42: #{tpu_custom_call.1} parent=11 // pred_check_branch
          %364 = sbr.rel (%p362) target = $region44
        $region43: #{tpu_custom_call.1} parent=11 // pred_region
          _
        $region44: #{tpu_custom_call.1} parent=11 // pred_fallthru
          _
        // Predicated region
        $region45: #{tpu_custom_call.1} parent=11 // pred_check
          %p365 = pneg %p237
        $region46: #{tpu_custom_call.1} parent=11 // pred_check_branch
          %367 = sbr.rel (%p365) target = $region48
        $region47: #{tpu_custom_call.1} parent=11 // pred_region
          _
        $region48: #{tpu_custom_call.1} parent=11 // pred_fallthru
          _
        // Predicated region
        $region49: #{tpu_custom_call.1} parent=11 // pred_check
          %p368 = pneg %p258
        $region50: #{tpu_custom_call.1} parent=11 // pred_check_branch
          %370 = sbr.rel (%p368) target = $region52
        $region51: #{tpu_custom_call.1} parent=11 // pred_region
          _
        $region52: #{tpu_custom_call.1} parent=11 // pred_fallthru
          _
        // Predicated region
        $region53: #{tpu_custom_call.1} parent=11 // pred_check
          %p371 = pneg %p279
        $region54: #{tpu_custom_call.1} parent=11 // pred_check_branch
          %373 = sbr.rel (%p371) target = $region56
        $region55: #{tpu_custom_call.1} parent=11 // pred_region
          _
        $region56: #{tpu_custom_call.1} parent=11 // pred_fallthru
          _
        // Predicated region
        $region57: #{tpu_custom_call.1} parent=11 // pred_check
          %p374 = pneg %p300
        $region58: #{tpu_custom_call.1} parent=11 // pred_check_branch
          %376 = sbr.rel (%p374) target = $region60
        $region59: #{tpu_custom_call.1} parent=11 // pred_region
          _
        $region60: #{tpu_custom_call.1} parent=11 // pred_fallthru
          _
      $region12: #{tpu_custom_call.1} parent=5 // pred_fallthru
        _
      %p377 = scmp.lt.s32.totalorder %s22, 2
      // Predicated region
      $region61: #{tpu_custom_call.1} parent=5 // pred_check
        %p378 = pneg %p377
      $region62: #{tpu_custom_call.1} parent=5 // pred_check_branch
        %380 = sbr.rel (%p378) target = $region64
      $region63: #{tpu_custom_call.1} parent=5 // pred_region
        // Predicated region
        $region65: #{tpu_custom_call.1} parent=63 // pred_check
          %p381 = pneg %p42
        $region66: #{tpu_custom_call.1} parent=63 // pred_check_branch
          %383 = sbr.rel (%p381) target = $region68
        $region67: #{tpu_custom_call.1} parent=63 // pred_region
          %p384 = scmp.lt.s32.totalorder %s22, 1
          %s385 = scalar_select %p384, %s22, 1
          %s386 = smul.addr %s385, 2
          %s387 = smul.addr %s386, 8
          %s388 = scalar_lea.vmem %s0, %s387
        $region68: #{tpu_custom_call.1} parent=63 // pred_fallthru
          _
      $region64: #{tpu_custom_call.1} parent=5 // pred_fallthru
        _
      %p389 = scmp.le.s32.totalorder 1, %s22
      %p390 = scmp.lt.s32.totalorder %s22, 3
      %p391 = pnand %p389, %p390
      %p392 = pneg %p391
      // Predicated region
      $region69: #{tpu_custom_call.1} parent=5 // pred_check
        _
      $region70: #{tpu_custom_call.1} parent=5 // pred_check_branch
        %394 = sbr.rel (%p391) target = $region72
      $region71: #{tpu_custom_call.1} parent=5 // pred_region
        %s395 = ssub.s32 %s22, 1
        %p396 = scmp.lt.s32.totalorder %s27, 1
        %s397 = scalar_select %p396, %s27, 1
        %s398 = smul.addr %s397, 2
        %s399 = smul.addr %s398, 8
        %s400 = scalar_lea.vmem %s0, %s399
        %p401 = pneg %p48
        %p402 = pneg %p45
        %p403 = pneg %p69
        %p404 = pneg %p66
        %p405 = pneg %p90
        %p406 = pneg %p87
        %p407 = pneg %p111
        %p408 = pneg %p108
        %p409 = pneg %p132
        %p410 = pneg %p129
        %p411 = pneg %p153
        %p412 = pneg %p150
        %p413 = pneg %p174
        %p414 = pneg %p171
        %p415 = pneg %p195
        %p416 = pneg %p192
        %p417 = pneg %p216
        %p418 = pneg %p213
        %p419 = pneg %p237
        %p420 = pneg %p234
        %p421 = pneg %p258
        %p422 = pneg %p255
        %p423 = pneg %p279
        %p424 = pneg %p276
        %p425 = pneg %p300
        %p426 = pneg %p297
        %p427 = pneg %p326
        %p428 = pneg %p323
        %s429 = sand.u32 %s313, 1
        %s430 = scalar_lea.sflag [#allocation4], %s429
        %s431 = sand.u32 %s313, 1
        %s432 = smul.addr %s431, 16
        %s433 = scalar_lea.vmem [#allocation3], %s432
        %p434 = scmp.lt.s32.totalorder %s27, 1
        %s435 = scalar_select %p434, %s27, 1
        %s436 = smul.addr %s435, 2
        %s437 = smul.addr %s436, 8
        %s438 = scalar_lea.vmem %s0, %s437
        %v439 = vld [vmem:[%s438] sm:$0xff]
        %v440 = vld [vmem:[%s438 + $0x8] sm:$0xff]
        %v441 = vld [vmem:[%s1] sm:$0x1]
        %v442 = vld [vmem:[%s2] sm:$0x1]
        %vm443 = vcmask 523264
        %v444 = vsel %vm443, %v439, 0.0
        %445 = vadd.xlane.f32.xlu0 %v444
        %v446 = vpop.xlane.xlu0 %445
        %v447 = vsel %vm443, %v440, 0.0
        %448 = vadd.xlane.f32.xlu0 %v447
        %v449 = vpop.xlane.xlu0 %448
        %v450 = vrcp.pop 64.0
        %v451 = vmul.f32 %v446, %v450
        %v452 = vmul.f32 %v449, %v450
        %v453 = vsub.f32 %v439, %v451
        %v454 = vsub.f32 %v440, %v452
        %v455 = vmul.f32 %v453, %v453
        %v456 = vmul.f32 %v454, %v454
        %v457 = vsel %vm443, %v455, 0.0
        %458 = vadd.xlane.f32.xlu0 %v457
        %v459 = vpop.xlane.xlu0 %458
        %v460 = vsel %vm443, %v456, 0.0
        %461 = vadd.xlane.f32.xlu0 %v460
        %v462 = vpop.xlane.xlu0 %461
        %v463 = vmul.f32 %v459, %v450
        %v464 = vmul.f32 %v462, %v450
        %v465 = vadd.f32 %v463, 1e-05
        %v466 = vadd.f32 %v464, 1e-05
        %v467 = vrsqrt.pop %v465
        %v468 = vrsqrt.pop %v466
        %v469 = vmul.f32 %v453, %v467
        %v470 = vmul.f32 %v454, %v468
        %v472 = vlaneseq
        %v473 = vshrl.u32 %v472, 7
        %v474 = vsub.s32 0, %v473
        %v475 = vrot.slane %v441, %v474
        %v477 = vmul.f32 %v469, %v475
        %v478 = vmul.f32 %v470, %v475
        %v480 = vlaneseq
        %v481 = vshrl.u32 %v480, 7
        %v482 = vsub.s32 0, %v481
        %v483 = vrot.slane %v442, %v482
        %v485 = vadd.f32 %v477, %v483
        %v486 = vadd.f32 %v478, %v483
        %v487 = vld [vmem:[%s3] sm:$0xff]
        %v488 = vld [vmem:[%s3 + $0x8] sm:$0xff]
        %v489 = vld [vmem:[%s3 + $0x10] sm:$0xff]
        %v490 = vld [vmem:[%s3 + $0x18] sm:$0xff]
        %v491 = vld [vmem:[%s3 + $0x20] sm:$0xff]
        %v492 = vld [vmem:[%s3 + $0x28] sm:$0xff]
        %v493 = vld [vmem:[%s3 + $0x30] sm:$0xff]
        %v494 = vld [vmem:[%s3 + $0x38] sm:$0xff]
        %v495 = vld [vmem:[%s3 + $0x40] sm:$0xff]
        %v496 = vld [vmem:[%s3 + $0x48] sm:$0xff]
        %v497 = vld [vmem:[%s3 + $0x50] sm:$0xff]
        %v498 = vld [vmem:[%s3 + $0x58] sm:$0xff]
        %v499 = vld [vmem:[%s3 + $0x60] sm:$0xff]
        %v500 = vld [vmem:[%s3 + $0x68] sm:$0xff]
        %v501 = vld [vmem:[%s3 + $0x70] sm:$0xff]
        %v502 = vld [vmem:[%s3 + $0x78] sm:$0xff]
        %v503 = vld [vmem:[%s4] sm:$0x3]
        %v505 = vlaneseq
        %v506 = vshrl.u32 %v505, 7
        %v507 = vsub.s32 0, %v506
        %v508 = vrot.slane %v503, %v507
        %v509 = vlaneseq
        %v510 = vshrl.u32 %v509, 7
        %v511 = vsub.s32 1, %v510
        %v512 = vrot.slane %v503, %v511
        %v516 = vsel %vm443, %v485, 0
        %v519 = vsel %vm443, %v486, 0
        %521 = vmatprep.subr.mxu0 0.0
        %522 = vmatpush1.msra.mxu0 0.0
        %523 = vmatprep.subr.mxu0 0.0
        %524 = vmatpush1.msra.mxu0 0.0
        %525 = vmatprep.subr.mxu0 0.0
        %526 = vmatpush1.msra.mxu0 0.0
        %527 = vmatprep.subr.mxu0 0.0
        %528 = vmatpush1.msra.mxu0 0.0
        %529 = vmatprep.subr.mxu0 0.0
        %530 = vmatpush1.msra.mxu0 0.0
        %531 = vmatprep.subr.mxu0 0.0
        %532 = vmatpush1.msra.mxu0 0.0
        %533 = vmatprep.subr.mxu0 0.0
        %534 = vmatpush1.msra.mxu0 0.0
        %535 = vmatprep.subr.mxu0 0.0
        %536 = vmatpush1.msra.mxu0 0.0
        %537 = vmatprep.subr.mxu0 %v502
        %538 = vmatpush1.msra.mxu0 %v501
        %539 = vmatprep.subr.mxu0 %v500
        %540 = vmatpush1.msra.mxu0 %v499
        %541 = vmatprep.subr.mxu0 %v498
        %542 = vmatpush1.msra.mxu0 %v497
        %543 = vmatprep.subr.mxu0 %v496
        %544 = vmatpush1.msra.mxu0 %v495
        %545 = vmatprep.subr.mxu0 %v494
        %546 = vmatpush1.msra.mxu0 %v493
        %547 = vmatprep.subr.mxu0 %v492
        %548 = vmatpush1.msra.mxu0 %v491
        %549 = vmatprep.subr.mxu0 %v490
        %550 = vmatpush1.msra.mxu0 %v489
        %551 = vmatprep.subr.mxu0 %v488
        %552 = vmatpush1.msra.mxu0 %v487
        %553 = vmatprep.subr.mxu0 0.0
        %554 = vmatpush2.msra.mxu0 0.0
        %555 = vmatprep.subr.mxu0 0.0
        %556 = vmatpush2.msra.mxu0 0.0
        %557 = vmatprep.subr.mxu0 0.0
        %558 = vmatpush2.msra.mxu0 0.0
        %559 = vmatprep.subr.mxu0 0.0
        %560 = vmatpush2.msra.mxu0 0.0
        %561 = vmatprep.subr.mxu0 0.0
        %562 = vmatpush2.msra.mxu0 0.0
        %563 = vmatprep.subr.mxu0 0.0
        %564 = vmatpush2.msra.mxu0 0.0
        %565 = vmatprep.subr.mxu0 0.0
        %566 = vmatpush2.msra.mxu0 0.0
        %567 = vmatprep.subr.mxu0 0.0
        %568 = vmatpush2.msra.mxu0 0.0
        %569 = vmatprep.subr.mxu0 0.0
        %570 = vmatpush2.msra.mxu0 0.0
        %571 = vmatprep.subr.mxu0 0.0
        %572 = vmatpush2.msra.mxu0 0.0
        %573 = vmatprep.subr.mxu0 0.0
        %574 = vmatpush2.msra.mxu0 0.0
        %575 = vmatprep.subr.mxu0 0.0
        %576 = vmatpush2.msra.mxu0 0.0
        %577 = vmatprep.subr.mxu0 0.0
        %578 = vmatpush2.msra.mxu0 0.0
        %579 = vmatprep.subr.mxu0 0.0
        %580 = vmatpush2.msra.mxu0 0.0
        %581 = vmatprep.subr.mxu0 0.0
        %582 = vmatpush2.msra.mxu0 0.0
        %583 = vmatprep.subr.mxu0 0.0
        %584 = vmatpush2.msra.mxu0 0.0
        %585 = vmatprep.mubr.f32.mxu0 0.0
        %586 = vmatmul.mubr.f32.gmra.mxu0 %v516
        %v587 = vpop.f32.mrf.mxu0
        %v588 = vadd.f32 %v508, %v587
        %v589 = vpop.f32.mrf.mxu0
        %v590 = vadd.f32 %v512, %v589
        %591 = vmatprep.mubr.f32.mxu0 0.0
        %592 = vmatmul.mubr.f32.gmra.mxu0 %v519
        %v593 = vpop.f32.mrf.mxu0
        %v594 = vadd.f32 %v508, %v593
        %v595 = vpop.f32.mrf.mxu0
        %v596 = vadd.f32 %v512, %v595
        %597 = vdwg.mxu0
        %600 = vrot.lane.b32.xlu0 %v588, 64
        %v601 = vpop.permute.xlu0 %600
        %602 = vrot.lane.b32.xlu0 %v594, 64
        %v603 = vpop.permute.xlu0 %602
        %v606 = vmul.f32 %v588, %v601
        %v607 = vmul.f32 %v594, %v603
        %vm608 = vcmask 64512
        %v609 = vsel %vm608, %v606, 0.0
        %610 = vadd.xlane.f32.xlu0 %v609
        %v611 = vpop.xlane.xlu0 %610
        %v612 = vsel %vm608, %v607, 0.0
        %613 = vadd.xlane.f32.xlu0 %v612
        %v614 = vpop.xlane.xlu0 %613
        %615 = vrot.lane.b32.xlu0 %v588, 56
        %v616 = vpop.permute.xlu0 %615
        %617 = vrot.lane.b32.xlu0 %v594, 56
        %v618 = vpop.permute.xlu0 %617
        %v621 = vmul.f32 %v588, %v616
        %v622 = vmul.f32 %v594, %v618
        %v623 = vsel %vm608, %v621, 0.0
        %624 = vadd.xlane.f32.xlu0 %v623
        %v625 = vpop.xlane.xlu0 %624
        %v626 = vsel %vm608, %v622, 0.0
        %627 = vadd.xlane.f32.xlu0 %v626
        %v628 = vpop.xlane.xlu0 %627
        %629 = vrot.lane.b32.xlu0 %v588, 48
        %v630 = vpop.permute.xlu0 %629
        %631 = vrot.lane.b32.xlu0 %v594, 48
        %v632 = vpop.permute.xlu0 %631
        %v635 = vmul.f32 %v588, %v630
        %v636 = vmul.f32 %v594, %v632
        %v637 = vsel %vm608, %v635, 0.0
        %638 = vadd.xlane.f32.xlu0 %v637
        %v639 = vpop.xlane.xlu0 %638
        %v640 = vsel %vm608, %v636, 0.0
        %641 = vadd.xlane.f32.xlu0 %v640
        %v642 = vpop.xlane.xlu0 %641
        %643 = vrot.lane.b32.xlu0 %v588, 40
        %v644 = vpop.permute.xlu0 %643
        %645 = vrot.lane.b32.xlu0 %v594, 40
        %v646 = vpop.permute.xlu0 %645
        %v649 = vmul.f32 %v588, %v644
        %v650 = vmul.f32 %v594, %v646
        %v651 = vsel %vm608, %v649, 0.0
        %652 = vadd.xlane.f32.xlu0 %v651
        %v653 = vpop.xlane.xlu0 %652
        %v654 = vsel %vm608, %v650, 0.0
        %655 = vadd.xlane.f32.xlu0 %v654
        %v656 = vpop.xlane.xlu0 %655
        %657 = vrot.lane.b32.xlu0 %v588, 32
        %v658 = vpop.permute.xlu0 %657
        %659 = vrot.lane.b32.xlu0 %v594, 32
        %v660 = vpop.permute.xlu0 %659
        %v663 = vmul.f32 %v588, %v658
        %v664 = vmul.f32 %v594, %v660
        %v665 = vsel %vm608, %v663, 0.0
        %666 = vadd.xlane.f32.xlu0 %v665
        %v667 = vpop.xlane.xlu0 %666
        %v668 = vsel %vm608, %v664, 0.0
        %669 = vadd.xlane.f32.xlu0 %v668
        %v670 = vpop.xlane.xlu0 %669
        %671 = vrot.lane.b32.xlu0 %v588, 24
        %v672 = vpop.permute.xlu0 %671
        %673 = vrot.lane.b32.xlu0 %v594, 24
        %v674 = vpop.permute.xlu0 %673
        %v677 = vmul.f32 %v588, %v672
        %v678 = vmul.f32 %v594, %v674
        %v679 = vsel %vm608, %v677, 0.0
        %680 = vadd.xlane.f32.xlu0 %v679
        %v681 = vpop.xlane.xlu0 %680
        %v682 = vsel %vm608, %v678, 0.0
        %683 = vadd.xlane.f32.xlu0 %v682
        %v684 = vpop.xlane.xlu0 %683
        %685 = vrot.lane.b32.xlu0 %v588, 16
        %v686 = vpop.permute.xlu0 %685
        %687 = vrot.lane.b32.xlu0 %v594, 16
        %v688 = vpop.permute.xlu0 %687
        %v691 = vmul.f32 %v588, %v686
        %v692 = vmul.f32 %v594, %v688
        %v693 = vsel %vm608, %v691, 0.0
        %694 = vadd.xlane.f32.xlu0 %v693
        %v695 = vpop.xlane.xlu0 %694
        %v696 = vsel %vm608, %v692, 0.0
        %697 = vadd.xlane.f32.xlu0 %v696
        %v698 = vpop.xlane.xlu0 %697
        %699 = vrot.lane.b32.xlu0 %v588, 8
        %v700 = vpop.permute.xlu0 %699
        %701 = vrot.lane.b32.xlu0 %v594, 8
        %v702 = vpop.permute.xlu0 %701
        %v705 = vmul.f32 %v588, %v700
        %v706 = vmul.f32 %v594, %v702
        %v707 = vsel %vm608, %v705, 0.0
        %708 = vadd.xlane.f32.xlu0 %v707
        %v709 = vpop.xlane.xlu0 %708
        %v710 = vsel %vm608, %v706, 0.0
        %711 = vadd.xlane.f32.xlu0 %v710
        %v712 = vpop.xlane.xlu0 %711
        %vm713 = vcmask 7168
        %v714 = vsel %vm713, %v611, %v625
        %v715 = vsel %vm713, %v614, %v628
        %vm716 = vcmask 15360
        %v717 = vsel %vm716, %v714, %v639
        %v718 = vsel %vm716, %v715, %v642
        %vm719 = vcmask 23552
        %v720 = vsel %vm719, %v717, %v653
        %v721 = vsel %vm719, %v718, %v656
        %vm722 = vcmask 31744
        %v723 = vsel %vm722, %v720, %v667
        %v724 = vsel %vm722, %v721, %v670
        %vm725 = vcmask 39936
        %v726 = vsel %vm725, %v723, %v681
        %v727 = vsel %vm725, %v724, %v684
        %vm728 = vcmask 48128
        %v729 = vsel %vm728, %v726, %v695
        %v730 = vsel %vm728, %v727, %v698
        %vm731 = vcmask 56320
        %v732 = vsel %vm731, %v729, %v709
        %v733 = vsel %vm731, %v730, %v712
        %v734 = vmul.f32 %v732, 0.35355338
        %v735 = vmul.f32 %v733, 0.35355338
        %v736 = vsel %vm608, %v734, -inf
        %737 = vmax.xlane.f32.xlu0 %v736
        %v738 = vpop.xlane.xlu0 %737
        %v739 = vsel %vm608, %v735, -inf
        %740 = vmax.xlane.f32.xlu0 %v739
        %v741 = vpop.xlane.xlu0 %740
        %v742 = vsub.f32 %v734, %v738
        %v743 = vsub.f32 %v735, %v741
        %v744 = vmul.f32 %v742, 1.442695
        %v745 = vpow.pop %v744
        %v746 = vmul.f32 %v743, 1.442695
        %v747 = vpow.pop %v746
        %v748 = vsel %vm608, %v745, 0.0
        %749 = vadd.xlane.f32.xlu0 %v748
        %v750 = vpop.xlane.xlu0 %749
        %v751 = vsel %vm608, %v747, 0.0
        %752 = vadd.xlane.f32.xlu0 %v751
        %v753 = vpop.xlane.xlu0 %752
        %v754 = vrcp.pop %v750
        %v755 = vrcp.pop %v753
        %v756 = vmul.f32 %v745, %v754
        %v757 = vmul.f32 %v747, %v755
        %759 = vset.pattern.permute.xlu0 0
        %760 = vperm.xlu0 %759, %v756
        %v761 = vpop.permute.xlu0 %760
        %764 = vset.pattern.permute.xlu0 0
        %765 = vperm.xlu0 %764, %v757
        %v766 = vpop.permute.xlu0 %765
        %v768 = vmul.f32 %v761, %v590
        %v769 = vmul.f32 %v766, %v596
        %770 = vset.pattern.permute.xlu0 1
        %771 = vperm.xlu0 %770, %v756
        %v772 = vpop.permute.xlu0 %771
        %774 = vset.pattern.permute.xlu0 1
        %775 = vperm.xlu0 %774, %v757
        %v776 = vpop.permute.xlu0 %775
        %v778 = vmul.f32 %v772, %v590
        %v779 = vmul.f32 %v776, %v596
        %782 = vrot.lane.b32.xlu0 %v778, 120
        %v783 = vpop.permute.xlu0 %782
        %784 = vrot.lane.b32.xlu0 %v779, 120
        %v785 = vpop.permute.xlu0 %784
        %v788 = vadd.f32 %v768, %v783
        %v789 = vadd.f32 %v769, %v785
        %790 = vset.pattern.permute.xlu0 2
        %791 = vperm.xlu0 %790, %v756
        %v792 = vpop.permute.xlu0 %791
        %794 = vset.pattern.permute.xlu0 2
        %795 = vperm.xlu0 %794, %v757
        %v796 = vpop.permute.xlu0 %795
        %v798 = vmul.f32 %v792, %v590
        %v799 = vmul.f32 %v796, %v596
        %802 = vrot.lane.b32.xlu0 %v798, 112
        %v803 = vpop.permute.xlu0 %802
        %804 = vrot.lane.b32.xlu0 %v799, 112
        %v805 = vpop.permute.xlu0 %804
        %v808 = vadd.f32 %v788, %v803
        %v809 = vadd.f32 %v789, %v805
        %810 = vset.pattern.permute.xlu0 3
        %811 = vperm.xlu0 %810, %v756
        %v812 = vpop.permute.xlu0 %811
        %814 = vset.pattern.permute.xlu0 3
        %815 = vperm.xlu0 %814, %v757
        %v816 = vpop.permute.xlu0 %815
        %v818 = vmul.f32 %v812, %v590
        %v819 = vmul.f32 %v816, %v596
        %822 = vrot.lane.b32.xlu0 %v818, 104
        %v823 = vpop.permute.xlu0 %822
        %824 = vrot.lane.b32.xlu0 %v819, 104
        %v825 = vpop.permute.xlu0 %824
        %v828 = vadd.f32 %v808, %v823
        %v829 = vadd.f32 %v809, %v825
        %830 = vset.pattern.permute.xlu0 4
        %831 = vperm.xlu0 %830, %v756
        %v832 = vpop.permute.xlu0 %831
        %834 = vset.pattern.permute.xlu0 4
        %835 = vperm.xlu0 %834, %v757
        %v836 = vpop.permute.xlu0 %835
        %v838 = vmul.f32 %v832, %v590
        %v839 = vmul.f32 %v836, %v596
        %842 = vrot.lane.b32.xlu0 %v838, 96
        %v843 = vpop.permute.xlu0 %842
        %844 = vrot.lane.b32.xlu0 %v839, 96
        %v845 = vpop.permute.xlu0 %844
        %v848 = vadd.f32 %v828, %v843
        %v849 = vadd.f32 %v829, %v845
        %850 = vset.pattern.permute.xlu0 5
        %851 = vperm.xlu0 %850, %v756
        %v852 = vpop.permute.xlu0 %851
        %854 = vset.pattern.permute.xlu0 5
        %855 = vperm.xlu0 %854, %v757
        %v856 = vpop.permute.xlu0 %855
        %v858 = vmul.f32 %v852, %v590
        %v859 = vmul.f32 %v856, %v596
        %862 = vrot.lane.b32.xlu0 %v858, 88
        %v863 = vpop.permute.xlu0 %862
        %864 = vrot.lane.b32.xlu0 %v859, 88
        %v865 = vpop.permute.xlu0 %864
        %v868 = vadd.f32 %v848, %v863
        %v869 = vadd.f32 %v849, %v865
        %870 = vset.pattern.permute.xlu0 6
        %871 = vperm.xlu0 %870, %v756
        %v872 = vpop.permute.xlu0 %871
        %874 = vset.pattern.permute.xlu0 6
        %875 = vperm.xlu0 %874, %v757
        %v876 = vpop.permute.xlu0 %875
        %v878 = vmul.f32 %v872, %v590
        %v879 = vmul.f32 %v876, %v596
        %882 = vrot.lane.b32.xlu0 %v878, 80
        %v883 = vpop.permute.xlu0 %882
        %884 = vrot.lane.b32.xlu0 %v879, 80
        %v885 = vpop.permute.xlu0 %884
        %v888 = vadd.f32 %v868, %v883
        %v889 = vadd.f32 %v869, %v885
        %890 = vset.pattern.permute.xlu0 7
        %891 = vperm.xlu0 %890, %v756
        %v892 = vpop.permute.xlu0 %891
        %894 = vset.pattern.permute.xlu0 7
        %895 = vperm.xlu0 %894, %v757
        %v896 = vpop.permute.xlu0 %895
        %v898 = vmul.f32 %v892, %v590
        %v899 = vmul.f32 %v896, %v596
        %902 = vrot.lane.b32.xlu0 %v898, 72
        %v903 = vpop.permute.xlu0 %902
        %904 = vrot.lane.b32.xlu0 %v899, 72
        %v905 = vpop.permute.xlu0 %904
        %v908 = vadd.f32 %v888, %v903
        %v909 = vadd.f32 %v889, %v905
        %910 = vst.msk [vmem:[#allocation2] sm:$0xff] %vm608, %v908
        %911 = vst.msk [vmem:[#allocation2 + $0x8] sm:$0xff] %vm608, %v909
        %912 = vrot.lane.b32.xlu0 %v588, 72
        %v913 = vpop.permute.xlu0 %912
        %914 = vrot.lane.b32.xlu0 %v594, 72
        %v915 = vpop.permute.xlu0 %914
        %v918 = vmul.f32 %v588, %v913
        %v919 = vmul.f32 %v594, %v915
        %922 = vrot.lane.b32.xlu0 %v918, 120
        %v923 = vpop.permute.xlu0 %922
        %924 = vrot.lane.b32.xlu0 %v919, 120
        %v925 = vpop.permute.xlu0 %924
        %v928 = vsel %vm608, %v923, 0.0
        %929 = vadd.xlane.f32.xlu0 %v928
        %v930 = vpop.xlane.xlu0 %929
        %v931 = vsel %vm608, %v925, 0.0
        %932 = vadd.xlane.f32.xlu0 %v931
        %v933 = vpop.xlane.xlu0 %932
        %936 = vrot.lane.b32.xlu0 %v606, 120
        %v937 = vpop.permute.xlu0 %936
        %938 = vrot.lane.b32.xlu0 %v607, 120
        %v939 = vpop.permute.xlu0 %938
        %v942 = vsel %vm608, %v937, 0.0
        %943 = vadd.xlane.f32.xlu0 %v942
        %v944 = vpop.xlane.xlu0 %943
        %v945 = vsel %vm608, %v939, 0.0
        %946 = vadd.xlane.f32.xlu0 %v945
        %v947 = vpop.xlane.xlu0 %946
        %950 = vrot.lane.b32.xlu0 %v621, 120
        %v951 = vpop.permute.xlu0 %950
        %952 = vrot.lane.b32.xlu0 %v622, 120
        %v953 = vpop.permute.xlu0 %952
        %v956 = vsel %vm608, %v951, 0.0
        %957 = vadd.xlane.f32.xlu0 %v956
        %v958 = vpop.xlane.xlu0 %957
        %v959 = vsel %vm608, %v953, 0.0
        %960 = vadd.xlane.f32.xlu0 %v959
        %v961 = vpop.xlane.xlu0 %960
        %964 = vrot.lane.b32.xlu0 %v635, 120
        %v965 = vpop.permute.xlu0 %964
        %966 = vrot.lane.b32.xlu0 %v636, 120
        %v967 = vpop.permute.xlu0 %966
        %v970 = vsel %vm608, %v965, 0.0
        %971 = vadd.xlane.f32.xlu0 %v970
        %v972 = vpop.xlane.xlu0 %971
        %v973 = vsel %vm608, %v967, 0.0
        %974 = vadd.xlane.f32.xlu0 %v973
        %v975 = vpop.xlane.xlu0 %974
        %978 = vrot.lane.b32.xlu0 %v649, 120
        %v979 = vpop.permute.xlu0 %978
        %980 = vrot.lane.b32.xlu0 %v650, 120
        %v981 = vpop.permute.xlu0 %980
        %v984 = vsel %vm608, %v979, 0.0
        %985 = vadd.xlane.f32.xlu0 %v984
        %v986 = vpop.xlane.xlu0 %985
        %v987 = vsel %vm608, %v981, 0.0
        %988 = vadd.xlane.f32.xlu0 %v987
        %v989 = vpop.xlane.xlu0 %988
        %992 = vrot.lane.b32.xlu0 %v663, 120
        %v993 = vpop.permute.xlu0 %992
        %994 = vrot.lane.b32.xlu0 %v664, 120
        %v995 = vpop.permute.xlu0 %994
        %v998 = vsel %vm608, %v993, 0.0
        %999 = vadd.xlane.f32.xlu0 %v998
        %v1000 = vpop.xlane.xlu0 %999
        %v1001 = vsel %vm608, %v995, 0.0
        %1002 = vadd.xlane.f32.xlu0 %v1001
        %v1003 = vpop.xlane.xlu0 %1002
        %1006 = vrot.lane.b32.xlu0 %v677, 120
        %v1007 = vpop.permute.xlu0 %1006
        %1008 = vrot.lane.b32.xlu0 %v678, 120
        %v1009 = vpop.permute.xlu0 %1008
        %v1012 = vsel %vm608, %v1007, 0.0
        %1013 = vadd.xlane.f32.xlu0 %v1012
        %v1014 = vpop.xlane.xlu0 %1013
        %v1015 = vsel %vm608, %v1009, 0.0
        %1016 = vadd.xlane.f32.xlu0 %v1015
        %v1017 = vpop.xlane.xlu0 %1016
        %1020 = vrot.lane.b32.xlu0 %v691, 120
        %v1021 = vpop.permute.xlu0 %1020
        %1022 = vrot.lane.b32.xlu0 %v692, 120
        %v1023 = vpop.permute.xlu0 %1022
        %v1026 = vsel %vm608, %v1021, 0.0
        %1027 = vadd.xlane.f32.xlu0 %v1026
        %v1028 = vpop.xlane.xlu0 %1027
        %v1029 = vsel %vm608, %v1023, 0.0
        %1030 = vadd.xlane.f32.xlu0 %v1029
        %v1031 = vpop.xlane.xlu0 %1030
        %v1032 = vsel %vm713, %v930, %v944
        %v1033 = vsel %vm713, %v933, %v947
        %v1034 = vsel %vm716, %v1032, %v958
        %v1035 = vsel %vm716, %v1033, %v961
        %v1036 = vsel %vm719, %v1034, %v972
        %v1037 = vsel %vm719, %v1035, %v975
        %v1038 = vsel %vm722, %v1036, %v986
        %v1039 = vsel %vm722, %v1037, %v989
        %v1040 = vsel %vm725, %v1038, %v1000
        %v1041 = vsel %vm725, %v1039, %v1003
        %v1042 = vsel %vm728, %v1040, %v1014
        %v1043 = vsel %vm728, %v1041, %v1017
        %v1044 = vsel %vm731, %v1042, %v1028
        %v1045 = vsel %vm731, %v1043, %v1031
        %v1046 = vmul.f32 %v1044, 0.35355338
        %v1047 = vmul.f32 %v1045, 0.35355338
        %v1048 = vsel %vm608, %v1046, -inf
        %1049 = vmax.xlane.f32.xlu0 %v1048
        %v1050 = vpop.xlane.xlu0 %1049
        %v1051 = vsel %vm608, %v1047, -inf
        %1052 = vmax.xlane.f32.xlu0 %v1051
        %v1053 = vpop.xlane.xlu0 %1052
        %v1054 = vsub.f32 %v1046, %v1050
        %v1055 = vsub.f32 %v1047, %v1053
        %v1056 = vmul.f32 %v1054, 1.442695
        %v1057 = vpow.pop %v1056
        %v1058 = vmul.f32 %v1055, 1.442695
        %v1059 = vpow.pop %v1058
        %v1060 = vsel %vm608, %v1057, 0.0
        %1061 = vadd.xlane.f32.xlu0 %v1060
        %v1062 = vpop.xlane.xlu0 %1061
        %v1063 = vsel %vm608, %v1059, 0.0
        %1064 = vadd.xlane.f32.xlu0 %v1063
        %v1065 = vpop.xlane.xlu0 %1064
        %v1066 = vrcp.pop %v1062
        %v1067 = vrcp.pop %v1065
        %v1068 = vmul.f32 %v1057, %v1066
        %v1069 = vmul.f32 %v1059, %v1067
        %1071 = vset.pattern.permute.xlu0 0
        %1072 = vperm.xlu0 %1071, %v1068
        %v1073 = vpop.permute.xlu0 %1072
        %1076 = vset.pattern.permute.xlu0 0
        %1077 = vperm.xlu0 %1076, %v1069
        %v1078 = vpop.permute.xlu0 %1077
        %v1080 = vmul.f32 %v1073, %v590
        %v1081 = vmul.f32 %v1078, %v596
        %1082 = vset.pattern.permute.xlu0 1
        %1083 = vperm.xlu0 %1082, %v1068
        %v1084 = vpop.permute.xlu0 %1083
        %1086 = vset.pattern.permute.xlu0 1
        %1087 = vperm.xlu0 %1086, %v1069
        %v1088 = vpop.permute.xlu0 %1087
        %v1090 = vmul.f32 %v1084, %v590
        %v1091 = vmul.f32 %v1088, %v596
        %1094 = vrot.lane.b32.xlu0 %v1090, 120
        %v1095 = vpop.permute.xlu0 %1094
        %1096 = vrot.lane.b32.xlu0 %v1091, 120
        %v1097 = vpop.permute.xlu0 %1096
        %v1100 = vadd.f32 %v1080, %v1095
        %v1101 = vadd.f32 %v1081, %v1097
        %1102 = vset.pattern.permute.xlu0 2
        %1103 = vperm.xlu0 %1102, %v1068
        %v1104 = vpop.permute.xlu0 %1103
        %1106 = vset.pattern.permute.xlu0 2
        %1107 = vperm.xlu0 %1106, %v1069
        %v1108 = vpop.permute.xlu0 %1107
        %v1110 = vmul.f32 %v1104, %v590
        %v1111 = vmul.f32 %v1108, %v596
        %1114 = vrot.lane.b32.xlu0 %v1110, 112
        %v1115 = vpop.permute.xlu0 %1114
        %1116 = vrot.lane.b32.xlu0 %v1111, 112
        %v1117 = vpop.permute.xlu0 %1116
        %v1120 = vadd.f32 %v1100, %v1115
        %v1121 = vadd.f32 %v1101, %v1117
        %1122 = vset.pattern.permute.xlu0 3
        %1123 = vperm.xlu0 %1122, %v1068
        %v1124 = vpop.permute.xlu0 %1123
        %1126 = vset.pattern.permute.xlu0 3
        %1127 = vperm.xlu0 %1126, %v1069
        %v1128 = vpop.permute.xlu0 %1127
        %v1130 = vmul.f32 %v1124, %v590
        %v1131 = vmul.f32 %v1128, %v596
        %1134 = vrot.lane.b32.xlu0 %v1130, 104
        %v1135 = vpop.permute.xlu0 %1134
        %1136 = vrot.lane.b32.xlu0 %v1131, 104
        %v1137 = vpop.permute.xlu0 %1136
        %v1140 = vadd.f32 %v1120, %v1135
        %v1141 = vadd.f32 %v1121, %v1137
        %1142 = vset.pattern.permute.xlu0 4
        %1143 = vperm.xlu0 %1142, %v1068
        %v1144 = vpop.permute.xlu0 %1143
        %1146 = vset.pattern.permute.xlu0 4
        %1147 = vperm.xlu0 %1146, %v1069
        %v1148 = vpop.permute.xlu0 %1147
        %v1150 = vmul.f32 %v1144, %v590
        %v1151 = vmul.f32 %v1148, %v596
        %1154 = vrot.lane.b32.xlu0 %v1150, 96
        %v1155 = vpop.permute.xlu0 %1154
        %1156 = vrot.lane.b32.xlu0 %v1151, 96
        %v1157 = vpop.permute.xlu0 %1156
        %v1160 = vadd.f32 %v1140, %v1155
        %v1161 = vadd.f32 %v1141, %v1157
        %1162 = vset.pattern.permute.xlu0 5
        %1163 = vperm.xlu0 %1162, %v1068
        %v1164 = vpop.permute.xlu0 %1163
        %1166 = vset.pattern.permute.xlu0 5
        %1167 = vperm.xlu0 %1166, %v1069
        %v1168 = vpop.permute.xlu0 %1167
        %v1170 = vmul.f32 %v1164, %v590
        %v1171 = vmul.f32 %v1168, %v596
        %1174 = vrot.lane.b32.xlu0 %v1170, 88
        %v1175 = vpop.permute.xlu0 %1174
        %1176 = vrot.lane.b32.xlu0 %v1171, 88
        %v1177 = vpop.permute.xlu0 %1176
        %v1180 = vadd.f32 %v1160, %v1175
        %v1181 = vadd.f32 %v1161, %v1177
        %1182 = vset.pattern.permute.xlu0 6
        %1183 = vperm.xlu0 %1182, %v1068
        %v1184 = vpop.permute.xlu0 %1183
        %1186 = vset.pattern.permute.xlu0 6
        %1187 = vperm.xlu0 %1186, %v1069
        %v1188 = vpop.permute.xlu0 %1187
        %v1190 = vmul.f32 %v1184, %v590
        %v1191 = vmul.f32 %v1188, %v596
        %1194 = vrot.lane.b32.xlu0 %v1190, 80
        %v1195 = vpop.permute.xlu0 %1194
        %1196 = vrot.lane.b32.xlu0 %v1191, 80
        %v1197 = vpop.permute.xlu0 %1196
        %v1200 = vadd.f32 %v1180, %v1195
        %v1201 = vadd.f32 %v1181, %v1197
        %1202 = vset.pattern.permute.xlu0 7
        %1203 = vperm.xlu0 %1202, %v1068
        %v1204 = vpop.permute.xlu0 %1203
        %1206 = vset.pattern.permute.xlu0 7
        %1207 = vperm.xlu0 %1206, %v1069
        %v1208 = vpop.permute.xlu0 %1207
        %v1210 = vmul.f32 %v1204, %v590
        %v1211 = vmul.f32 %v1208, %v596
        %1214 = vrot.lane.b32.xlu0 %v1210, 72
        %v1215 = vpop.permute.xlu0 %1214
        %1216 = vrot.lane.b32.xlu0 %v1211, 72
        %v1217 = vpop.permute.xlu0 %1216
        %v1220 = vadd.f32 %v1200, %v1215
        %v1221 = vadd.f32 %v1201, %v1217
        %1222 = vst.msk [vmem:[#allocation2 + $0x10] sm:$0xff] %vm608, %v1220
        %1223 = vst.msk [vmem:[#allocation2 + $0x18] sm:$0xff] %vm608, %v1221
        %1224 = vrot.lane.b32.xlu0 %v588, 80
        %v1225 = vpop.permute.xlu0 %1224
        %1226 = vrot.lane.b32.xlu0 %v594, 80
        %v1227 = vpop.permute.xlu0 %1226
        %v1230 = vmul.f32 %v588, %v1225
        %v1231 = vmul.f32 %v594, %v1227
        %1234 = vrot.lane.b32.xlu0 %v1230, 112
        %v1235 = vpop.permute.xlu0 %1234
        %1236 = vrot.lane.b32.xlu0 %v1231, 112
        %v1237 = vpop.permute.xlu0 %1236
        %v1240 = vsel %vm608, %v1235, 0.0
        %1241 = vadd.xlane.f32.xlu0 %v1240
        %v1242 = vpop.xlane.xlu0 %1241
        %v1243 = vsel %vm608, %v1237, 0.0
        %1244 = vadd.xlane.f32.xlu0 %v1243
        %v1245 = vpop.xlane.xlu0 %1244
        %1246 = vrot.lane.b32.xlu0 %v918, 112
        %v1247 = vpop.permute.xlu0 %1246
        %1248 = vrot.lane.b32.xlu0 %v919, 112
        %v1249 = vpop.permute.xlu0 %1248
        %v1252 = vsel %vm608, %v1247, 0.0
        %1253 = vadd.xlane.f32.xlu0 %v1252
        %v1254 = vpop.xlane.xlu0 %1253
        %v1255 = vsel %vm608, %v1249, 0.0
        %1256 = vadd.xlane.f32.xlu0 %v1255
        %v1257 = vpop.xlane.xlu0 %1256
        %1258 = vrot.lane.b32.xlu0 %v606, 112
        %v1259 = vpop.permute.xlu0 %1258
        %1260 = vrot.lane.b32.xlu0 %v607, 112
        %v1261 = vpop.permute.xlu0 %1260
        %v1264 = vsel %vm608, %v1259, 0.0
        %1265 = vadd.xlane.f32.xlu0 %v1264
        %v1266 = vpop.xlane.xlu0 %1265
        %v1267 = vsel %vm608, %v1261, 0.0
        %1268 = vadd.xlane.f32.xlu0 %v1267
        %v1269 = vpop.xlane.xlu0 %1268
        %1270 = vrot.lane.b32.xlu0 %v621, 112
        %v1271 = vpop.permute.xlu0 %1270
        %1272 = vrot.lane.b32.xlu0 %v622, 112
        %v1273 = vpop.permute.xlu0 %1272
        %v1276 = vsel %vm608, %v1271, 0.0
        %1277 = vadd.xlane.f32.xlu0 %v1276
        %v1278 = vpop.xlane.xlu0 %1277
        %v1279 = vsel %vm608, %v1273, 0.0
        %1280 = vadd.xlane.f32.xlu0 %v1279
        %v1281 = vpop.xlane.xlu0 %1280
        %1282 = vrot.lane.b32.xlu0 %v635, 112
        %v1283 = vpop.permute.xlu0 %1282
        %1284 = vrot.lane.b32.xlu0 %v636, 112
        %v1285 = vpop.permute.xlu0 %1284
        %v1288 = vsel %vm608, %v1283, 0.0
        %1289 = vadd.xlane.f32.xlu0 %v1288
        %v1290 = vpop.xlane.xlu0 %1289
        %v1291 = vsel %vm608, %v1285, 0.0
        %1292 = vadd.xlane.f32.xlu0 %v1291
        %v1293 = vpop.xlane.xlu0 %1292
        %1294 = vrot.lane.b32.xlu0 %v649, 112
        %v1295 = vpop.permute.xlu0 %1294
        %1296 = vrot.lane.b32.xlu0 %v650, 112
        %v1297 = vpop.permute.xlu0 %1296
        %v1300 = vsel %vm608, %v1295, 0.0
        %1301 = vadd.xlane.f32.xlu0 %v1300
        %v1302 = vpop.xlane.xlu0 %1301
        %v1303 = vsel %vm608, %v1297, 0.0
        %1304 = vadd.xlane.f32.xlu0 %v1303
        %v1305 = vpop.xlane.xlu0 %1304
        %1306 = vrot.lane.b32.xlu0 %v663, 112
        %v1307 = vpop.permute.xlu0 %1306
        %1308 = vrot.lane.b32.xlu0 %v664, 112
        %v1309 = vpop.permute.xlu0 %1308
        %v1312 = vsel %vm608, %v1307, 0.0
        %1313 = vadd.xlane.f32.xlu0 %v1312
        %v1314 = vpop.xlane.xlu0 %1313
        %v1315 = vsel %vm608, %v1309, 0.0
        %1316 = vadd.xlane.f32.xlu0 %v1315
        %v1317 = vpop.xlane.xlu0 %1316
        %1318 = vrot.lane.b32.xlu0 %v677, 112
        %v1319 = vpop.permute.xlu0 %1318
        %1320 = vrot.lane.b32.xlu0 %v678, 112
        %v1321 = vpop.permute.xlu0 %1320
        %v1324 = vsel %vm608, %v1319, 0.0
        %1325 = vadd.xlane.f32.xlu0 %v1324
        %v1326 = vpop.xlane.xlu0 %1325
        %v1327 = vsel %vm608, %v1321, 0.0
        %1328 = vadd.xlane.f32.xlu0 %v1327
        %v1329 = vpop.xlane.xlu0 %1328
        %v1330 = vsel %vm713, %v1242, %v1254
        %v1331 = vsel %vm713, %v1245, %v1257
        %v1332 = vsel %vm716, %v1330, %v1266
        %v1333 = vsel %vm716, %v1331, %v1269
        %v1334 = vsel %vm719, %v1332, %v1278
        %v1335 = vsel %vm719, %v1333, %v1281
        %v1336 = vsel %vm722, %v1334, %v1290
        %v1337 = vsel %vm722, %v1335, %v1293
        %v1338 = vsel %vm725, %v1336, %v1302
        %v1339 = vsel %vm725, %v1337, %v1305
        %v1340 = vsel %vm728, %v1338, %v1314
        %v1341 = vsel %vm728, %v1339, %v1317
        %v1342 = vsel %vm731, %v1340, %v1326
        %v1343 = vsel %vm731, %v1341, %v1329
        %v1344 = vmul.f32 %v1342, 0.35355338
        %v1345 = vmul.f32 %v1343, 0.35355338
        %v1346 = vsel %vm608, %v1344, -inf
        %1347 = vmax.xlane.f32.xlu0 %v1346
        %v1348 = vpop.xlane.xlu0 %1347
        %v1349 = vsel %vm608, %v1345, -inf
        %1350 = vmax.xlane.f32.xlu0 %v1349
        %v1351 = vpop.xlane.xlu0 %1350
        %v1352 = vsub.f32 %v1344, %v1348
        %v1353 = vsub.f32 %v1345, %v1351
        %v1354 = vmul.f32 %v1352, 1.442695
        %v1355 = vpow.pop %v1354
        %v1356 = vmul.f32 %v1353, 1.442695
        %v1357 = vpow.pop %v1356
        %v1358 = vsel %vm608, %v1355, 0.0
        %1359 = vadd.xlane.f32.xlu0 %v1358
        %v1360 = vpop.xlane.xlu0 %1359
        %v1361 = vsel %vm608, %v1357, 0.0
        %1362 = vadd.xlane.f32.xlu0 %v1361
        %v1363 = vpop.xlane.xlu0 %1362
        %v1364 = vrcp.pop %v1360
        %v1365 = vrcp.pop %v1363
        %v1366 = vmul.f32 %v1355, %v1364
        %v1367 = vmul.f32 %v1357, %v1365
        %1369 = vset.pattern.permute.xlu0 0
        %1370 = vperm.xlu0 %1369, %v1366
        %v1371 = vpop.permute.xlu0 %1370
        %1374 = vset.pattern.permute.xlu0 0
        %1375 = vperm.xlu0 %1374, %v1367
        %v1376 = vpop.permute.xlu0 %1375
        %v1378 = vmul.f32 %v1371, %v590
        %v1379 = vmul.f32 %v1376, %v596
        %1380 = vset.pattern.permute.xlu0 1
        %1381 = vperm.xlu0 %1380, %v1366
        %v1382 = vpop.permute.xlu0 %1381
        %1384 = vset.pattern.permute.xlu0 1
        %1385 = vperm.xlu0 %1384, %v1367
        %v1386 = vpop.permute.xlu0 %1385
        %v1388 = vmul.f32 %v1382, %v590
        %v1389 = vmul.f32 %v1386, %v596
        %1392 = vrot.lane.b32.xlu0 %v1388, 120
        %v1393 = vpop.permute.xlu0 %1392
        %1394 = vrot.lane.b32.xlu0 %v1389, 120
        %v1395 = vpop.permute.xlu0 %1394
        %v1398 = vadd.f32 %v1378, %v1393
        %v1399 = vadd.f32 %v1379, %v1395
        %1400 = vset.pattern.permute.xlu0 2
        %1401 = vperm.xlu0 %1400, %v1366
        %v1402 = vpop.permute.xlu0 %1401
        %1404 = vset.pattern.permute.xlu0 2
        %1405 = vperm.xlu0 %1404, %v1367
        %v1406 = vpop.permute.xlu0 %1405
        %v1408 = vmul.f32 %v1402, %v590
        %v1409 = vmul.f32 %v1406, %v596
        %1412 = vrot.lane.b32.xlu0 %v1408, 112
        %v1413 = vpop.permute.xlu0 %1412
        %1414 = vrot.lane.b32.xlu0 %v1409, 112
        %v1415 = vpop.permute.xlu0 %1414
        %v1418 = vadd.f32 %v1398, %v1413
        %v1419 = vadd.f32 %v1399, %v1415
        %1420 = vset.pattern.permute.xlu0 3
        %1421 = vperm.xlu0 %1420, %v1366
        %v1422 = vpop.permute.xlu0 %1421
        %1424 = vset.pattern.permute.xlu0 3
        %1425 = vperm.xlu0 %1424, %v1367
        %v1426 = vpop.permute.xlu0 %1425
        %v1428 = vmul.f32 %v1422, %v590
        %v1429 = vmul.f32 %v1426, %v596
        %1432 = vrot.lane.b32.xlu0 %v1428, 104
        %v1433 = vpop.permute.xlu0 %1432
        %1434 = vrot.lane.b32.xlu0 %v1429, 104
        %v1435 = vpop.permute.xlu0 %1434
        %v1438 = vadd.f32 %v1418, %v1433
        %v1439 = vadd.f32 %v1419, %v1435
        %1440 = vset.pattern.permute.xlu0 4
        %1441 = vperm.xlu0 %1440, %v1366
        %v1442 = vpop.permute.xlu0 %1441
        %1444 = vset.pattern.permute.xlu0 4
        %1445 = vperm.xlu0 %1444, %v1367
        %v1446 = vpop.permute.xlu0 %1445
        %v1448 = vmul.f32 %v1442, %v590
        %v1449 = vmul.f32 %v1446, %v596
        %1452 = vrot.lane.b32.xlu0 %v1448, 96
        %v1453 = vpop.permute.xlu0 %1452
        %1454 = vrot.lane.b32.xlu0 %v1449, 96
        %v1455 = vpop.permute.xlu0 %1454
        %v1458 = vadd.f32 %v1438, %v1453
        %v1459 = vadd.f32 %v1439, %v1455
        %1460 = vset.pattern.permute.xlu0 5
        %1461 = vperm.xlu0 %1460, %v1366
        %v1462 = vpop.permute.xlu0 %1461
        %1464 = vset.pattern.permute.xlu0 5
        %1465 = vperm.xlu0 %1464, %v1367
        %v1466 = vpop.permute.xlu0 %1465
        %v1468 = vmul.f32 %v1462, %v590
        %v1469 = vmul.f32 %v1466, %v596
        %1472 = vrot.lane.b32.xlu0 %v1468, 88
        %v1473 = vpop.permute.xlu0 %1472
        %1474 = vrot.lane.b32.xlu0 %v1469, 88
        %v1475 = vpop.permute.xlu0 %1474
        %v1478 = vadd.f32 %v1458, %v1473
        %v1479 = vadd.f32 %v1459, %v1475
        %1480 = vset.pattern.permute.xlu0 6
        %1481 = vperm.xlu0 %1480, %v1366
        %v1482 = vpop.permute.xlu0 %1481
        %1484 = vset.pattern.permute.xlu0 6
        %1485 = vperm.xlu0 %1484, %v1367
        %v1486 = vpop.permute.xlu0 %1485
        %v1488 = vmul.f32 %v1482, %v590
        %v1489 = vmul.f32 %v1486, %v596
        %1492 = vrot.lane.b32.xlu0 %v1488, 80
        %v1493 = vpop.permute.xlu0 %1492
        %1494 = vrot.lane.b32.xlu0 %v1489, 80
        %v1495 = vpop.permute.xlu0 %1494
        %v1498 = vadd.f32 %v1478, %v1493
        %v1499 = vadd.f32 %v1479, %v1495
        %1500 = vset.pattern.permute.xlu0 7
        %1501 = vperm.xlu0 %1500, %v1366
        %v1502 = vpop.permute.xlu0 %1501
        %1504 = vset.pattern.permute.xlu0 7
        %1505 = vperm.xlu0 %1504, %v1367
        %v1506 = vpop.permute.xlu0 %1505
        %v1508 = vmul.f32 %v1502, %v590
        %v1509 = vmul.f32 %v1506, %v596
        %1512 = vrot.lane.b32.xlu0 %v1508, 72
        %v1513 = vpop.permute.xlu0 %1512
        %1514 = vrot.lane.b32.xlu0 %v1509, 72
        %v1515 = vpop.permute.xlu0 %1514
        %v1518 = vadd.f32 %v1498, %v1513
        %v1519 = vadd.f32 %v1499, %v1515
        %1520 = vst.msk [vmem:[#allocation2 + $0x20] sm:$0xff] %vm608, %v1518
        %1521 = vst.msk [vmem:[#allocation2 + $0x28] sm:$0xff] %vm608, %v1519
        %1522 = vrot.lane.b32.xlu0 %v588, 88
        %v1523 = vpop.permute.xlu0 %1522
        %1524 = vrot.lane.b32.xlu0 %v594, 88
        %v1525 = vpop.permute.xlu0 %1524
        %v1528 = vmul.f32 %v588, %v1523
        %v1529 = vmul.f32 %v594, %v1525
        %1532 = vrot.lane.b32.xlu0 %v1528, 104
        %v1533 = vpop.permute.xlu0 %1532
        %1534 = vrot.lane.b32.xlu0 %v1529, 104
        %v1535 = vpop.permute.xlu0 %1534
        %v1538 = vsel %vm608, %v1533, 0.0
        %1539 = vadd.xlane.f32.xlu0 %v1538
        %v1540 = vpop.xlane.xlu0 %1539
        %v1541 = vsel %vm608, %v1535, 0.0
        %1542 = vadd.xlane.f32.xlu0 %v1541
        %v1543 = vpop.xlane.xlu0 %1542
        %1544 = vrot.lane.b32.xlu0 %v1230, 104
        %v1545 = vpop.permute.xlu0 %1544
        %1546 = vrot.lane.b32.xlu0 %v1231, 104
        %v1547 = vpop.permute.xlu0 %1546
        %v1550 = vsel %vm608, %v1545, 0.0
        %1551 = vadd.xlane.f32.xlu0 %v1550
        %v1552 = vpop.xlane.xlu0 %1551
        %v1553 = vsel %vm608, %v1547, 0.0
        %1554 = vadd.xlane.f32.xlu0 %v1553
        %v1555 = vpop.xlane.xlu0 %1554
        %1556 = vrot.lane.b32.xlu0 %v918, 104
        %v1557 = vpop.permute.xlu0 %1556
        %1558 = vrot.lane.b32.xlu0 %v919, 104
        %v1559 = vpop.permute.xlu0 %1558
        %v1562 = vsel %vm608, %v1557, 0.0
        %1563 = vadd.xlane.f32.xlu0 %v1562
        %v1564 = vpop.xlane.xlu0 %1563
        %v1565 = vsel %vm608, %v1559, 0.0
        %1566 = vadd.xlane.f32.xlu0 %v1565
        %v1567 = vpop.xlane.xlu0 %1566
        %1568 = vrot.lane.b32.xlu0 %v606, 104
        %v1569 = vpop.permute.xlu0 %1568
        %1570 = vrot.lane.b32.xlu0 %v607, 104
        %v1571 = vpop.permute.xlu0 %1570
        %v1574 = vsel %vm608, %v1569, 0.0
        %1575 = vadd.xlane.f32.xlu0 %v1574
        %v1576 = vpop.xlane.xlu0 %1575
        %v1577 = vsel %vm608, %v1571, 0.0
        %1578 = vadd.xlane.f32.xlu0 %v1577
        %v1579 = vpop.xlane.xlu0 %1578
        %1580 = vrot.lane.b32.xlu0 %v621, 104
        %v1581 = vpop.permute.xlu0 %1580
        %1582 = vrot.lane.b32.xlu0 %v622, 104
        %v1583 = vpop.permute.xlu0 %1582
        %v1586 = vsel %vm608, %v1581, 0.0
        %1587 = vadd.xlane.f32.xlu0 %v1586
        %v1588 = vpop.xlane.xlu0 %1587
        %v1589 = vsel %vm608, %v1583, 0.0
        %1590 = vadd.xlane.f32.xlu0 %v1589
        %v1591 = vpop.xlane.xlu0 %1590
        %1592 = vrot.lane.b32.xlu0 %v635, 104
        %v1593 = vpop.permute.xlu0 %1592
        %1594 = vrot.lane.b32.xlu0 %v636, 104
        %v1595 = vpop.permute.xlu0 %1594
        %v1598 = vsel %vm608, %v1593, 0.0
        %1599 = vadd.xlane.f32.xlu0 %v1598
        %v1600 = vpop.xlane.xlu0 %1599
        %v1601 = vsel %vm608, %v1595, 0.0
        %1602 = vadd.xlane.f32.xlu0 %v1601
        %v1603 = vpop.xlane.xlu0 %1602
        %1604 = vrot.lane.b32.xlu0 %v649, 104
        %v1605 = vpop.permute.xlu0 %1604
        %1606 = vrot.lane.b32.xlu0 %v650, 104
        %v1607 = vpop.permute.xlu0 %1606
        %v1610 = vsel %vm608, %v1605, 0.0
        %1611 = vadd.xlane.f32.xlu0 %v1610
        %v1612 = vpop.xlane.xlu0 %1611
        %v1613 = vsel %vm608, %v1607, 0.0
        %1614 = vadd.xlane.f32.xlu0 %v1613
        %v1615 = vpop.xlane.xlu0 %1614
        %1616 = vrot.lane.b32.xlu0 %v663, 104
        %v1617 = vpop.permute.xlu0 %1616
        %1618 = vrot.lane.b32.xlu0 %v664, 104
        %v1619 = vpop.permute.xlu0 %1618
        %v1622 = vsel %vm608, %v1617, 0.0
        %1623 = vadd.xlane.f32.xlu0 %v1622
        %v1624 = vpop.xlane.xlu0 %1623
        %v1625 = vsel %vm608, %v1619, 0.0
        %1626 = vadd.xlane.f32.xlu0 %v1625
        %v1627 = vpop.xlane.xlu0 %1626
        %v1628 = vsel %vm713, %v1540, %v1552
        %v1629 = vsel %vm713, %v1543, %v1555
        %v1630 = vsel %vm716, %v1628, %v1564
        %v1631 = vsel %vm716, %v1629, %v1567
        %v1632 = vsel %vm719, %v1630, %v1576
        %v1633 = vsel %vm719, %v1631, %v1579
        %v1634 = vsel %vm722, %v1632, %v1588
        %v1635 = vsel %vm722, %v1633, %v1591
        %v1636 = vsel %vm725, %v1634, %v1600
        %v1637 = vsel %vm725, %v1635, %v1603
        %v1638 = vsel %vm728, %v1636, %v1612
        %v1639 = vsel %vm728, %v1637, %v1615
        %v1640 = vsel %vm731, %v1638, %v1624
        %v1641 = vsel %vm731, %v1639, %v1627
        %v1642 = vmul.f32 %v1640, 0.35355338
        %v1643 = vmul.f32 %v1641, 0.35355338
        %v1644 = vsel %vm608, %v1642, -inf
        %1645 = vmax.xlane.f32.xlu0 %v1644
        %v1646 = vpop.xlane.xlu0 %1645
        %v1647 = vsel %vm608, %v1643, -inf
        %1648 = vmax.xlane.f32.xlu0 %v1647
        %v1649 = vpop.xlane.xlu0 %1648
        %v1650 = vsub.f32 %v1642, %v1646
        %v1651 = vsub.f32 %v1643, %v1649
        %v1652 = vmul.f32 %v1650, 1.442695
        %v1653 = vpow.pop %v1652
        %v1654 = vmul.f32 %v1651, 1.442695
        %v1655 = vpow.pop %v1654
        %v1656 = vsel %vm608, %v1653, 0.0
        %1657 = vadd.xlane.f32.xlu0 %v1656
        %v1658 = vpop.xlane.xlu0 %1657
        %v1659 = vsel %vm608, %v1655, 0.0
        %1660 = vadd.xlane.f32.xlu0 %v1659
        %v1661 = vpop.xlane.xlu0 %1660
        %v1662 = vrcp.pop %v1658
        %v1663 = vrcp.pop %v1661
        %v1664 = vmul.f32 %v1653, %v1662
        %v1665 = vmul.f32 %v1655, %v1663
        %1667 = vset.pattern.permute.xlu0 0
        %1668 = vperm.xlu0 %1667, %v1664
        %v1669 = vpop.permute.xlu0 %1668
        %1672 = vset.pattern.permute.xlu0 0
        %1673 = vperm.xlu0 %1672, %v1665
        %v1674 = vpop.permute.xlu0 %1673
        %v1676 = vmul.f32 %v1669, %v590
        %v1677 = vmul.f32 %v1674, %v596
        %1678 = vset.pattern.permute.xlu0 1
        %1679 = vperm.xlu0 %1678, %v1664
        %v1680 = vpop.permute.xlu0 %1679
        %1682 = vset.pattern.permute.xlu0 1
        %1683 = vperm.xlu0 %1682, %v1665
        %v1684 = vpop.permute.xlu0 %1683
        %v1686 = vmul.f32 %v1680, %v590
        %v1687 = vmul.f32 %v1684, %v596
        %1690 = vrot.lane.b32.xlu0 %v1686, 120
        %v1691 = vpop.permute.xlu0 %1690
        %1692 = vrot.lane.b32.xlu0 %v1687, 120
        %v1693 = vpop.permute.xlu0 %1692
        %v1696 = vadd.f32 %v1676, %v1691
        %v1697 = vadd.f32 %v1677, %v1693
        %1698 = vset.pattern.permute.xlu0 2
        %1699 = vperm.xlu0 %1698, %v1664
        %v1700 = vpop.permute.xlu0 %1699
        %1702 = vset.pattern.permute.xlu0 2
        %1703 = vperm.xlu0 %1702, %v1665
        %v1704 = vpop.permute.xlu0 %1703
        %v1706 = vmul.f32 %v1700, %v590
        %v1707 = vmul.f32 %v1704, %v596
        %1710 = vrot.lane.b32.xlu0 %v1706, 112
        %v1711 = vpop.permute.xlu0 %1710
        %1712 = vrot.lane.b32.xlu0 %v1707, 112
        %v1713 = vpop.permute.xlu0 %1712
        %v1716 = vadd.f32 %v1696, %v1711
        %v1717 = vadd.f32 %v1697, %v1713
        %1718 = vset.pattern.permute.xlu0 3
        %1719 = vperm.xlu0 %1718, %v1664
        %v1720 = vpop.permute.xlu0 %1719
        %1722 = vset.pattern.permute.xlu0 3
        %1723 = vperm.xlu0 %1722, %v1665
        %v1724 = vpop.permute.xlu0 %1723
        %v1726 = vmul.f32 %v1720, %v590
        %v1727 = vmul.f32 %v1724, %v596
        %1730 = vrot.lane.b32.xlu0 %v1726, 104
        %v1731 = vpop.permute.xlu0 %1730
        %1732 = vrot.lane.b32.xlu0 %v1727, 104
        %v1733 = vpop.permute.xlu0 %1732
        %v1736 = vadd.f32 %v1716, %v1731
        %v1737 = vadd.f32 %v1717, %v1733
        %1738 = vset.pattern.permute.xlu0 4
        %1739 = vperm.xlu0 %1738, %v1664
        %v1740 = vpop.permute.xlu0 %1739
        %1742 = vset.pattern.permute.xlu0 4
        %1743 = vperm.xlu0 %1742, %v1665
        %v1744 = vpop.permute.xlu0 %1743
        %v1746 = vmul.f32 %v1740, %v590
        %v1747 = vmul.f32 %v1744, %v596
        %1750 = vrot.lane.b32.xlu0 %v1746, 96
        %v1751 = vpop.permute.xlu0 %1750
        %1752 = vrot.lane.b32.xlu0 %v1747, 96
        %v1753 = vpop.permute.xlu0 %1752
        %v1756 = vadd.f32 %v1736, %v1751
        %v1757 = vadd.f32 %v1737, %v1753
        %1758 = vset.pattern.permute.xlu0 5
        %1759 = vperm.xlu0 %1758, %v1664
        %v1760 = vpop.permute.xlu0 %1759
        %1762 = vset.pattern.permute.xlu0 5
        %1763 = vperm.xlu0 %1762, %v1665
        %v1764 = vpop.permute.xlu0 %1763
        %v1766 = vmul.f32 %v1760, %v590
        %v1767 = vmul.f32 %v1764, %v596
        %1770 = vrot.lane.b32.xlu0 %v1766, 88
        %v1771 = vpop.permute.xlu0 %1770
        %1772 = vrot.lane.b32.xlu0 %v1767, 88
        %v1773 = vpop.permute.xlu0 %1772
        %v1776 = vadd.f32 %v1756, %v1771
        %v1777 = vadd.f32 %v1757, %v1773
        %1778 = vset.pattern.permute.xlu0 6
        %1779 = vperm.xlu0 %1778, %v1664
        %v1780 = vpop.permute.xlu0 %1779
        %1782 = vset.pattern.permute.xlu0 6
        %1783 = vperm.xlu0 %1782, %v1665
        %v1784 = vpop.permute.xlu0 %1783
        %v1786 = vmul.f32 %v1780, %v590
        %v1787 = vmul.f32 %v1784, %v596
        %1790 = vrot.lane.b32.xlu0 %v1786, 80
        %v1791 = vpop.permute.xlu0 %1790
        %1792 = vrot.lane.b32.xlu0 %v1787, 80
        %v1793 = vpop.permute.xlu0 %1792
        %v1796 = vadd.f32 %v1776, %v1791
        %v1797 = vadd.f32 %v1777, %v1793
        %1798 = vset.pattern.permute.xlu0 7
        %1799 = vperm.xlu0 %1798, %v1664
        %v1800 = vpop.permute.xlu0 %1799
        %1802 = vset.pattern.permute.xlu0 7
        %1803 = vperm.xlu0 %1802, %v1665
        %v1804 = vpop.permute.xlu0 %1803
        %v1806 = vmul.f32 %v1800, %v590
        %v1807 = vmul.f32 %v1804, %v596
        %1810 = vrot.lane.b32.xlu0 %v1806, 72
        %v1811 = vpop.permute.xlu0 %1810
        %1812 = vrot.lane.b32.xlu0 %v1807, 72
        %v1813 = vpop.permute.xlu0 %1812
        %v1816 = vadd.f32 %v1796, %v1811
        %v1817 = vadd.f32 %v1797, %v1813
        %1818 = vst.msk [vmem:[#allocation2 + $0x30] sm:$0xff] %vm608, %v1816
        %1819 = vst.msk [vmem:[#allocation2 + $0x38] sm:$0xff] %vm608, %v1817
        %1820 = vrot.lane.b32.xlu0 %v588, 96
        %v1821 = vpop.permute.xlu0 %1820
        %1822 = vrot.lane.b32.xlu0 %v594, 96
        %v1823 = vpop.permute.xlu0 %1822
        %v1826 = vmul.f32 %v588, %v1821
        %v1827 = vmul.f32 %v594, %v1823
        %1830 = vrot.lane.b32.xlu0 %v1826, 96
        %v1831 = vpop.permute.xlu0 %1830
        %1832 = vrot.lane.b32.xlu0 %v1827, 96
        %v1833 = vpop.permute.xlu0 %1832
        %v1836 = vsel %vm608, %v1831, 0.0
        %1837 = vadd.xlane.f32.xlu0 %v1836
        %v1838 = vpop.xlane.xlu0 %1837
        %v1839 = vsel %vm608, %v1833, 0.0
        %1840 = vadd.xlane.f32.xlu0 %v1839
        %v1841 = vpop.xlane.xlu0 %1840
        %1842 = vrot.lane.b32.xlu0 %v1528, 96
        %v1843 = vpop.permute.xlu0 %1842
        %1844 = vrot.lane.b32.xlu0 %v1529, 96
        %v1845 = vpop.permute.xlu0 %1844
        %v1848 = vsel %vm608, %v1843, 0.0
        %1849 = vadd.xlane.f32.xlu0 %v1848
        %v1850 = vpop.xlane.xlu0 %1849
        %v1851 = vsel %vm608, %v1845, 0.0
        %1852 = vadd.xlane.f32.xlu0 %v1851
        %v1853 = vpop.xlane.xlu0 %1852
        %1854 = vrot.lane.b32.xlu0 %v1230, 96
        %v1855 = vpop.permute.xlu0 %1854
        %1856 = vrot.lane.b32.xlu0 %v1231, 96
        %v1857 = vpop.permute.xlu0 %1856
        %v1860 = vsel %vm608, %v1855, 0.0
        %1861 = vadd.xlane.f32.xlu0 %v1860
        %v1862 = vpop.xlane.xlu0 %1861
        %v1863 = vsel %vm608, %v1857, 0.0
        %1864 = vadd.xlane.f32.xlu0 %v1863
        %v1865 = vpop.xlane.xlu0 %1864
        %1866 = vrot.lane.b32.xlu0 %v918, 96
        %v1867 = vpop.permute.xlu0 %1866
        %1868 = vrot.lane.b32.xlu0 %v919, 96
        %v1869 = vpop.permute.xlu0 %1868
        %v1872 = vsel %vm608, %v1867, 0.0
        %1873 = vadd.xlane.f32.xlu0 %v1872
        %v1874 = vpop.xlane.xlu0 %1873
        %v1875 = vsel %vm608, %v1869, 0.0
        %1876 = vadd.xlane.f32.xlu0 %v1875
        %v1877 = vpop.xlane.xlu0 %1876
        %1878 = vrot.lane.b32.xlu0 %v606, 96
        %v1879 = vpop.permute.xlu0 %1878
        %1880 = vrot.lane.b32.xlu0 %v607, 96
        %v1881 = vpop.permute.xlu0 %1880
        %v1884 = vsel %vm608, %v1879, 0.0
        %1885 = vadd.xlane.f32.xlu0 %v1884
        %v1886 = vpop.xlane.xlu0 %1885
        %v1887 = vsel %vm608, %v1881, 0.0
        %1888 = vadd.xlane.f32.xlu0 %v1887
        %v1889 = vpop.xlane.xlu0 %1888
        %1890 = vrot.lane.b32.xlu0 %v621, 96
        %v1891 = vpop.permute.xlu0 %1890
        %1892 = vrot.lane.b32.xlu0 %v622, 96
        %v1893 = vpop.permute.xlu0 %1892
        %v1896 = vsel %vm608, %v1891, 0.0
        %1897 = vadd.xlane.f32.xlu0 %v1896
        %v1898 = vpop.xlane.xlu0 %1897
        %v1899 = vsel %vm608, %v1893, 0.0
        %1900 = vadd.xlane.f32.xlu0 %v1899
        %v1901 = vpop.xlane.xlu0 %1900
        %1902 = vrot.lane.b32.xlu0 %v635, 96
        %v1903 = vpop.permute.xlu0 %1902
        %1904 = vrot.lane.b32.xlu0 %v636, 96
        %v1905 = vpop.permute.xlu0 %1904
        %v1908 = vsel %vm608, %v1903, 0.0
        %1909 = vadd.xlane.f32.xlu0 %v1908
        %v1910 = vpop.xlane.xlu0 %1909
        %v1911 = vsel %vm608, %v1905, 0.0
        %1912 = vadd.xlane.f32.xlu0 %v1911
        %v1913 = vpop.xlane.xlu0 %1912
        %1914 = vrot.lane.b32.xlu0 %v649, 96
        %v1915 = vpop.permute.xlu0 %1914
        %1916 = vrot.lane.b32.xlu0 %v650, 96
        %v1917 = vpop.permute.xlu0 %1916
        %v1920 = vsel %vm608, %v1915, 0.0
        %1921 = vadd.xlane.f32.xlu0 %v1920
        %v1922 = vpop.xlane.xlu0 %1921
        %v1923 = vsel %vm608, %v1917, 0.0
        %1924 = vadd.xlane.f32.xlu0 %v1923
        %v1925 = vpop.xlane.xlu0 %1924
        %v1926 = vsel %vm713, %v1838, %v1850
        %v1927 = vsel %vm713, %v1841, %v1853
        %v1928 = vsel %vm716, %v1926, %v1862
        %v1929 = vsel %vm716, %v1927, %v1865
        %v1930 = vsel %vm719, %v1928, %v1874
        %v1931 = vsel %vm719, %v1929, %v1877
        %v1932 = vsel %vm722, %v1930, %v1886
        %v1933 = vsel %vm722, %v1931, %v1889
        %v1934 = vsel %vm725, %v1932, %v1898
        %v1935 = vsel %vm725, %v1933, %v1901
        %v1936 = vsel %vm728, %v1934, %v1910
        %v1937 = vsel %vm728, %v1935, %v1913
        %v1938 = vsel %vm731, %v1936, %v1922
        %v1939 = vsel %vm731, %v1937, %v1925
        %v1940 = vmul.f32 %v1938, 0.35355338
        %v1941 = vmul.f32 %v1939, 0.35355338
        %v1942 = vsel %vm608, %v1940, -inf
        %1943 = vmax.xlane.f32.xlu0 %v1942
        %v1944 = vpop.xlane.xlu0 %1943
        %v1945 = vsel %vm608, %v1941, -inf
        %1946 = vmax.xlane.f32.xlu0 %v1945
        %v1947 = vpop.xlane.xlu0 %1946
        %v1948 = vsub.f32 %v1940, %v1944
        %v1949 = vsub.f32 %v1941, %v1947
        %v1950 = vmul.f32 %v1948, 1.442695
        %v1951 = vpow.pop %v1950
        %v1952 = vmul.f32 %v1949, 1.442695
        %v1953 = vpow.pop %v1952
        %v1954 = vsel %vm608, %v1951, 0.0
        %1955 = vadd.xlane.f32.xlu0 %v1954
        %v1956 = vpop.xlane.xlu0 %1955
        %v1957 = vsel %vm608, %v1953, 0.0
        %1958 = vadd.xlane.f32.xlu0 %v1957
        %v1959 = vpop.xlane.xlu0 %1958
        %v1960 = vrcp.pop %v1956
        %v1961 = vrcp.pop %v1959
        %v1962 = vmul.f32 %v1951, %v1960
        %v1963 = vmul.f32 %v1953, %v1961
        %1965 = vset.pattern.permute.xlu0 0
        %1966 = vperm.xlu0 %1965, %v1962
        %v1967 = vpop.permute.xlu0 %1966
        %1970 = vset.pattern.permute.xlu0 0
        %1971 = vperm.xlu0 %1970, %v1963
        %v1972 = vpop.permute.xlu0 %1971
        %v1974 = vmul.f32 %v1967, %v590
        %v1975 = vmul.f32 %v1972, %v596
        %1976 = vset.pattern.permute.xlu0 1
        %1977 = vperm.xlu0 %1976, %v1962
        %v1978 = vpop.permute.xlu0 %1977
        %1980 = vset.pattern.permute.xlu0 1
        %1981 = vperm.xlu0 %1980, %v1963
        %v1982 = vpop.permute.xlu0 %1981
        %v1984 = vmul.f32 %v1978, %v590
        %v1985 = vmul.f32 %v1982, %v596
        %1988 = vrot.lane.b32.xlu0 %v1984, 120
        %v1989 = vpop.permute.xlu0 %1988
        %1990 = vrot.lane.b32.xlu0 %v1985, 120
        %v1991 = vpop.permute.xlu0 %1990
        %v1994 = vadd.f32 %v1974, %v1989
        %v1995 = vadd.f32 %v1975, %v1991
        %1996 = vset.pattern.permute.xlu0 2
        %1997 = vperm.xlu0 %1996, %v1962
        %v1998 = vpop.permute.xlu0 %1997
        %2000 = vset.pattern.permute.xlu0 2
        %2001 = vperm.xlu0 %2000, %v1963
        %v2002 = vpop.permute.xlu0 %2001
        %v2004 = vmul.f32 %v1998, %v590
        %v2005 = vmul.f32 %v2002, %v596
        %2008 = vrot.lane.b32.xlu0 %v2004, 112
        %v2009 = vpop.permute.xlu0 %2008
        %2010 = vrot.lane.b32.xlu0 %v2005, 112
        %v2011 = vpop.permute.xlu0 %2010
        %v2014 = vadd.f32 %v1994, %v2009
        %v2015 = vadd.f32 %v1995, %v2011
        %2016 = vset.pattern.permute.xlu0 3
        %2017 = vperm.xlu0 %2016, %v1962
        %v2018 = vpop.permute.xlu0 %2017
        %2020 = vset.pattern.permute.xlu0 3
        %2021 = vperm.xlu0 %2020, %v1963
        %v2022 = vpop.permute.xlu0 %2021
        %v2024 = vmul.f32 %v2018, %v590
        %v2025 = vmul.f32 %v2022, %v596
        %2028 = vrot.lane.b32.xlu0 %v2024, 104
        %v2029 = vpop.permute.xlu0 %2028
        %2030 = vrot.lane.b32.xlu0 %v2025, 104
        %v2031 = vpop.permute.xlu0 %2030
        %v2034 = vadd.f32 %v2014, %v2029
        %v2035 = vadd.f32 %v2015, %v2031
        %2036 = vset.pattern.permute.xlu0 4
        %2037 = vperm.xlu0 %2036, %v1962
        %v2038 = vpop.permute.xlu0 %2037
        %2040 = vset.pattern.permute.xlu0 4
        %2041 = vperm.xlu0 %2040, %v1963
        %v2042 = vpop.permute.xlu0 %2041
        %v2044 = vmul.f32 %v2038, %v590
        %v2045 = vmul.f32 %v2042, %v596
        %2048 = vrot.lane.b32.xlu0 %v2044, 96
        %v2049 = vpop.permute.xlu0 %2048
        %2050 = vrot.lane.b32.xlu0 %v2045, 96
        %v2051 = vpop.permute.xlu0 %2050
        %v2054 = vadd.f32 %v2034, %v2049
        %v2055 = vadd.f32 %v2035, %v2051
        %2056 = vset.pattern.permute.xlu0 5
        %2057 = vperm.xlu0 %2056, %v1962
        %v2058 = vpop.permute.xlu0 %2057
        %2060 = vset.pattern.permute.xlu0 5
        %2061 = vperm.xlu0 %2060, %v1963
        %v2062 = vpop.permute.xlu0 %2061
        %v2064 = vmul.f32 %v2058, %v590
        %v2065 = vmul.f32 %v2062, %v596
        %2068 = vrot.lane.b32.xlu0 %v2064, 88
        %v2069 = vpop.permute.xlu0 %2068
        %2070 = vrot.lane.b32.xlu0 %v2065, 88
        %v2071 = vpop.permute.xlu0 %2070
        %v2074 = vadd.f32 %v2054, %v2069
        %v2075 = vadd.f32 %v2055, %v2071
        %2076 = vset.pattern.permute.xlu0 6
        %2077 = vperm.xlu0 %2076, %v1962
        %v2078 = vpop.permute.xlu0 %2077
        %2080 = vset.pattern.permute.xlu0 6
        %2081 = vperm.xlu0 %2080, %v1963
        %v2082 = vpop.permute.xlu0 %2081
        %v2084 = vmul.f32 %v2078, %v590
        %v2085 = vmul.f32 %v2082, %v596
        %2088 = vrot.lane.b32.xlu0 %v2084, 80
        %v2089 = vpop.permute.xlu0 %2088
        %2090 = vrot.lane.b32.xlu0 %v2085, 80
        %v2091 = vpop.permute.xlu0 %2090
        %v2094 = vadd.f32 %v2074, %v2089
        %v2095 = vadd.f32 %v2075, %v2091
        %2096 = vset.pattern.permute.xlu0 7
        %2097 = vperm.xlu0 %2096, %v1962
        %v2098 = vpop.permute.xlu0 %2097
        %2100 = vset.pattern.permute.xlu0 7
        %2101 = vperm.xlu0 %2100, %v1963
        %v2102 = vpop.permute.xlu0 %2101
        %v2104 = vmul.f32 %v2098, %v590
        %v2105 = vmul.f32 %v2102, %v596
        %2108 = vrot.lane.b32.xlu0 %v2104, 72
        %v2109 = vpop.permute.xlu0 %2108
        %2110 = vrot.lane.b32.xlu0 %v2105, 72
        %v2111 = vpop.permute.xlu0 %2110
        %v2114 = vadd.f32 %v2094, %v2109
        %v2115 = vadd.f32 %v2095, %v2111
        %2116 = vst.msk [vmem:[#allocation2 + $0x40] sm:$0xff] %vm608, %v2114
        %2117 = vst.msk [vmem:[#allocation2 + $0x48] sm:$0xff] %vm608, %v2115
        %2118 = vrot.lane.b32.xlu0 %v588, 104
        %v2119 = vpop.permute.xlu0 %2118
        %2120 = vrot.lane.b32.xlu0 %v594, 104
        %v2121 = vpop.permute.xlu0 %2120
        %v2124 = vmul.f32 %v588, %v2119
        %v2125 = vmul.f32 %v594, %v2121
        %2128 = vrot.lane.b32.xlu0 %v2124, 88
        %v2129 = vpop.permute.xlu0 %2128
        %2130 = vrot.lane.b32.xlu0 %v2125, 88
        %v2131 = vpop.permute.xlu0 %2130
        %v2134 = vsel %vm608, %v2129, 0.0
        %2135 = vadd.xlane.f32.xlu0 %v2134
        %v2136 = vpop.xlane.xlu0 %2135
        %v2137 = vsel %vm608, %v2131, 0.0
        %2138 = vadd.xlane.f32.xlu0 %v2137
        %v2139 = vpop.xlane.xlu0 %2138
        %2140 = vrot.lane.b32.xlu0 %v1826, 88
        %v2141 = vpop.permute.xlu0 %2140
        %2142 = vrot.lane.b32.xlu0 %v1827, 88
        %v2143 = vpop.permute.xlu0 %2142
        %v2146 = vsel %vm608, %v2141, 0.0
        %2147 = vadd.xlane.f32.xlu0 %v2146
        %v2148 = vpop.xlane.xlu0 %2147
        %v2149 = vsel %vm608, %v2143, 0.0
        %2150 = vadd.xlane.f32.xlu0 %v2149
        %v2151 = vpop.xlane.xlu0 %2150
        %2152 = vrot.lane.b32.xlu0 %v1528, 88
        %v2153 = vpop.permute.xlu0 %2152
        %2154 = vrot.lane.b32.xlu0 %v1529, 88
        %v2155 = vpop.permute.xlu0 %2154
        %v2158 = vsel %vm608, %v2153, 0.0
        %2159 = vadd.xlane.f32.xlu0 %v2158
        %v2160 = vpop.xlane.xlu0 %2159
        %v2161 = vsel %vm608, %v2155, 0.0
        %2162 = vadd.xlane.f32.xlu0 %v2161
        %v2163 = vpop.xlane.xlu0 %2162
        %2164 = vrot.lane.b32.xlu0 %v1230, 88
        %v2165 = vpop.permute.xlu0 %2164
        %2166 = vrot.lane.b32.xlu0 %v1231, 88
        %v2167 = vpop.permute.xlu0 %2166
        %v2170 = vsel %vm608, %v2165, 0.0
        %2171 = vadd.xlane.f32.xlu0 %v2170
        %v2172 = vpop.xlane.xlu0 %2171
        %v2173 = vsel %vm608, %v2167, 0.0
        %2174 = vadd.xlane.f32.xlu0 %v2173
        %v2175 = vpop.xlane.xlu0 %2174
        %2176 = vrot.lane.b32.xlu0 %v918, 88
        %v2177 = vpop.permute.xlu0 %2176
        %2178 = vrot.lane.b32.xlu0 %v919, 88
        %v2179 = vpop.permute.xlu0 %2178
        %v2182 = vsel %vm608, %v2177, 0.0
        %2183 = vadd.xlane.f32.xlu0 %v2182
        %v2184 = vpop.xlane.xlu0 %2183
        %v2185 = vsel %vm608, %v2179, 0.0
        %2186 = vadd.xlane.f32.xlu0 %v2185
        %v2187 = vpop.xlane.xlu0 %2186
        %2188 = vrot.lane.b32.xlu0 %v606, 88
        %v2189 = vpop.permute.xlu0 %2188
        %2190 = vrot.lane.b32.xlu0 %v607, 88
        %v2191 = vpop.permute.xlu0 %2190
        %v2194 = vsel %vm608, %v2189, 0.0
        %2195 = vadd.xlane.f32.xlu0 %v2194
        %v2196 = vpop.xlane.xlu0 %2195
        %v2197 = vsel %vm608, %v2191, 0.0
        %2198 = vadd.xlane.f32.xlu0 %v2197
        %v2199 = vpop.xlane.xlu0 %2198
        %2200 = vrot.lane.b32.xlu0 %v621, 88
        %v2201 = vpop.permute.xlu0 %2200
        %2202 = vrot.lane.b32.xlu0 %v622, 88
        %v2203 = vpop.permute.xlu0 %2202
        %v2206 = vsel %vm608, %v2201, 0.0
        %2207 = vadd.xlane.f32.xlu0 %v2206
        %v2208 = vpop.xlane.xlu0 %2207
        %v2209 = vsel %vm608, %v2203, 0.0
        %2210 = vadd.xlane.f32.xlu0 %v2209
        %v2211 = vpop.xlane.xlu0 %2210
        %2212 = vrot.lane.b32.xlu0 %v635, 88
        %v2213 = vpop.permute.xlu0 %2212
        %2214 = vrot.lane.b32.xlu0 %v636, 88
        %v2215 = vpop.permute.xlu0 %2214
        %v2218 = vsel %vm608, %v2213, 0.0
        %2219 = vadd.xlane.f32.xlu0 %v2218
        %v2220 = vpop.xlane.xlu0 %2219
        %v2221 = vsel %vm608, %v2215, 0.0
        %2222 = vadd.xlane.f32.xlu0 %v2221
        %v2223 = vpop.xlane.xlu0 %2222
        %v2224 = vsel %vm713, %v2136, %v2148
        %v2225 = vsel %vm713, %v2139, %v2151
        %v2226 = vsel %vm716, %v2224, %v2160
        %v2227 = vsel %vm716, %v2225, %v2163
        %v2228 = vsel %vm719, %v2226, %v2172
        %v2229 = vsel %vm719, %v2227, %v2175
        %v2230 = vsel %vm722, %v2228, %v2184
        %v2231 = vsel %vm722, %v2229, %v2187
        %v2232 = vsel %vm725, %v2230, %v2196
        %v2233 = vsel %vm725, %v2231, %v2199
        %v2234 = vsel %vm728, %v2232, %v2208
        %v2235 = vsel %vm728, %v2233, %v2211
        %v2236 = vsel %vm731, %v2234, %v2220
        %v2237 = vsel %vm731, %v2235, %v2223
        %v2238 = vmul.f32 %v2236, 0.35355338
        %v2239 = vmul.f32 %v2237, 0.35355338
        %v2240 = vsel %vm608, %v2238, -inf
        %2241 = vmax.xlane.f32.xlu0 %v2240
        %v2242 = vpop.xlane.xlu0 %2241
        %v2243 = vsel %vm608, %v2239, -inf
        %2244 = vmax.xlane.f32.xlu0 %v2243
        %v2245 = vpop.xlane.xlu0 %2244
        %v2246 = vsub.f32 %v2238, %v2242
        %v2247 = vsub.f32 %v2239, %v2245
        %v2248 = vmul.f32 %v2246, 1.442695
        %v2249 = vpow.pop %v2248
        %v2250 = vmul.f32 %v2247, 1.442695
        %v2251 = vpow.pop %v2250
        %v2252 = vsel %vm608, %v2249, 0.0
        %2253 = vadd.xlane.f32.xlu0 %v2252
        %v2254 = vpop.xlane.xlu0 %2253
        %v2255 = vsel %vm608, %v2251, 0.0
        %2256 = vadd.xlane.f32.xlu0 %v2255
        %v2257 = vpop.xlane.xlu0 %2256
        %v2258 = vrcp.pop %v2254
        %v2259 = vrcp.pop %v2257
        %v2260 = vmul.f32 %v2249, %v2258
        %v2261 = vmul.f32 %v2251, %v2259
        %2263 = vset.pattern.permute.xlu0 0
        %2264 = vperm.xlu0 %2263, %v2260
        %v2265 = vpop.permute.xlu0 %2264
        %2268 = vset.pattern.permute.xlu0 0
        %2269 = vperm.xlu0 %2268, %v2261
        %v2270 = vpop.permute.xlu0 %2269
        %v2272 = vmul.f32 %v2265, %v590
        %v2273 = vmul.f32 %v2270, %v596
        %2274 = vset.pattern.permute.xlu0 1
        %2275 = vperm.xlu0 %2274, %v2260
        %v2276 = vpop.permute.xlu0 %2275
        %2278 = vset.pattern.permute.xlu0 1
        %2279 = vperm.xlu0 %2278, %v2261
        %v2280 = vpop.permute.xlu0 %2279
        %v2282 = vmul.f32 %v2276, %v590
        %v2283 = vmul.f32 %v2280, %v596
        %2286 = vrot.lane.b32.xlu0 %v2282, 120
        %v2287 = vpop.permute.xlu0 %2286
        %2288 = vrot.lane.b32.xlu0 %v2283, 120
        %v2289 = vpop.permute.xlu0 %2288
        %v2292 = vadd.f32 %v2272, %v2287
        %v2293 = vadd.f32 %v2273, %v2289
        %2294 = vset.pattern.permute.xlu0 2
        %2295 = vperm.xlu0 %2294, %v2260
        %v2296 = vpop.permute.xlu0 %2295
        %2298 = vset.pattern.permute.xlu0 2
        %2299 = vperm.xlu0 %2298, %v2261
        %v2300 = vpop.permute.xlu0 %2299
        %v2302 = vmul.f32 %v2296, %v590
        %v2303 = vmul.f32 %v2300, %v596
        %2306 = vrot.lane.b32.xlu0 %v2302, 112
        %v2307 = vpop.permute.xlu0 %2306
        %2308 = vrot.lane.b32.xlu0 %v2303, 112
        %v2309 = vpop.permute.xlu0 %2308
        %v2312 = vadd.f32 %v2292, %v2307
        %v2313 = vadd.f32 %v2293, %v2309
        %2314 = vset.pattern.permute.xlu0 3
        %2315 = vperm.xlu0 %2314, %v2260
        %v2316 = vpop.permute.xlu0 %2315
        %2318 = vset.pattern.permute.xlu0 3
        %2319 = vperm.xlu0 %2318, %v2261
        %v2320 = vpop.permute.xlu0 %2319
        %v2322 = vmul.f32 %v2316, %v590
        %v2323 = vmul.f32 %v2320, %v596
        %2326 = vrot.lane.b32.xlu0 %v2322, 104
        %v2327 = vpop.permute.xlu0 %2326
        %2328 = vrot.lane.b32.xlu0 %v2323, 104
        %v2329 = vpop.permute.xlu0 %2328
        %v2332 = vadd.f32 %v2312, %v2327
        %v2333 = vadd.f32 %v2313, %v2329
        %2334 = vset.pattern.permute.xlu0 4
        %2335 = vperm.xlu0 %2334, %v2260
        %v2336 = vpop.permute.xlu0 %2335
        %2338 = vset.pattern.permute.xlu0 4
        %2339 = vperm.xlu0 %2338, %v2261
        %v2340 = vpop.permute.xlu0 %2339
        %v2342 = vmul.f32 %v2336, %v590
        %v2343 = vmul.f32 %v2340, %v596
        %2346 = vrot.lane.b32.xlu0 %v2342, 96
        %v2347 = vpop.permute.xlu0 %2346
        %2348 = vrot.lane.b32.xlu0 %v2343, 96
        %v2349 = vpop.permute.xlu0 %2348
        %v2352 = vadd.f32 %v2332, %v2347
        %v2353 = vadd.f32 %v2333, %v2349
        %2354 = vset.pattern.permute.xlu0 5
        %2355 = vperm.xlu0 %2354, %v2260
        %v2356 = vpop.permute.xlu0 %2355
        %2358 = vset.pattern.permute.xlu0 5
        %2359 = vperm.xlu0 %2358, %v2261
        %v2360 = vpop.permute.xlu0 %2359
        %v2362 = vmul.f32 %v2356, %v590
        %v2363 = vmul.f32 %v2360, %v596
        %2366 = vrot.lane.b32.xlu0 %v2362, 88
        %v2367 = vpop.permute.xlu0 %2366
        %2368 = vrot.lane.b32.xlu0 %v2363, 88
        %v2369 = vpop.permute.xlu0 %2368
        %v2372 = vadd.f32 %v2352, %v2367
        %v2373 = vadd.f32 %v2353, %v2369
        %2374 = vset.pattern.permute.xlu0 6
        %2375 = vperm.xlu0 %2374, %v2260
        %v2376 = vpop.permute.xlu0 %2375
        %2378 = vset.pattern.permute.xlu0 6
        %2379 = vperm.xlu0 %2378, %v2261
        %v2380 = vpop.permute.xlu0 %2379
        %v2382 = vmul.f32 %v2376, %v590
        %v2383 = vmul.f32 %v2380, %v596
        %2386 = vrot.lane.b32.xlu0 %v2382, 80
        %v2387 = vpop.permute.xlu0 %2386
        %2388 = vrot.lane.b32.xlu0 %v2383, 80
        %v2389 = vpop.permute.xlu0 %2388
        %v2392 = vadd.f32 %v2372, %v2387
        %v2393 = vadd.f32 %v2373, %v2389
        %2394 = vset.pattern.permute.xlu0 7
        %2395 = vperm.xlu0 %2394, %v2260
        %v2396 = vpop.permute.xlu0 %2395
        %2398 = vset.pattern.permute.xlu0 7
        %2399 = vperm.xlu0 %2398, %v2261
        %v2400 = vpop.permute.xlu0 %2399
        %v2402 = vmul.f32 %v2396, %v590
        %v2403 = vmul.f32 %v2400, %v596
        %2406 = vrot.lane.b32.xlu0 %v2402, 72
        %v2407 = vpop.permute.xlu0 %2406
        %2408 = vrot.lane.b32.xlu0 %v2403, 72
        %v2409 = vpop.permute.xlu0 %2408
        %v2412 = vadd.f32 %v2392, %v2407
        %v2413 = vadd.f32 %v2393, %v2409
        %2414 = vst.msk [vmem:[#allocation2 + $0x50] sm:$0xff] %vm608, %v2412
        %2415 = vst.msk [vmem:[#allocation2 + $0x58] sm:$0xff] %vm608, %v2413
        %2416 = vrot.lane.b32.xlu0 %v588, 112
        %v2417 = vpop.permute.xlu0 %2416
        %2418 = vrot.lane.b32.xlu0 %v594, 112
        %v2419 = vpop.permute.xlu0 %2418
        %v2422 = vmul.f32 %v588, %v2417
        %v2423 = vmul.f32 %v594, %v2419
        %2426 = vrot.lane.b32.xlu0 %v2422, 80
        %v2427 = vpop.permute.xlu0 %2426
        %2428 = vrot.lane.b32.xlu0 %v2423, 80
        %v2429 = vpop.permute.xlu0 %2428
        %v2432 = vsel %vm608, %v2427, 0.0
        %2433 = vadd.xlane.f32.xlu0 %v2432
        %v2434 = vpop.xlane.xlu0 %2433
        %v2435 = vsel %vm608, %v2429, 0.0
        %2436 = vadd.xlane.f32.xlu0 %v2435
        %v2437 = vpop.xlane.xlu0 %2436
        %2438 = vrot.lane.b32.xlu0 %v2124, 80
        %v2439 = vpop.permute.xlu0 %2438
        %2440 = vrot.lane.b32.xlu0 %v2125, 80
        %v2441 = vpop.permute.xlu0 %2440
        %v2444 = vsel %vm608, %v2439, 0.0
        %2445 = vadd.xlane.f32.xlu0 %v2444
        %v2446 = vpop.xlane.xlu0 %2445
        %v2447 = vsel %vm608, %v2441, 0.0
        %2448 = vadd.xlane.f32.xlu0 %v2447
        %v2449 = vpop.xlane.xlu0 %2448
        %2450 = vrot.lane.b32.xlu0 %v1826, 80
        %v2451 = vpop.permute.xlu0 %2450
        %2452 = vrot.lane.b32.xlu0 %v1827, 80
        %v2453 = vpop.permute.xlu0 %2452
        %v2456 = vsel %vm608, %v2451, 0.0
        %2457 = vadd.xlane.f32.xlu0 %v2456
        %v2458 = vpop.xlane.xlu0 %2457
        %v2459 = vsel %vm608, %v2453, 0.0
        %2460 = vadd.xlane.f32.xlu0 %v2459
        %v2461 = vpop.xlane.xlu0 %2460
        %2462 = vrot.lane.b32.xlu0 %v1528, 80
        %v2463 = vpop.permute.xlu0 %2462
        %2464 = vrot.lane.b32.xlu0 %v1529, 80
        %v2465 = vpop.permute.xlu0 %2464
        %v2468 = vsel %vm608, %v2463, 0.0
        %2469 = vadd.xlane.f32.xlu0 %v2468
        %v2470 = vpop.xlane.xlu0 %2469
        %v2471 = vsel %vm608, %v2465, 0.0
        %2472 = vadd.xlane.f32.xlu0 %v2471
        %v2473 = vpop.xlane.xlu0 %2472
        %2474 = vrot.lane.b32.xlu0 %v1230, 80
        %v2475 = vpop.permute.xlu0 %2474
        %2476 = vrot.lane.b32.xlu0 %v1231, 80
        %v2477 = vpop.permute.xlu0 %2476
        %v2480 = vsel %vm608, %v2475, 0.0
        %2481 = vadd.xlane.f32.xlu0 %v2480
        %v2482 = vpop.xlane.xlu0 %2481
        %v2483 = vsel %vm608, %v2477, 0.0
        %2484 = vadd.xlane.f32.xlu0 %v2483
        %v2485 = vpop.xlane.xlu0 %2484
        %2486 = vrot.lane.b32.xlu0 %v918, 80
        %v2487 = vpop.permute.xlu0 %2486
        %2488 = vrot.lane.b32.xlu0 %v919, 80
        %v2489 = vpop.permute.xlu0 %2488
        %v2492 = vsel %vm608, %v2487, 0.0
        %2493 = vadd.xlane.f32.xlu0 %v2492
        %v2494 = vpop.xlane.xlu0 %2493
        %v2495 = vsel %vm608, %v2489, 0.0
        %2496 = vadd.xlane.f32.xlu0 %v2495
        %v2497 = vpop.xlane.xlu0 %2496
        %2498 = vrot.lane.b32.xlu0 %v606, 80
        %v2499 = vpop.permute.xlu0 %2498
        %2500 = vrot.lane.b32.xlu0 %v607, 80
        %v2501 = vpop.permute.xlu0 %2500
        %v2504 = vsel %vm608, %v2499, 0.0
        %2505 = vadd.xlane.f32.xlu0 %v2504
        %v2506 = vpop.xlane.xlu0 %2505
        %v2507 = vsel %vm608, %v2501, 0.0
        %2508 = vadd.xlane.f32.xlu0 %v2507
        %v2509 = vpop.xlane.xlu0 %2508
        %2510 = vrot.lane.b32.xlu0 %v621, 80
        %v2511 = vpop.permute.xlu0 %2510
        %2512 = vrot.lane.b32.xlu0 %v622, 80
        %v2513 = vpop.permute.xlu0 %2512
        %v2516 = vsel %vm608, %v2511, 0.0
        %2517 = vadd.xlane.f32.xlu0 %v2516
        %v2518 = vpop.xlane.xlu0 %2517
        %v2519 = vsel %vm608, %v2513, 0.0
        %2520 = vadd.xlane.f32.xlu0 %v2519
        %v2521 = vpop.xlane.xlu0 %2520
        %v2522 = vsel %vm713, %v2434, %v2446
        %v2523 = vsel %vm713, %v2437, %v2449
        %v2524 = vsel %vm716, %v2522, %v2458
        %v2525 = vsel %vm716, %v2523, %v2461
        %v2526 = vsel %vm719, %v2524, %v2470
        %v2527 = vsel %vm719, %v2525, %v2473
        %v2528 = vsel %vm722, %v2526, %v2482
        %v2529 = vsel %vm722, %v2527, %v2485
        %v2530 = vsel %vm725, %v2528, %v2494
        %v2531 = vsel %vm725, %v2529, %v2497
        %v2532 = vsel %vm728, %v2530, %v2506
        %v2533 = vsel %vm728, %v2531, %v2509
        %v2534 = vsel %vm731, %v2532, %v2518
        %v2535 = vsel %vm731, %v2533, %v2521
        %v2536 = vmul.f32 %v2534, 0.35355338
        %v2537 = vmul.f32 %v2535, 0.35355338
        %v2538 = vsel %vm608, %v2536, -inf
        %2539 = vmax.xlane.f32.xlu0 %v2538
        %v2540 = vpop.xlane.xlu0 %2539
        %v2541 = vsel %vm608, %v2537, -inf
        %2542 = vmax.xlane.f32.xlu0 %v2541
        %v2543 = vpop.xlane.xlu0 %2542
        %v2544 = vsub.f32 %v2536, %v2540
        %v2545 = vsub.f32 %v2537, %v2543
        %v2546 = vmul.f32 %v2544, 1.442695
        %v2547 = vpow.pop %v2546
        %v2548 = vmul.f32 %v2545, 1.442695
        %v2549 = vpow.pop %v2548
        %v2550 = vsel %vm608, %v2547, 0.0
        %2551 = vadd.xlane.f32.xlu0 %v2550
        %v2552 = vpop.xlane.xlu0 %2551
        %v2553 = vsel %vm608, %v2549, 0.0
        %2554 = vadd.xlane.f32.xlu0 %v2553
        %v2555 = vpop.xlane.xlu0 %2554
        %v2556 = vrcp.pop %v2552
        %v2557 = vrcp.pop %v2555
        %v2558 = vmul.f32 %v2547, %v2556
        %v2559 = vmul.f32 %v2549, %v2557
        %2561 = vset.pattern.permute.xlu0 0
        %2562 = vperm.xlu0 %2561, %v2558
        %v2563 = vpop.permute.xlu0 %2562
        %2566 = vset.pattern.permute.xlu0 0
        %2567 = vperm.xlu0 %2566, %v2559
        %v2568 = vpop.permute.xlu0 %2567
        %v2570 = vmul.f32 %v2563, %v590
        %v2571 = vmul.f32 %v2568, %v596
        %2572 = vset.pattern.permute.xlu0 1
        %2573 = vperm.xlu0 %2572, %v2558
        %v2574 = vpop.permute.xlu0 %2573
        %2576 = vset.pattern.permute.xlu0 1
        %2577 = vperm.xlu0 %2576, %v2559
        %v2578 = vpop.permute.xlu0 %2577
        %v2580 = vmul.f32 %v2574, %v590
        %v2581 = vmul.f32 %v2578, %v596
        %2584 = vrot.lane.b32.xlu0 %v2580, 120
        %v2585 = vpop.permute.xlu0 %2584
        %2586 = vrot.lane.b32.xlu0 %v2581, 120
        %v2587 = vpop.permute.xlu0 %2586
        %v2590 = vadd.f32 %v2570, %v2585
        %v2591 = vadd.f32 %v2571, %v2587
        %2592 = vset.pattern.permute.xlu0 2
        %2593 = vperm.xlu0 %2592, %v2558
        %v2594 = vpop.permute.xlu0 %2593
        %2596 = vset.pattern.permute.xlu0 2
        %2597 = vperm.xlu0 %2596, %v2559
        %v2598 = vpop.permute.xlu0 %2597
        %v2600 = vmul.f32 %v2594, %v590
        %v2601 = vmul.f32 %v2598, %v596
        %2604 = vrot.lane.b32.xlu0 %v2600, 112
        %v2605 = vpop.permute.xlu0 %2604
        %2606 = vrot.lane.b32.xlu0 %v2601, 112
        %v2607 = vpop.permute.xlu0 %2606
        %v2610 = vadd.f32 %v2590, %v2605
        %v2611 = vadd.f32 %v2591, %v2607
        %2612 = vset.pattern.permute.xlu0 3
        %2613 = vperm.xlu0 %2612, %v2558
        %v2614 = vpop.permute.xlu0 %2613
        %2616 = vset.pattern.permute.xlu0 3
        %2617 = vperm.xlu0 %2616, %v2559
        %v2618 = vpop.permute.xlu0 %2617
        %v2620 = vmul.f32 %v2614, %v590
        %v2621 = vmul.f32 %v2618, %v596
        %2624 = vrot.lane.b32.xlu0 %v2620, 104
        %v2625 = vpop.permute.xlu0 %2624
        %2626 = vrot.lane.b32.xlu0 %v2621, 104
        %v2627 = vpop.permute.xlu0 %2626
        %v2630 = vadd.f32 %v2610, %v2625
        %v2631 = vadd.f32 %v2611, %v2627
        %2632 = vset.pattern.permute.xlu0 4
        %2633 = vperm.xlu0 %2632, %v2558
        %v2634 = vpop.permute.xlu0 %2633
        %2636 = vset.pattern.permute.xlu0 4
        %2637 = vperm.xlu0 %2636, %v2559
        %v2638 = vpop.permute.xlu0 %2637
        %v2640 = vmul.f32 %v2634, %v590
        %v2641 = vmul.f32 %v2638, %v596
        %2644 = vrot.lane.b32.xlu0 %v2640, 96
        %v2645 = vpop.permute.xlu0 %2644
        %2646 = vrot.lane.b32.xlu0 %v2641, 96
        %v2647 = vpop.permute.xlu0 %2646
        %v2650 = vadd.f32 %v2630, %v2645
        %v2651 = vadd.f32 %v2631, %v2647
        %2652 = vset.pattern.permute.xlu0 5
        %2653 = vperm.xlu0 %2652, %v2558
        %v2654 = vpop.permute.xlu0 %2653
        %2656 = vset.pattern.permute.xlu0 5
        %2657 = vperm.xlu0 %2656, %v2559
        %v2658 = vpop.permute.xlu0 %2657
        %v2660 = vmul.f32 %v2654, %v590
        %v2661 = vmul.f32 %v2658, %v596
        %2664 = vrot.lane.b32.xlu0 %v2660, 88
        %v2665 = vpop.permute.xlu0 %2664
        %2666 = vrot.lane.b32.xlu0 %v2661, 88
        %v2667 = vpop.permute.xlu0 %2666
        %v2670 = vadd.f32 %v2650, %v2665
        %v2671 = vadd.f32 %v2651, %v2667
        %2672 = vset.pattern.permute.xlu0 6
        %2673 = vperm.xlu0 %2672, %v2558
        %v2674 = vpop.permute.xlu0 %2673
        %2676 = vset.pattern.permute.xlu0 6
        %2677 = vperm.xlu0 %2676, %v2559
        %v2678 = vpop.permute.xlu0 %2677
        %v2680 = vmul.f32 %v2674, %v590
        %v2681 = vmul.f32 %v2678, %v596
        %2684 = vrot.lane.b32.xlu0 %v2680, 80
        %v2685 = vpop.permute.xlu0 %2684
        %2686 = vrot.lane.b32.xlu0 %v2681, 80
        %v2687 = vpop.permute.xlu0 %2686
        %v2690 = vadd.f32 %v2670, %v2685
        %v2691 = vadd.f32 %v2671, %v2687
        %2692 = vset.pattern.permute.xlu0 7
        %2693 = vperm.xlu0 %2692, %v2558
        %v2694 = vpop.permute.xlu0 %2693
        %2696 = vset.pattern.permute.xlu0 7
        %2697 = vperm.xlu0 %2696, %v2559
        %v2698 = vpop.permute.xlu0 %2697
        %v2700 = vmul.f32 %v2694, %v590
        %v2701 = vmul.f32 %v2698, %v596
        %2704 = vrot.lane.b32.xlu0 %v2700, 72
        %v2705 = vpop.permute.xlu0 %2704
        %2706 = vrot.lane.b32.xlu0 %v2701, 72
        %v2707 = vpop.permute.xlu0 %2706
        %v2710 = vadd.f32 %v2690, %v2705
        %v2711 = vadd.f32 %v2691, %v2707
        %2712 = vst.msk [vmem:[#allocation2 + $0x60] sm:$0xff] %vm608, %v2710
        %2713 = vst.msk [vmem:[#allocation2 + $0x68] sm:$0xff] %vm608, %v2711
        %2714 = vrot.lane.b32.xlu0 %v588, 120
        %v2715 = vpop.permute.xlu0 %2714
        %2716 = vrot.lane.b32.xlu0 %v594, 120
        %v2717 = vpop.permute.xlu0 %2716
        %v2720 = vmul.f32 %v588, %v2715
        %v2721 = vmul.f32 %v594, %v2717
        %2724 = vrot.lane.b32.xlu0 %v2720, 72
        %v2725 = vpop.permute.xlu0 %2724
        %2726 = vrot.lane.b32.xlu0 %v2721, 72
        %v2727 = vpop.permute.xlu0 %2726
        %v2730 = vsel %vm608, %v2725, 0.0
        %2731 = vadd.xlane.f32.xlu0 %v2730
        %v2732 = vpop.xlane.xlu0 %2731
        %v2733 = vsel %vm608, %v2727, 0.0
        %2734 = vadd.xlane.f32.xlu0 %v2733
        %v2735 = vpop.xlane.xlu0 %2734
        %2736 = vrot.lane.b32.xlu0 %v2422, 72
        %v2737 = vpop.permute.xlu0 %2736
        %2738 = vrot.lane.b32.xlu0 %v2423, 72
        %v2739 = vpop.permute.xlu0 %2738
        %v2742 = vsel %vm608, %v2737, 0.0
        %2743 = vadd.xlane.f32.xlu0 %v2742
        %v2744 = vpop.xlane.xlu0 %2743
        %v2745 = vsel %vm608, %v2739, 0.0
        %2746 = vadd.xlane.f32.xlu0 %v2745
        %v2747 = vpop.xlane.xlu0 %2746
        %2748 = vrot.lane.b32.xlu0 %v2124, 72
        %v2749 = vpop.permute.xlu0 %2748
        %2750 = vrot.lane.b32.xlu0 %v2125, 72
        %v2751 = vpop.permute.xlu0 %2750
        %v2754 = vsel %vm608, %v2749, 0.0
        %2755 = vadd.xlane.f32.xlu0 %v2754
        %v2756 = vpop.xlane.xlu0 %2755
        %v2757 = vsel %vm608, %v2751, 0.0
        %2758 = vadd.xlane.f32.xlu0 %v2757
        %v2759 = vpop.xlane.xlu0 %2758
        %2760 = vrot.lane.b32.xlu0 %v1826, 72
        %v2761 = vpop.permute.xlu0 %2760
        %2762 = vrot.lane.b32.xlu0 %v1827, 72
        %v2763 = vpop.permute.xlu0 %2762
        %v2766 = vsel %vm608, %v2761, 0.0
        %2767 = vadd.xlane.f32.xlu0 %v2766
        %v2768 = vpop.xlane.xlu0 %2767
        %v2769 = vsel %vm608, %v2763, 0.0
        %2770 = vadd.xlane.f32.xlu0 %v2769
        %v2771 = vpop.xlane.xlu0 %2770
        %2772 = vrot.lane.b32.xlu0 %v1528, 72
        %v2773 = vpop.permute.xlu0 %2772
        %2774 = vrot.lane.b32.xlu0 %v1529, 72
        %v2775 = vpop.permute.xlu0 %2774
        %v2778 = vsel %vm608, %v2773, 0.0
        %2779 = vadd.xlane.f32.xlu0 %v2778
        %v2780 = vpop.xlane.xlu0 %2779
        %v2781 = vsel %vm608, %v2775, 0.0
        %2782 = vadd.xlane.f32.xlu0 %v2781
        %v2783 = vpop.xlane.xlu0 %2782
        %2784 = vrot.lane.b32.xlu0 %v1230, 72
        %v2785 = vpop.permute.xlu0 %2784
        %2786 = vrot.lane.b32.xlu0 %v1231, 72
        %v2787 = vpop.permute.xlu0 %2786
        %v2790 = vsel %vm608, %v2785, 0.0
        %2791 = vadd.xlane.f32.xlu0 %v2790
        %v2792 = vpop.xlane.xlu0 %2791
        %v2793 = vsel %vm608, %v2787, 0.0
        %2794 = vadd.xlane.f32.xlu0 %v2793
        %v2795 = vpop.xlane.xlu0 %2794
        %2796 = vrot.lane.b32.xlu0 %v918, 72
        %v2797 = vpop.permute.xlu0 %2796
        %2798 = vrot.lane.b32.xlu0 %v919, 72
        %v2799 = vpop.permute.xlu0 %2798
        %v2802 = vsel %vm608, %v2797, 0.0
        %2803 = vadd.xlane.f32.xlu0 %v2802
        %v2804 = vpop.xlane.xlu0 %2803
        %v2805 = vsel %vm608, %v2799, 0.0
        %2806 = vadd.xlane.f32.xlu0 %v2805
        %v2807 = vpop.xlane.xlu0 %2806
        %2808 = vrot.lane.b32.xlu0 %v606, 72
        %v2809 = vpop.permute.xlu0 %2808
        %2810 = vrot.lane.b32.xlu0 %v607, 72
        %v2811 = vpop.permute.xlu0 %2810
        %v2814 = vsel %vm608, %v2809, 0.0
        %2815 = vadd.xlane.f32.xlu0 %v2814
        %v2816 = vpop.xlane.xlu0 %2815
        %v2817 = vsel %vm608, %v2811, 0.0
        %2818 = vadd.xlane.f32.xlu0 %v2817
        %v2819 = vpop.xlane.xlu0 %2818
        %v2820 = vsel %vm713, %v2732, %v2744
        %v2821 = vsel %vm713, %v2735, %v2747
        %v2822 = vsel %vm716, %v2820, %v2756
        %v2823 = vsel %vm716, %v2821, %v2759
        %v2824 = vsel %vm719, %v2822, %v2768
        %v2825 = vsel %vm719, %v2823, %v2771
        %v2826 = vsel %vm722, %v2824, %v2780
        %v2827 = vsel %vm722, %v2825, %v2783
        %v2828 = vsel %vm725, %v2826, %v2792
        %v2829 = vsel %vm725, %v2827, %v2795
        %v2830 = vsel %vm728, %v2828, %v2804
        %v2831 = vsel %vm728, %v2829, %v2807
        %v2832 = vsel %vm731, %v2830, %v2816
        %v2833 = vsel %vm731, %v2831, %v2819
        %v2834 = vmul.f32 %v2832, 0.35355338
        %v2835 = vmul.f32 %v2833, 0.35355338
        %v2836 = vsel %vm608, %v2834, -inf
        %2837 = vmax.xlane.f32.xlu0 %v2836
        %v2838 = vpop.xlane.xlu0 %2837
        %v2839 = vsel %vm608, %v2835, -inf
        %2840 = vmax.xlane.f32.xlu0 %v2839
        %v2841 = vpop.xlane.xlu0 %2840
        %v2842 = vsub.f32 %v2834, %v2838
        %v2843 = vsub.f32 %v2835, %v2841
        %v2844 = vmul.f32 %v2842, 1.442695
        %v2845 = vpow.pop %v2844
        %v2846 = vmul.f32 %v2843, 1.442695
        %v2847 = vpow.pop %v2846
        %v2848 = vsel %vm608, %v2845, 0.0
        %2849 = vadd.xlane.f32.xlu0 %v2848
        %v2850 = vpop.xlane.xlu0 %2849
        %v2851 = vsel %vm608, %v2847, 0.0
        %2852 = vadd.xlane.f32.xlu0 %v2851
        %v2853 = vpop.xlane.xlu0 %2852
        %v2854 = vrcp.pop %v2850
        %v2855 = vrcp.pop %v2853
        %v2856 = vmul.f32 %v2845, %v2854
        %v2857 = vmul.f32 %v2847, %v2855
        %2859 = vset.pattern.permute.xlu0 0
        %2860 = vperm.xlu0 %2859, %v2856
        %v2861 = vpop.permute.xlu0 %2860
        %2864 = vset.pattern.permute.xlu0 0
        %2865 = vperm.xlu0 %2864, %v2857
        %v2866 = vpop.permute.xlu0 %2865
        %v2868 = vmul.f32 %v2861, %v590
        %v2869 = vmul.f32 %v2866, %v596
        %2870 = vset.pattern.permute.xlu0 1
        %2871 = vperm.xlu0 %2870, %v2856
        %v2872 = vpop.permute.xlu0 %2871
        %2874 = vset.pattern.permute.xlu0 1
        %2875 = vperm.xlu0 %2874, %v2857
        %v2876 = vpop.permute.xlu0 %2875
        %v2878 = vmul.f32 %v2872, %v590
        %v2879 = vmul.f32 %v2876, %v596
        %2882 = vrot.lane.b32.xlu0 %v2878, 120
        %v2883 = vpop.permute.xlu0 %2882
        %2884 = vrot.lane.b32.xlu0 %v2879, 120
        %v2885 = vpop.permute.xlu0 %2884
        %v2888 = vadd.f32 %v2868, %v2883
        %v2889 = vadd.f32 %v2869, %v2885
        %2890 = vset.pattern.permute.xlu0 2
        %2891 = vperm.xlu0 %2890, %v2856
        %v2892 = vpop.permute.xlu0 %2891
        %2894 = vset.pattern.permute.xlu0 2
        %2895 = vperm.xlu0 %2894, %v2857
        %v2896 = vpop.permute.xlu0 %2895
        %v2898 = vmul.f32 %v2892, %v590
        %v2899 = vmul.f32 %v2896, %v596
        %2902 = vrot.lane.b32.xlu0 %v2898, 112
        %v2903 = vpop.permute.xlu0 %2902
        %2904 = vrot.lane.b32.xlu0 %v2899, 112
        %v2905 = vpop.permute.xlu0 %2904
        %v2908 = vadd.f32 %v2888, %v2903
        %v2909 = vadd.f32 %v2889, %v2905
        %2910 = vset.pattern.permute.xlu0 3
        %2911 = vperm.xlu0 %2910, %v2856
        %v2912 = vpop.permute.xlu0 %2911
        %2914 = vset.pattern.permute.xlu0 3
        %2915 = vperm.xlu0 %2914, %v2857
        %v2916 = vpop.permute.xlu0 %2915
        %v2918 = vmul.f32 %v2912, %v590
        %v2919 = vmul.f32 %v2916, %v596
        %2922 = vrot.lane.b32.xlu0 %v2918, 104
        %v2923 = vpop.permute.xlu0 %2922
        %2924 = vrot.lane.b32.xlu0 %v2919, 104
        %v2925 = vpop.permute.xlu0 %2924
        %v2928 = vadd.f32 %v2908, %v2923
        %v2929 = vadd.f32 %v2909, %v2925
        %2930 = vset.pattern.permute.xlu0 4
        %2931 = vperm.xlu0 %2930, %v2856
        %v2932 = vpop.permute.xlu0 %2931
        %2934 = vset.pattern.permute.xlu0 4
        %2935 = vperm.xlu0 %2934, %v2857
        %v2936 = vpop.permute.xlu0 %2935
        %v2938 = vmul.f32 %v2932, %v590
        %v2939 = vmul.f32 %v2936, %v596
        %2942 = vrot.lane.b32.xlu0 %v2938, 96
        %v2943 = vpop.permute.xlu0 %2942
        %2944 = vrot.lane.b32.xlu0 %v2939, 96
        %v2945 = vpop.permute.xlu0 %2944
        %v2948 = vadd.f32 %v2928, %v2943
        %v2949 = vadd.f32 %v2929, %v2945
        %2950 = vset.pattern.permute.xlu0 5
        %2951 = vperm.xlu0 %2950, %v2856
        %v2952 = vpop.permute.xlu0 %2951
        %2954 = vset.pattern.permute.xlu0 5
        %2955 = vperm.xlu0 %2954, %v2857
        %v2956 = vpop.permute.xlu0 %2955
        %v2958 = vmul.f32 %v2952, %v590
        %v2959 = vmul.f32 %v2956, %v596
        %2962 = vrot.lane.b32.xlu0 %v2958, 88
        %v2963 = vpop.permute.xlu0 %2962
        %2964 = vrot.lane.b32.xlu0 %v2959, 88
        %v2965 = vpop.permute.xlu0 %2964
        %v2968 = vadd.f32 %v2948, %v2963
        %v2969 = vadd.f32 %v2949, %v2965
        %2970 = vset.pattern.permute.xlu0 6
        %2971 = vperm.xlu0 %2970, %v2856
        %v2972 = vpop.permute.xlu0 %2971
        %2974 = vset.pattern.permute.xlu0 6
        %2975 = vperm.xlu0 %2974, %v2857
        %v2976 = vpop.permute.xlu0 %2975
        %v2978 = vmul.f32 %v2972, %v590
        %v2979 = vmul.f32 %v2976, %v596
        %2982 = vrot.lane.b32.xlu0 %v2978, 80
        %v2983 = vpop.permute.xlu0 %2982
        %2984 = vrot.lane.b32.xlu0 %v2979, 80
        %v2985 = vpop.permute.xlu0 %2984
        %v2988 = vadd.f32 %v2968, %v2983
        %v2989 = vadd.f32 %v2969, %v2985
        %2990 = vset.pattern.permute.xlu0 7
        %2991 = vperm.xlu0 %2990, %v2856
        %v2992 = vpop.permute.xlu0 %2991
        %2994 = vset.pattern.permute.xlu0 7
        %2995 = vperm.xlu0 %2994, %v2857
        %v2996 = vpop.permute.xlu0 %2995
        %v2998 = vmul.f32 %v2992, %v590
        %v2999 = vmul.f32 %v2996, %v596
        %3002 = vrot.lane.b32.xlu0 %v2998, 72
        %v3003 = vpop.permute.xlu0 %3002
        %3004 = vrot.lane.b32.xlu0 %v2999, 72
        %v3005 = vpop.permute.xlu0 %3004
        %v3008 = vadd.f32 %v2988, %v3003
        %v3009 = vadd.f32 %v2989, %v3005
        %3010 = vst.msk [vmem:[#allocation2 + $0x70] sm:$0xff] %vm608, %v3008
        %3011 = vst.msk [vmem:[#allocation2 + $0x78] sm:$0xff] %vm608, %v3009
        %v3012 = vld [vmem:[#allocation2] ss:$8 sm:$0xf]
        %v3013 = vld [vmem:[#allocation2] ss:$8 sm:$0xf0]
        %v3014 = vor.u32 %v3012, %v3013
        %s3015 = scalar_lea.vmem [#allocation2], 64
        %v3016 = vld [vmem:[%s3015] ss:$8 sm:$0xf]
        %v3017 = vld [vmem:[%s3015] ss:$8 sm:$0xf0]
        %v3018 = vor.u32 %v3016, %v3017
        %s3019 = scalar_lea.vmem [#allocation2], 1
        %v3020 = vld [vmem:[%s3019] ss:$8 sm:$0xf]
        %v3021 = vld [vmem:[%s3019] ss:$8 sm:$0xf0]
        %v3022 = vor.u32 %v3020, %v3021
        %s3023 = scalar_lea.vmem [#allocation2], 65
        %v3024 = vld [vmem:[%s3023] ss:$8 sm:$0xf]
        %v3025 = vld [vmem:[%s3023] ss:$8 sm:$0xf0]
        %v3026 = vor.u32 %v3024, %v3025
        %s3027 = scalar_lea.vmem [#allocation2], 2
        %v3028 = vld [vmem:[%s3027] ss:$8 sm:$0xf]
        %v3029 = vld [vmem:[%s3027] ss:$8 sm:$0xf0]
        %v3030 = vor.u32 %v3028, %v3029
        %s3031 = scalar_lea.vmem [#allocation2], 66
        %v3032 = vld [vmem:[%s3031] ss:$8 sm:$0xf]
        %v3033 = vld [vmem:[%s3031] ss:$8 sm:$0xf0]
        %v3034 = vor.u32 %v3032, %v3033
        %s3035 = scalar_lea.vmem [#allocation2], 3
        %v3036 = vld [vmem:[%s3035] ss:$8 sm:$0xf]
        %v3037 = vld [vmem:[%s3035] ss:$8 sm:$0xf0]
        %v3038 = vor.u32 %v3036, %v3037
        %s3039 = scalar_lea.vmem [#allocation2], 67
        %v3040 = vld [vmem:[%s3039] ss:$8 sm:$0xf]
        %v3041 = vld [vmem:[%s3039] ss:$8 sm:$0xf0]
        %v3042 = vor.u32 %v3040, %v3041
        %s3043 = scalar_lea.vmem [#allocation2], 4
        %v3044 = vld [vmem:[%s3043] ss:$8 sm:$0xf]
        %v3045 = vld [vmem:[%s3043] ss:$8 sm:$0xf0]
        %v3046 = vor.u32 %v3044, %v3045
        %s3047 = scalar_lea.vmem [#allocation2], 68
        %v3048 = vld [vmem:[%s3047] ss:$8 sm:$0xf]
        %v3049 = vld [vmem:[%s3047] ss:$8 sm:$0xf0]
        %v3050 = vor.u32 %v3048, %v3049
        %s3051 = scalar_lea.vmem [#allocation2], 5
        %v3052 = vld [vmem:[%s3051] ss:$8 sm:$0xf]
        %v3053 = vld [vmem:[%s3051] ss:$8 sm:$0xf0]
        %v3054 = vor.u32 %v3052, %v3053
        %s3055 = scalar_lea.vmem [#allocation2], 69
        %v3056 = vld [vmem:[%s3055] ss:$8 sm:$0xf]
        %v3057 = vld [vmem:[%s3055] ss:$8 sm:$0xf0]
        %v3058 = vor.u32 %v3056, %v3057
        %s3059 = scalar_lea.vmem [#allocation2], 6
        %v3060 = vld [vmem:[%s3059] ss:$8 sm:$0xf]
        %v3061 = vld [vmem:[%s3059] ss:$8 sm:$0xf0]
        %v3062 = vor.u32 %v3060, %v3061
        %s3063 = scalar_lea.vmem [#allocation2], 70
        %v3064 = vld [vmem:[%s3063] ss:$8 sm:$0xf]
        %v3065 = vld [vmem:[%s3063] ss:$8 sm:$0xf0]
        %v3066 = vor.u32 %v3064, %v3065
        %s3067 = scalar_lea.vmem [#allocation2], 7
        %v3068 = vld [vmem:[%s3067] ss:$8 sm:$0xf]
        %v3069 = vld [vmem:[%s3067] ss:$8 sm:$0xf0]
        %v3070 = vor.u32 %v3068, %v3069
        %s3071 = scalar_lea.vmem [#allocation2], 71
        %v3072 = vld [vmem:[%s3071] ss:$8 sm:$0xf]
        %v3073 = vld [vmem:[%s3071] ss:$8 sm:$0xf0]
        %v3074 = vor.u32 %v3072, %v3073
        %3077 = vrot.lane.b32.xlu0 %v3022, 8
        %v3078 = vpop.permute.xlu0 %3077
        %3079 = vrot.lane.b32.xlu0 %v3026, 8
        %v3080 = vpop.permute.xlu0 %3079
        %3085 = vrot.lane.b32.xlu0 %v3030, 16
        %v3086 = vpop.permute.xlu0 %3085
        %3087 = vrot.lane.b32.xlu0 %v3034, 16
        %v3088 = vpop.permute.xlu0 %3087
        %3093 = vrot.lane.b32.xlu0 %v3038, 24
        %v3094 = vpop.permute.xlu0 %3093
        %3095 = vrot.lane.b32.xlu0 %v3042, 24
        %v3096 = vpop.permute.xlu0 %3095
        %3101 = vrot.lane.b32.xlu0 %v3046, 32
        %v3102 = vpop.permute.xlu0 %3101
        %3103 = vrot.lane.b32.xlu0 %v3050, 32
        %v3104 = vpop.permute.xlu0 %3103
        %3109 = vrot.lane.b32.xlu0 %v3054, 40
        %v3110 = vpop.permute.xlu0 %3109
        %3111 = vrot.lane.b32.xlu0 %v3058, 40
        %v3112 = vpop.permute.xlu0 %3111
        %3117 = vrot.lane.b32.xlu0 %v3062, 48
        %v3118 = vpop.permute.xlu0 %3117
        %3119 = vrot.lane.b32.xlu0 %v3066, 48
        %v3120 = vpop.permute.xlu0 %3119
        %3125 = vrot.lane.b32.xlu0 %v3070, 56
        %v3126 = vpop.permute.xlu0 %3125
        %3127 = vrot.lane.b32.xlu0 %v3074, 56
        %v3128 = vpop.permute.xlu0 %3127
        %v3131 = vsel %vm608, %v3014, %v3078
        %v3132 = vsel %vm608, %v3018, %v3080
        %vm3133 = vcmask 130048
        %v3134 = vsel %vm3133, %v3131, %v3086
        %v3135 = vsel %vm3133, %v3132, %v3088
        %vm3136 = vcmask 195584
        %v3137 = vsel %vm3136, %v3134, %v3094
        %v3138 = vsel %vm3136, %v3135, %v3096
        %vm3139 = vcmask 261120
        %v3140 = vsel %vm3139, %v3137, %v3102
        %v3141 = vsel %vm3139, %v3138, %v3104
        %vm3142 = vcmask 326656
        %v3143 = vsel %vm3142, %v3140, %v3110
        %v3144 = vsel %vm3142, %v3141, %v3112
        %vm3145 = vcmask 392192
        %v3146 = vsel %vm3145, %v3143, %v3118
        %v3147 = vsel %vm3145, %v3144, %v3120
        %vm3148 = vcmask 457728
        %v3149 = vsel %vm3148, %v3146, %v3126
        %v3150 = vsel %vm3148, %v3147, %v3128
        %v3151 = vld [vmem:[%s5] sm:$0xff]
        %v3152 = vld [vmem:[%s5 + $0x8] sm:$0xff]
        %v3153 = vld [vmem:[%s5 + $0x10] sm:$0xff]
        %v3154 = vld [vmem:[%s5 + $0x18] sm:$0xff]
        %v3155 = vld [vmem:[%s5 + $0x20] sm:$0xff]
        %v3156 = vld [vmem:[%s5 + $0x28] sm:$0xff]
        %v3157 = vld [vmem:[%s5 + $0x30] sm:$0xff]
        %v3158 = vld [vmem:[%s5 + $0x38] sm:$0xff]
        %v3160 = vsel %vm443, %v3149, 0
        %v3163 = vsel %vm443, %v3150, 0
        %3165 = vmatprep.subr.mxu0 0.0
        %3166 = vmatpush1.msra.mxu0 0.0
        %3167 = vmatprep.subr.mxu0 0.0
        %3168 = vmatpush1.msra.mxu0 0.0
        %3169 = vmatprep.subr.mxu0 0.0
        %3170 = vmatpush1.msra.mxu0 0.0
        %3171 = vmatprep.subr.mxu0 0.0
        %3172 = vmatpush1.msra.mxu0 0.0
        %3173 = vmatprep.subr.mxu0 0.0
        %3174 = vmatpush1.msra.mxu0 0.0
        %3175 = vmatprep.subr.mxu0 0.0
        %3176 = vmatpush1.msra.mxu0 0.0
        %3177 = vmatprep.subr.mxu0 0.0
        %3178 = vmatpush1.msra.mxu0 0.0
        %3179 = vmatprep.subr.mxu0 0.0
        %3180 = vmatpush1.msra.mxu0 0.0
        %3181 = vmatprep.subr.mxu0 0.0
        %3182 = vmatpush1.msra.mxu0 %v3158
        %3183 = vmatprep.subr.mxu0 0.0
        %3184 = vmatpush1.msra.mxu0 %v3157
        %3185 = vmatprep.subr.mxu0 0.0
        %3186 = vmatpush1.msra.mxu0 %v3156
        %3187 = vmatprep.subr.mxu0 0.0
        %3188 = vmatpush1.msra.mxu0 %v3155
        %3189 = vmatprep.subr.mxu0 0.0
        %3190 = vmatpush1.msra.mxu0 %v3154
        %3191 = vmatprep.subr.mxu0 0.0
        %3192 = vmatpush1.msra.mxu0 %v3153
        %3193 = vmatprep.subr.mxu0 0.0
        %3194 = vmatpush1.msra.mxu0 %v3152
        %3195 = vmatprep.subr.mxu0 0.0
        %3196 = vmatpush1.msra.mxu0 %v3151
        %3197 = vmatprep.subr.mxu0 0.0
        %3198 = vmatpush2.msra.mxu0 0.0
        %3199 = vmatprep.subr.mxu0 0.0
        %3200 = vmatpush2.msra.mxu0 0.0
        %3201 = vmatprep.subr.mxu0 0.0
        %3202 = vmatpush2.msra.mxu0 0.0
        %3203 = vmatprep.subr.mxu0 0.0
        %3204 = vmatpush2.msra.mxu0 0.0
        %3205 = vmatprep.subr.mxu0 0.0
        %3206 = vmatpush2.msra.mxu0 0.0
        %3207 = vmatprep.subr.mxu0 0.0
        %3208 = vmatpush2.msra.mxu0 0.0
        %3209 = vmatprep.subr.mxu0 0.0
        %3210 = vmatpush2.msra.mxu0 0.0
        %3211 = vmatprep.subr.mxu0 0.0
        %3212 = vmatpush2.msra.mxu0 0.0
        %3213 = vmatprep.subr.mxu0 0.0
        %3214 = vmatpush2.msra.mxu0 0.0
        %3215 = vmatprep.subr.mxu0 0.0
        %3216 = vmatpush2.msra.mxu0 0.0
        %3217 = vmatprep.subr.mxu0 0.0
        %3218 = vmatpush2.msra.mxu0 0.0
        %3219 = vmatprep.subr.mxu0 0.0
        %3220 = vmatpush2.msra.mxu0 0.0
        %3221 = vmatprep.subr.mxu0 0.0
        %3222 = vmatpush2.msra.mxu0 0.0
        %3223 = vmatprep.subr.mxu0 0.0
        %3224 = vmatpush2.msra.mxu0 0.0
        %3225 = vmatprep.subr.mxu0 0.0
        %3226 = vmatpush2.msra.mxu0 0.0
        %3227 = vmatprep.subr.mxu0 0.0
        %3228 = vmatpush2.msra.mxu0 0.0
        %3229 = vmatprep.mubr.f32.mxu0 0.0
        %3230 = vmatmul.mubr.f32.gmra.mxu0 %v3160
        %v3231 = vpop.f32.mrf.mxu0
        %v3232 = vadd.f32 0.0, %v3231
        %v3233 = vpop.f32.mrf.mxu0
        %3234 = vmatprep.mubr.f32.mxu0 0.0
        %3235 = vmatmul.mubr.f32.gmra.mxu0 %v3163
        %v3236 = vpop.f32.mrf.mxu0
        %v3237 = vadd.f32 0.0, %v3236
        %v3238 = vpop.f32.mrf.mxu0
        %3239 = vdwg.mxu0
        %v3240 = vadd.f32 %v439, %v3232
        %v3241 = vadd.f32 %v440, %v3237
        %v3242 = vld [vmem:[%s6] sm:$0x1]
        %v3244 = vlaneseq
        %v3245 = vshrl.u32 %v3244, 7
        %v3246 = vsub.s32 0, %v3245
        %v3247 = vrot.slane %v3242, %v3246
        %v3249 = vadd.f32 %v3240, %v3247
        %v3250 = vadd.f32 %v3241, %v3247
        %v3251 = vld [vmem:[%s7] sm:$0x1]
        %v3252 = vld [vmem:[%s8] sm:$0x1]
        %v3253 = vsel %vm443, %v3249, 0.0
        %3254 = vadd.xlane.f32.xlu0 %v3253
        %v3255 = vpop.xlane.xlu0 %3254
        %v3256 = vsel %vm443, %v3250, 0.0
        %3257 = vadd.xlane.f32.xlu0 %v3256
        %v3258 = vpop.xlane.xlu0 %3257
        %v3259 = vmul.f32 %v3255, %v450
        %v3260 = vmul.f32 %v3258, %v450
        %v3261 = vsub.f32 %v3249, %v3259
        %v3262 = vsub.f32 %v3250, %v3260
        %v3263 = vmul.f32 %v3261, %v3261
        %v3264 = vmul.f32 %v3262, %v3262
        %v3265 = vsel %vm443, %v3263, 0.0
        %3266 = vadd.xlane.f32.xlu0 %v3265
        %v3267 = vpop.xlane.xlu0 %3266
        %v3268 = vsel %vm443, %v3264, 0.0
        %3269 = vadd.xlane.f32.xlu0 %v3268
        %v3270 = vpop.xlane.xlu0 %3269
        %v3271 = vmul.f32 %v3267, %v450
        %v3272 = vmul.f32 %v3270, %v450
        %v3273 = vadd.f32 %v3271, 1e-05
        %v3274 = vadd.f32 %v3272, 1e-05
        %v3275 = vrsqrt.pop %v3273
        %v3276 = vrsqrt.pop %v3274
        %v3277 = vmul.f32 %v3261, %v3275
        %v3278 = vmul.f32 %v3262, %v3276
        %v3280 = vlaneseq
        %v3281 = vshrl.u32 %v3280, 7
        %v3282 = vsub.s32 0, %v3281
        %v3283 = vrot.slane %v3251, %v3282
        %v3285 = vmul.f32 %v3277, %v3283
        %v3286 = vmul.f32 %v3278, %v3283
        %v3288 = vlaneseq
        %v3289 = vshrl.u32 %v3288, 7
        %v3290 = vsub.s32 0, %v3289
        %v3291 = vrot.slane %v3252, %v3290
        %v3293 = vadd.f32 %v3285, %v3291
        %v3294 = vadd.f32 %v3286, %v3291
        %v3295 = vld [vmem:[%s9] sm:$0xff]
        %v3296 = vld [vmem:[%s9 + $0x8] sm:$0xff]
        %v3297 = vld [vmem:[%s9 + $0x10] sm:$0xff]
        %v3298 = vld [vmem:[%s9 + $0x18] sm:$0xff]
        %v3299 = vld [vmem:[%s9 + $0x20] sm:$0xff]
        %v3300 = vld [vmem:[%s9 + $0x28] sm:$0xff]
        %v3301 = vld [vmem:[%s9 + $0x30] sm:$0xff]
        %v3302 = vld [vmem:[%s9 + $0x38] sm:$0xff]
        %v3303 = vld [vmem:[%s9 + $0x40] sm:$0xff]
        %v3304 = vld [vmem:[%s9 + $0x48] sm:$0xff]
        %v3305 = vld [vmem:[%s9 + $0x50] sm:$0xff]
        %v3306 = vld [vmem:[%s9 + $0x58] sm:$0xff]
        %v3307 = vld [vmem:[%s9 + $0x60] sm:$0xff]
        %v3308 = vld [vmem:[%s9 + $0x68] sm:$0xff]
        %v3309 = vld [vmem:[%s9 + $0x70] sm:$0xff]
        %v3310 = vld [vmem:[%s9 + $0x78] sm:$0xff]
        %v3311 = vld [vmem:[%s10] sm:$0x3]
        %v3313 = vlaneseq
        %v3314 = vshrl.u32 %v3313, 7
        %v3315 = vsub.s32 0, %v3314
        %v3316 = vrot.slane %v3311, %v3315
        %v3317 = vlaneseq
        %v3318 = vshrl.u32 %v3317, 7
        %v3319 = vsub.s32 1, %v3318
        %v3320 = vrot.slane %v3311, %v3319
        %v3324 = vsel %vm443, %v3293, 0
        %v3327 = vsel %vm443, %v3294, 0
        %3329 = vmatprep.subr.mxu0 0.0
        %3330 = vmatpush1.msra.mxu0 0.0
        %3331 = vmatprep.subr.mxu0 0.0
        %3332 = vmatpush1.msra.mxu0 0.0
        %3333 = vmatprep.subr.mxu0 0.0
        %3334 = vmatpush1.msra.mxu0 0.0
        %3335 = vmatprep.subr.mxu0 0.0
        %3336 = vmatpush1.msra.mxu0 0.0
        %3337 = vmatprep.subr.mxu0 0.0
        %3338 = vmatpush1.msra.mxu0 0.0
        %3339 = vmatprep.subr.mxu0 0.0
        %3340 = vmatpush1.msra.mxu0 0.0
        %3341 = vmatprep.subr.mxu0 0.0
        %3342 = vmatpush1.msra.mxu0 0.0
        %3343 = vmatprep.subr.mxu0 0.0
        %3344 = vmatpush1.msra.mxu0 0.0
        %3345 = vmatprep.subr.mxu0 %v3310
        %3346 = vmatpush1.msra.mxu0 %v3309
        %3347 = vmatprep.subr.mxu0 %v3308
        %3348 = vmatpush1.msra.mxu0 %v3307
        %3349 = vmatprep.subr.mxu0 %v3306
        %3350 = vmatpush1.msra.mxu0 %v3305
        %3351 = vmatprep.subr.mxu0 %v3304
        %3352 = vmatpush1.msra.mxu0 %v3303
        %3353 = vmatprep.subr.mxu0 %v3302
        %3354 = vmatpush1.msra.mxu0 %v3301
        %3355 = vmatprep.subr.mxu0 %v3300
        %3356 = vmatpush1.msra.mxu0 %v3299
        %3357 = vmatprep.subr.mxu0 %v3298
        %3358 = vmatpush1.msra.mxu0 %v3297
        %3359 = vmatprep.subr.mxu0 %v3296
        %3360 = vmatpush1.msra.mxu0 %v3295
        %3361 = vmatprep.subr.mxu0 0.0
        %3362 = vmatpush2.msra.mxu0 0.0
        %3363 = vmatprep.subr.mxu0 0.0
        %3364 = vmatpush2.msra.mxu0 0.0
        %3365 = vmatprep.subr.mxu0 0.0
        %3366 = vmatpush2.msra.mxu0 0.0
        %3367 = vmatprep.subr.mxu0 0.0
        %3368 = vmatpush2.msra.mxu0 0.0
        %3369 = vmatprep.subr.mxu0 0.0
        %3370 = vmatpush2.msra.mxu0 0.0
        %3371 = vmatprep.subr.mxu0 0.0
        %3372 = vmatpush2.msra.mxu0 0.0
        %3373 = vmatprep.subr.mxu0 0.0
        %3374 = vmatpush2.msra.mxu0 0.0
        %3375 = vmatprep.subr.mxu0 0.0
        %3376 = vmatpush2.msra.mxu0 0.0
        %3377 = vmatprep.subr.mxu0 0.0
        %3378 = vmatpush2.msra.mxu0 0.0
        %3379 = vmatprep.subr.mxu0 0.0
        %3380 = vmatpush2.msra.mxu0 0.0
        %3381 = vmatprep.subr.mxu0 0.0
        %3382 = vmatpush2.msra.mxu0 0.0
        %3383 = vmatprep.subr.mxu0 0.0
        %3384 = vmatpush2.msra.mxu0 0.0
        %3385 = vmatprep.subr.mxu0 0.0
        %3386 = vmatpush2.msra.mxu0 0.0
        %3387 = vmatprep.subr.mxu0 0.0
        %3388 = vmatpush2.msra.mxu0 0.0
        %3389 = vmatprep.subr.mxu0 0.0
        %3390 = vmatpush2.msra.mxu0 0.0
        %3391 = vmatprep.subr.mxu0 0.0
        %3392 = vmatpush2.msra.mxu0 0.0
        %3393 = vmatprep.mubr.f32.mxu0 0.0
        %3394 = vmatmul.mubr.f32.gmra.mxu0 %v3324
        %v3395 = vpop.f32.mrf.mxu0
        %v3396 = vadd.f32 %v3316, %v3395
        %v3397 = vpop.f32.mrf.mxu0
        %v3398 = vadd.f32 %v3320, %v3397
        %3399 = vmatprep.mubr.f32.mxu0 0.0
        %3400 = vmatmul.mubr.f32.gmra.mxu0 %v3327
        %v3401 = vpop.f32.mrf.mxu0
        %v3402 = vadd.f32 %v3316, %v3401
        %v3403 = vpop.f32.mrf.mxu0
        %v3404 = vadd.f32 %v3320, %v3403
        %3405 = vdwg.mxu0
        %v3406 = vmul.f32 %v3396, 0.5
        %v3407 = vmul.f32 %v3398, 0.5
        %v3408 = vmul.f32 %v3402, 0.5
        %v3409 = vmul.f32 %v3404, 0.5
        %v3410 = vmul.f32 %v3396, 0.70710677
        %v3411 = vmul.f32 %v3398, 0.70710677
        %v3412 = vmul.f32 %v3402, 0.70710677
        %v3413 = vmul.f32 %v3404, 0.70710677
        %v3414 = vand.u32 2147483647, %v3410
        %v3415 = vand.u32 2147483647, %v3411
        %v3416 = vand.u32 2147483647, %v3412
        %v3417 = vand.u32 2147483647, %v3413
        %v3418 = vmul.f32 %v3414, 0.3275911
        %v3419 = vmul.f32 %v3415, 0.3275911
        %v3420 = vmul.f32 %v3416, 0.3275911
        %v3421 = vmul.f32 %v3417, 0.3275911
        %v3422 = vadd.f32 %v3418, 1.0
        %v3423 = vadd.f32 %v3419, 1.0
        %v3424 = vadd.f32 %v3420, 1.0
        %v3425 = vadd.f32 %v3421, 1.0
        %v3426 = vrcp.pop %v3422
        %v3427 = vmul.f32 1.0, %v3426
        %v3428 = vrcp.pop %v3423
        %v3429 = vmul.f32 1.0, %v3428
        %v3430 = vrcp.pop %v3424
        %v3431 = vmul.f32 1.0, %v3430
        %v3432 = vrcp.pop %v3425
        %v3433 = vmul.f32 1.0, %v3432
        %v3434 = vmul.f32 %v3427, 1.0614054
        %v3435 = vmul.f32 %v3429, 1.0614054
        %v3436 = vmul.f32 %v3431, 1.0614054
        %v3437 = vmul.f32 %v3433, 1.0614054
        %v3438 = vadd.f32 %v3434, -1.4531521
        %v3439 = vadd.f32 %v3435, -1.4531521
        %v3440 = vadd.f32 %v3436, -1.4531521
        %v3441 = vadd.f32 %v3437, -1.4531521
        %v3442 = vmul.f32 %v3438, %v3427
        %v3443 = vmul.f32 %v3439, %v3429
        %v3444 = vmul.f32 %v3440, %v3431
        %v3445 = vmul.f32 %v3441, %v3433
        %v3446 = vadd.f32 %v3442, 1.4214138
        %v3447 = vadd.f32 %v3443, 1.4214138
        %v3448 = vadd.f32 %v3444, 1.4214138
        %v3449 = vadd.f32 %v3445, 1.4214138
        %v3450 = vmul.f32 %v3446, %v3427
        %v3451 = vmul.f32 %v3447, %v3429
        %v3452 = vmul.f32 %v3448, %v3431
        %v3453 = vmul.f32 %v3449, %v3433
        %v3454 = vadd.f32 %v3450, -0.28449672
        %v3455 = vadd.f32 %v3451, -0.28449672
        %v3456 = vadd.f32 %v3452, -0.28449672
        %v3457 = vadd.f32 %v3453, -0.28449672
        %v3458 = vmul.f32 %v3454, %v3427
        %v3459 = vmul.f32 %v3455, %v3429
        %v3460 = vmul.f32 %v3456, %v3431
        %v3461 = vmul.f32 %v3457, %v3433
        %v3462 = vadd.f32 %v3458, 0.2548296
        %v3463 = vadd.f32 %v3459, 0.2548296
        %v3464 = vadd.f32 %v3460, 0.2548296
        %v3465 = vadd.f32 %v3461, 0.2548296
        %v3466 = vmul.f32 %v3462, %v3427
        %v3467 = vmul.f32 %v3463, %v3429
        %v3468 = vmul.f32 %v3464, %v3431
        %v3469 = vmul.f32 %v3465, %v3433
        %v3470 = vsub.f32 0.0, %v3414
        %v3471 = vsub.f32 0.0, %v3415
        %v3472 = vsub.f32 0.0, %v3416
        %v3473 = vsub.f32 0.0, %v3417
        %v3474 = vmul.f32 %v3470, %v3414
        %v3475 = vmul.f32 %v3471, %v3415
        %v3476 = vmul.f32 %v3472, %v3416
        %v3477 = vmul.f32 %v3473, %v3417
        %v3478 = vmul.f32 %v3474, 1.442695
        %v3479 = vpow.pop %v3478
        %v3480 = vmul.f32 %v3475, 1.442695
        %v3481 = vpow.pop %v3480
        %v3482 = vmul.f32 %v3476, 1.442695
        %v3483 = vpow.pop %v3482
        %v3484 = vmul.f32 %v3477, 1.442695
        %v3485 = vpow.pop %v3484
        %v3486 = vmul.f32 %v3466, %v3479
        %v3487 = vmul.f32 %v3467, %v3481
        %v3488 = vmul.f32 %v3468, %v3483
        %v3489 = vmul.f32 %v3469, %v3485
        %v3490 = vsub.f32 1.0, %v3486
        %v3491 = vsub.f32 1.0, %v3487
        %v3492 = vsub.f32 1.0, %v3488
        %v3493 = vsub.f32 1.0, %v3489
        %vm3494 = vcmp.lt.f32.partialorder %v3410, 0.0
        %vm3495 = vcmp.lt.f32.partialorder %v3411, 0.0
        %vm3496 = vcmp.lt.f32.partialorder %v3412, 0.0
        %vm3497 = vcmp.lt.f32.partialorder %v3413, 0.0
        %v3498 = vsub.f32 0.0, %v3490
        %v3499 = vsub.f32 0.0, %v3491
        %v3500 = vsub.f32 0.0, %v3492
        %v3501 = vsub.f32 0.0, %v3493
        %v3502 = vsel %vm3494, %v3498, %v3490
        %v3503 = vsel %vm3495, %v3499, %v3491
        %v3504 = vsel %vm3496, %v3500, %v3492
        %v3505 = vsel %vm3497, %v3501, %v3493
        %v3506 = vadd.f32 %v3502, 1.0
        %v3507 = vadd.f32 %v3503, 1.0
        %v3508 = vadd.f32 %v3504, 1.0
        %v3509 = vadd.f32 %v3505, 1.0
        %v3510 = vmul.f32 %v3406, %v3506
        %v3511 = vmul.f32 %v3407, %v3507
        %v3512 = vmul.f32 %v3408, %v3508
        %v3513 = vmul.f32 %v3409, %v3509
        %v3514 = vld [vmem:[%s11] sm:$0xff]
        %v3515 = vld [vmem:[%s11 + $0x8] sm:$0xff]
        %v3516 = vld [vmem:[%s11 + $0x10] sm:$0xff]
        %v3517 = vld [vmem:[%s11 + $0x18] sm:$0xff]
        %v3518 = vld [vmem:[%s11 + $0x20] sm:$0xff]
        %v3519 = vld [vmem:[%s11 + $0x28] sm:$0xff]
        %v3520 = vld [vmem:[%s11 + $0x30] sm:$0xff]
        %v3521 = vld [vmem:[%s11 + $0x38] sm:$0xff]
        %v3522 = vld [vmem:[%s11 + $0x40] sm:$0xff]
        %v3523 = vld [vmem:[%s11 + $0x48] sm:$0xff]
        %v3524 = vld [vmem:[%s11 + $0x50] sm:$0xff]
        %v3525 = vld [vmem:[%s11 + $0x58] sm:$0xff]
        %v3526 = vld [vmem:[%s11 + $0x60] sm:$0xff]
        %v3527 = vld [vmem:[%s11 + $0x68] sm:$0xff]
        %v3528 = vld [vmem:[%s11 + $0x70] sm:$0xff]
        %v3529 = vld [vmem:[%s11 + $0x78] sm:$0xff]
        %v3530 = vld [vmem:[%s11 + $0x80] sm:$0xff]
        %v3531 = vld [vmem:[%s11 + $0x88] sm:$0xff]
        %v3532 = vld [vmem:[%s11 + $0x90] sm:$0xff]
        %v3533 = vld [vmem:[%s11 + $0x98] sm:$0xff]
        %v3534 = vld [vmem:[%s11 + $0xa0] sm:$0xff]
        %v3535 = vld [vmem:[%s11 + $0xa8] sm:$0xff]
        %v3536 = vld [vmem:[%s11 + $0xb0] sm:$0xff]
        %v3537 = vld [vmem:[%s11 + $0xb8] sm:$0xff]
        %v3538 = vld [vmem:[%s11 + $0xc0] sm:$0xff]
        %v3539 = vld [vmem:[%s11 + $0xc8] sm:$0xff]
        %v3540 = vld [vmem:[%s11 + $0xd0] sm:$0xff]
        %v3541 = vld [vmem:[%s11 + $0xd8] sm:$0xff]
        %v3542 = vld [vmem:[%s11 + $0xe0] sm:$0xff]
        %v3543 = vld [vmem:[%s11 + $0xe8] sm:$0xff]
        %v3544 = vld [vmem:[%s11 + $0xf0] sm:$0xff]
        %v3545 = vld [vmem:[%s11 + $0xf8] sm:$0xff]
        %v3546 = vld [vmem:[%s12] sm:$0x1]
        %v3548 = vlaneseq
        %v3549 = vshrl.u32 %v3548, 7
        %v3550 = vsub.s32 0, %v3549
        %v3551 = vrot.slane %v3546, %v3550
        %3553 = vmatprep.subr.mxu0 0.0
        %3554 = vmatpush1.msra.mxu0 %v3529
        %3555 = vmatprep.subr.mxu0 0.0
        %3556 = vmatpush1.msra.mxu0 %v3528
        %3557 = vmatprep.subr.mxu0 0.0
        %3558 = vmatpush1.msra.mxu0 %v3527
        %3559 = vmatprep.subr.mxu0 0.0
        %3560 = vmatpush1.msra.mxu0 %v3526
        %3561 = vmatprep.subr.mxu0 0.0
        %3562 = vmatpush1.msra.mxu0 %v3525
        %3563 = vmatprep.subr.mxu0 0.0
        %3564 = vmatpush1.msra.mxu0 %v3524
        %3565 = vmatprep.subr.mxu0 0.0
        %3566 = vmatpush1.msra.mxu0 %v3523
        %3567 = vmatprep.subr.mxu0 0.0
        %3568 = vmatpush1.msra.mxu0 %v3522
        %3569 = vmatprep.subr.mxu0 0.0
        %3570 = vmatpush1.msra.mxu0 %v3521
        %3571 = vmatprep.subr.mxu0 0.0
        %3572 = vmatpush1.msra.mxu0 %v3520
        %3573 = vmatprep.subr.mxu0 0.0
        %3574 = vmatpush1.msra.mxu0 %v3519
        %3575 = vmatprep.subr.mxu0 0.0
        %3576 = vmatpush1.msra.mxu0 %v3518
        %3577 = vmatprep.subr.mxu0 0.0
        %3578 = vmatpush1.msra.mxu0 %v3517
        %3579 = vmatprep.subr.mxu0 0.0
        %3580 = vmatpush1.msra.mxu0 %v3516
        %3581 = vmatprep.subr.mxu0 0.0
        %3582 = vmatpush1.msra.mxu0 %v3515
        %3583 = vmatprep.subr.mxu0 0.0
        %3584 = vmatpush1.msra.mxu0 %v3514
        %3585 = vmatprep.subr.mxu0 0.0
        %3586 = vmatpush2.msra.mxu0 %v3545
        %3587 = vmatprep.subr.mxu0 0.0
        %3588 = vmatpush2.msra.mxu0 %v3544
        %3589 = vmatprep.subr.mxu0 0.0
        %3590 = vmatpush2.msra.mxu0 %v3543
        %3591 = vmatprep.subr.mxu0 0.0
        %3592 = vmatpush2.msra.mxu0 %v3542
        %3593 = vmatprep.subr.mxu0 0.0
        %3594 = vmatpush2.msra.mxu0 %v3541
        %3595 = vmatprep.subr.mxu0 0.0
        %3596 = vmatpush2.msra.mxu0 %v3540
        %3597 = vmatprep.subr.mxu0 0.0
        %3598 = vmatpush2.msra.mxu0 %v3539
        %3599 = vmatprep.subr.mxu0 0.0
        %3600 = vmatpush2.msra.mxu0 %v3538
        %3601 = vmatprep.subr.mxu0 0.0
        %3602 = vmatpush2.msra.mxu0 %v3537
        %3603 = vmatprep.subr.mxu0 0.0
        %3604 = vmatpush2.msra.mxu0 %v3536
        %3605 = vmatprep.subr.mxu0 0.0
        %3606 = vmatpush2.msra.mxu0 %v3535
        %3607 = vmatprep.subr.mxu0 0.0
        %3608 = vmatpush2.msra.mxu0 %v3534
        %3609 = vmatprep.subr.mxu0 0.0
        %3610 = vmatpush2.msra.mxu0 %v3533
        %3611 = vmatprep.subr.mxu0 0.0
        %3612 = vmatpush2.msra.mxu0 %v3532
        %3613 = vmatprep.subr.mxu0 0.0
        %3614 = vmatpush2.msra.mxu0 %v3531
        %3615 = vmatprep.subr.mxu0 0.0
        %3616 = vmatpush2.msra.mxu0 %v3530
        %3617 = vmatprep.mubr.f32.mxu0 %v3511
        %3618 = vmatmul.mubr.f32.gmra.mxu0 %v3510
        %v3619 = vpop.f32.mrf.mxu0
        %v3620 = vadd.f32 %v3551, %v3619
        %v3621 = vpop.f32.mrf.mxu0
        %3622 = vmatprep.mubr.f32.mxu0 %v3513
        %3623 = vmatmul.mubr.f32.gmra.mxu0 %v3512
        %v3624 = vpop.f32.mrf.mxu0
        %v3625 = vadd.f32 %v3551, %v3624
        %v3626 = vpop.f32.mrf.mxu0
        %3627 = vdwg.mxu0
        %v3628 = vadd.f32 %v3249, %v3620
        %v3629 = vadd.f32 %v3250, %v3625
        %3630 = vst.msk [vmem:[%s433] sm:$0xff] %vm443, %v3628
        %3631 = vst.msk [vmem:[%s433 + $0x8] sm:$0xff] %vm443, %v3629
        %s3632 = sand.u32 %s313, 1
        %s3633 = scalar_lea.sflag [#allocation4], %s3632
        %s3634 = sand.u32 %s313, 1
        %s3635 = smul.addr %s3634, 16
        %s3636 = scalar_lea.vmem [#allocation3], %s3635
        // Predicated region
        $region73: #{tpu_custom_call.1} parent=71 // pred_check
          %p3637 = pneg %p323
        $region74: #{tpu_custom_call.1} parent=71 // pred_check_branch
          %3639 = sbr.rel (%p3637) target = $region76
        $region75: #{tpu_custom_call.1} parent=71 // pred_region
          %s3641 = ssub.s32 256, 256
          %3642 = vsyncadd %s3633, %s3641
          %s3643 = smul.addr %s27, 2
          %s3644 = smul.addr %s3643, 128
          %s3645 = scalar_lea.hbm %s13, %s3644
          %s3646 = sshll.u32 %s3636, 4
          %s3647 = int_to_ptr.vmem [resolvable:$true] %s3646
          %3652 = dma.vmem_to_hbm [thread:$0]  %s3647, 256, %s3645, %s3633, 128, 128, 8
        $region76: #{tpu_custom_call.1} parent=71 // pred_fallthru
          _
      $region72: #{tpu_custom_call.1} parent=5 // pred_fallthru
        _
      %p3653 = scmp.le.s32.totalorder 2, %s22
      // Predicated region
      $region77: #{tpu_custom_call.1} parent=5 // pred_check
        %p3654 = pneg %p3653
      $region78: #{tpu_custom_call.1} parent=5 // pred_check_branch
        %3656 = sbr.rel (%p3654) target = $region80
      $region79: #{tpu_custom_call.1} parent=5 // pred_region
        %s3657 = ssub.s32 %s22, 2
        // Predicated region
        $region81: #{tpu_custom_call.1} parent=79 // pred_check
          %p3658 = pneg %p329
        $region82: #{tpu_custom_call.1} parent=79 // pred_check_branch
          %3660 = sbr.rel (%p3658) target = $region84
        $region83: #{tpu_custom_call.1} parent=79 // pred_region
          %s3661 = sand.u32 %s314, 1
          %s3662 = scalar_lea.sflag [#allocation4], %s3661
          %s3663 = sand.u32 %s314, 1
          %s3664 = smul.addr %s3663, 16
          %s3665 = scalar_lea.vmem [#allocation3], %s3664
          %3666 = dma.done %s3662, 256
        $region84: #{tpu_custom_call.1} parent=79 // pred_fallthru
          _
      $region80: #{tpu_custom_call.1} parent=5 // pred_fallthru
        _
    $region6: #{tpu_custom_call.1} parent=1 // loop_footer
      %s26 = sadd.s32 1, %s22
    $region7: #{tpu_custom_call.1} parent=1 // loop_footer_branch
      %21 = sbr.rel target = $region3
    $region8: #{tpu_custom_call.1} parent=1 // loop_exit
      _
    %3667 = vsyncpa [#allocation4], 1
    %s3668 = scalar_lea.sflag [#allocation4], 1
    %3669 = vsyncpa %s3668, 1

</llo_original>
